<compile_context>
chip_gen: v6e
topology: v6e:2x2x1
jax: 0.10.0
libtpu: 0.0.40
codegen_flags: <defaults>
</compile_context>

<pallas_src>
import jax
import jax.numpy as jnp
from jax import lax
from jax.experimental import pallas as pl
from jax.experimental.pallas import tpu as pltpu

# Layer sizes from the PyTorch module; fc1..fc5 in/out dims padded to lane-friendly sizes.
DIMS = [8, 200, 400, 300, 100, 30, 1]
DIMS_PAD = [8, 256, 512, 384, 128, 128]   # input + fc1..fc5 padded output dims
W6_ROWS = 8   # fc6 weight column stored as row 0 of an aligned (8,128) bf16 matmul lhs


def _mlp_kernel(x_ref,
                w1_ref, b1_ref,
                w2_ref, b2_ref,
                w3_ref, b3_ref,
                w4_ref, b4_ref,
                w5_ref, b5_ref,
                w6_ref, b6_ref,
                o_ref):
    # TODO(synk): nn.Dropout(0.2) after fc4 is the identity in eval mode; training-mode
    # stochastic masking intentionally not implemented (forward/inference semantics).
    h = x_ref[...].astype(jnp.bfloat16)

    def relu_layer(h, w_ref, b_ref):
        acc = jnp.dot(h, w_ref[...], preferred_element_type=jnp.float32) + b_ref[...]
        return jnp.maximum(acc, 0.0).astype(jnp.bfloat16)

    h = relu_layer(h, w1_ref, b1_ref)   # (tb, 256)
    h = relu_layer(h, w2_ref, b2_ref)   # (tb, 512)
    h = relu_layer(h, w3_ref, b3_ref)   # (tb, 384)
    h = relu_layer(h, w4_ref, b4_ref)   # (tb, 128)  dropout2(relu(fc4)) -> identity at eval
    h = relu_layer(h, w5_ref, b5_ref)   # (tb, 128)  only first 30 cols are nonzero

    # fc6 has a single real output column. Contract h's lane dim against the fc6 weight
    # row (flash-attention-style "NT" dot) so the result is produced lane-major as
    # (W6_ROWS, tb); only row 0 carries real data (rows 1.. are zero weight padding).
    z8 = lax.dot_general(w6_ref[...], h, (((1,), (1,)), ((), ())),
                         preferred_element_type=jnp.float32)      # (8, tb) f32
    z = z8[0:1, :] + b6_ref[...]                                  # (1, tb) f32
    # Exact sigmoid (z is only (1, tb), so the divide is negligible).
    o_ref[...] = 1.0 / (1.0 + jnp.exp(-z))


def init_params(key):
    """Deterministic init mimicking nn.Linear default (uniform +/- 1/sqrt(fan_in)).

    Weights are created in (in_features, out_features) layout (transpose of PyTorch's
    (out, in) storage) so the math is x @ W + b.
    """
    params = []
    for i in range(len(DIMS) - 1):
        fan_in, fan_out = DIMS[i], DIMS[i + 1]
        key, kw, kb = jax.random.split(key, 3)
        bound = 1.0 / (fan_in ** 0.5)
        w = jax.random.uniform(kw, (fan_in, fan_out), jnp.float32, -bound, bound)
        b = jax.random.uniform(kb, (1, fan_out), jnp.float32, -bound, bound)
        params.append((w, b))
    return params


def pad_params(params):
    """Zero-pad layers to lane-friendly sizes: bf16 weights, f32 biases.

    fc1..fc5: weight (K_pad, N_pad) bf16, bias (1, N_pad) f32.
    fc6: its single real weight column is stored lane-major in row 0 of an aligned
         (W6_ROWS, 128) bf16 matrix (everything else zero); bias is a (1, 1) f32.
    """
    padded = []
    for i in range(5):
        w, b = params[i]
        kp, np_ = DIMS_PAD[i], DIMS_PAD[i + 1]
        wp = jnp.zeros((kp, np_), jnp.bfloat16)
        wp = wp.at[: w.shape[0], : w.shape[1]].set(w.astype(jnp.bfloat16))
        bp = jnp.zeros((1, np_), jnp.float32)
        bp = bp.at[:, : b.shape[1]].set(b)
        padded.append((wp, bp))
    w6, b6 = params[5]
    w6p = jnp.zeros((W6_ROWS, DIMS_PAD[5]), jnp.bfloat16)
    w6p = w6p.at[0, : w6.shape[0]].set(w6[:, 0].astype(jnp.bfloat16))
    b6p = b6.reshape(1, 1).astype(jnp.float32)
    padded.append((w6p, b6p))
    return padded


def _round_up(x, m):
    return ((x + m - 1) // m) * m


def _choose_tb(batch):
    """Batch tile: big enough to amortize grid-step overhead, small enough to keep
    >=2-4 grid steps so v7x's 2 TensorCores can both be used ("parallel" batch axis)."""
    return int(min(2048, max(256, _round_up(max(batch, 1) // 4, 256))))


def mlp_forward(x, padded_params, *, tb=None):
    """x: (B, 8) float32; padded_params: output of pad_params(). Returns (B, 1) f32."""
    B = x.shape[0]
    if tb is None:
        tb = _choose_tb(B)
    n_tiles = pl.cdiv(B, tb)
    Bp = n_tiles * tb
    if Bp != B:
        x = jnp.pad(x, ((0, Bp - B), (0, 0)))

    flat_inputs = [x]
    # x: tiled along the batch grid; last dim 8 == full array dim (allowed).
    in_specs = [pl.BlockSpec((tb, DIMS_PAD[0]), lambda i: (i, 0))]
    for (w, b) in padded_params:
        flat_inputs += [w, b]
        # Constant index_map -> weights/biases are DMA'd once and stay VMEM-resident
        # across all grid steps (total footprint < 1 MiB, so no need to single-buffer).
        in_specs += [
            pl.BlockSpec(w.shape, lambda i: (0, 0)),
            pl.BlockSpec(b.shape, lambda i: (0, 0)),
        ]

    out = pl.pallas_call(
        _mlp_kernel,
        out_shape=jax.ShapeDtypeStruct((1, Bp), jnp.float32),
        grid=(n_tiles,),
        in_specs=in_specs,
        # Lane-major output row: each batch tile writes an unmasked, lane-dense (1, tb)
        # slab (4 B/row of real data, no 128x padded-column write amplification).
        out_specs=pl.BlockSpec((1, tb), lambda i: (0, i)),
        compiler_params=pltpu.CompilerParams(
            dimension_semantics=("parallel",),   # shard batch tiles across TCs (v7x)
            vmem_limit_bytes=32 * 1024 * 1024,   # ~18 MiB pessimistic at tb=2048
        ),
    )(*flat_inputs)

    # (1, Bp) lane-major row -> real (B, 1) result column.
    return out[0, :B][:, None]


def reference_forward(x, params):
    """Pure-JAX f32 reference."""
    h = x
    for i, (w, b) in enumerate(params):
        h = h @ w + b
        if i < len(params) - 1:
            h = jnp.maximum(h, 0.0)
        else:
            h = jax.nn.sigmoid(h)
    return h


def reference_forward_bf16(x, params):
    """Pure-JAX reference matching the kernel's numerics (bf16 operands, f32 accumulate)."""
    h = x.astype(jnp.bfloat16)
    for i, (w, b) in enumerate(params):
        h = jnp.dot(h, w.astype(jnp.bfloat16), preferred_element_type=jnp.float32) + b
        if i < len(params) - 1:
            h = jnp.maximum(h, 0.0).astype(jnp.bfloat16)
        else:
            h = jax.nn.sigmoid(h)
    return h


if __name__ == "__main__":
    key = jax.random.PRNGKey(0)
    key, kx = jax.random.split(key)

    B = 300  # not a multiple of the batch tile on purpose: exercises padding + 2-step grid
    x = jax.random.normal(kx, (B, DIMS[0]), dtype=jnp.float32)

    params = init_params(key)
    padded = pad_params(params)

    fwd = jax.jit(mlp_forward)
    out = jax.block_until_ready(fwd(x, padded))

    assert out.shape == (B, 1)

    # Primary check: against a reference with identical bf16/f32 mixed precision.
    ref_bf16 = reference_forward_bf16(x, params)
    assert jnp.allclose(out, ref_bf16, atol=5e-3, rtol=0.0), \
        "Pallas output mismatch vs bf16-matched reference"

    # Sanity check: against the full-f32 reference (loose tol due to bf16 weights).
    ref_f32 = reference_forward(x, params)
    assert jnp.allclose(out, ref_f32, atol=5e-2, rtol=0.0), \
        "Pallas output mismatch vs f32 reference"

    print("KERNEL_OK")
</pallas_src>

<mosaic_0001>
module attributes {stable_mosaic.version = 11 : i64} {
  func.func @_mlp_kernel(%arg0: i32, %arg1: memref<256x8xf32, #tpu.memory_space<vmem>>, %arg2: memref<8x256xbf16, #tpu.memory_space<vmem>>, %arg3: memref<1x256xf32, #tpu.memory_space<vmem>>, %arg4: memref<256x512xbf16, #tpu.memory_space<vmem>>, %arg5: memref<1x512xf32, #tpu.memory_space<vmem>>, %arg6: memref<512x384xbf16, #tpu.memory_space<vmem>>, %arg7: memref<1x384xf32, #tpu.memory_space<vmem>>, %arg8: memref<384x128xbf16, #tpu.memory_space<vmem>>, %arg9: memref<1x128xf32, #tpu.memory_space<vmem>>, %arg10: memref<128x128xbf16, #tpu.memory_space<vmem>>, %arg11: memref<1x128xf32, #tpu.memory_space<vmem>>, %arg12: memref<8x128xbf16, #tpu.memory_space<vmem>>, %arg13: memref<1x1xf32, #tpu.memory_space<vmem>>, %arg14: memref<1x256xf32, #tpu.memory_space<vmem>>) attributes {dimension_semantics = [#tpu.dimension_semantics<parallel>], iteration_bounds = array<i64: 2>, scalar_prefetch = 0 : i64, scratch_operands = 0 : i64, tpu.core_type = #tpu.core_type<tc>, window_params = [{transform_indices = @transform_0, window_bounds = array<i64: 256, 8>}, {pipeline_mode = #tpu.pipeline_mode<synchronous>, transform_indices = @transform_1, window_bounds = array<i64: 8, 256>}, {pipeline_mode = #tpu.pipeline_mode<synchronous>, transform_indices = @transform_2, window_bounds = array<i64: 1, 256>}, {pipeline_mode = #tpu.pipeline_mode<synchronous>, transform_indices = @transform_3, window_bounds = array<i64: 256, 512>}, {pipeline_mode = #tpu.pipeline_mode<synchronous>, transform_indices = @transform_4, window_bounds = array<i64: 1, 512>}, {pipeline_mode = #tpu.pipeline_mode<synchronous>, transform_indices = @transform_5, window_bounds = array<i64: 512, 384>}, {pipeline_mode = #tpu.pipeline_mode<synchronous>, transform_indices = @transform_6, window_bounds = array<i64: 1, 384>}, {pipeline_mode = #tpu.pipeline_mode<synchronous>, transform_indices = @transform_7, window_bounds = array<i64: 384, 128>}, {pipeline_mode = #tpu.pipeline_mode<synchronous>, transform_indices = @transform_8, window_bounds = array<i64: 1, 128>}, {pipeline_mode = #tpu.pipeline_mode<synchronous>, transform_indices = @transform_9, window_bounds = array<i64: 128, 128>}, {pipeline_mode = #tpu.pipeline_mode<synchronous>, transform_indices = @transform_10, window_bounds = array<i64: 1, 128>}, {pipeline_mode = #tpu.pipeline_mode<synchronous>, transform_indices = @transform_11, window_bounds = array<i64: 8, 128>}, {pipeline_mode = #tpu.pipeline_mode<synchronous>, transform_indices = @transform_12, window_bounds = array<i64: 1, 1>}, {transform_indices = @transform_13, window_bounds = array<i64: 1, 256>}]} {
    %c0 = arith.constant 0 : index
    %c0_0 = arith.constant 0 : index
    %0 = vector.load %arg1[%c0, %c0_0] : memref<256x8xf32, #tpu.memory_space<vmem>>, vector<256x8xf32>
    %1 = arith.truncf %0 : vector<256x8xf32> to vector<256x8xbf16>
    %c0_1 = arith.constant 0 : index
    %c0_2 = arith.constant 0 : index
    %2 = vector.load %arg2[%c0_1, %c0_2] : memref<8x256xbf16, #tpu.memory_space<vmem>>, vector<8x256xbf16>
    %cst = arith.constant dense<0.000000e+00> : vector<256x256xf32>
    %3 = tpu.matmul %1, %2, %cst {dimension_numbers = #tpu.dot_dimension_numbers<[1], [0], [0], [1], [0, 0, 1, 1], [], []>} : vector<256x8xbf16>, vector<8x256xbf16>, vector<256x256xf32> -> vector<256x256xf32>
    %c0_3 = arith.constant 0 : index
    %c0_4 = arith.constant 0 : index
    %4 = vector.load %arg3[%c0_3, %c0_4] : memref<1x256xf32, #tpu.memory_space<vmem>>, vector<1x256xf32>
    %5 = vector.broadcast %4 : vector<1x256xf32> to vector<256x256xf32>
    %6 = arith.addf %3, %5 : vector<256x256xf32>
    %cst_5 = arith.constant 0.000000e+00 : f32
    %7 = vector.broadcast %cst_5 : f32 to vector<256x256xf32>
    %8 = arith.maximumf %6, %7 : vector<256x256xf32>
    %9 = arith.truncf %8 : vector<256x256xf32> to vector<256x256xbf16>
    %c0_6 = arith.constant 0 : index
    %c0_7 = arith.constant 0 : index
    %10 = vector.load %arg4[%c0_6, %c0_7] : memref<256x512xbf16, #tpu.memory_space<vmem>>, vector<256x512xbf16>
    %cst_8 = arith.constant dense<0.000000e+00> : vector<256x512xf32>
    %11 = tpu.matmul %9, %10, %cst_8 {dimension_numbers = #tpu.dot_dimension_numbers<[1], [0], [0], [1], [0, 0, 1, 1], [], []>} : vector<256x256xbf16>, vector<256x512xbf16>, vector<256x512xf32> -> vector<256x512xf32>
    %c0_9 = arith.constant 0 : index
    %c0_10 = arith.constant 0 : index
    %12 = vector.load %arg5[%c0_9, %c0_10] : memref<1x512xf32, #tpu.memory_space<vmem>>, vector<1x512xf32>
    %13 = vector.broadcast %12 : vector<1x512xf32> to vector<256x512xf32>
    %14 = arith.addf %11, %13 : vector<256x512xf32>
    %cst_11 = arith.constant 0.000000e+00 : f32
    %15 = vector.broadcast %cst_11 : f32 to vector<256x512xf32>
    %16 = arith.maximumf %14, %15 : vector<256x512xf32>
    %17 = arith.truncf %16 : vector<256x512xf32> to vector<256x512xbf16>
    %c0_12 = arith.constant 0 : index
    %c0_13 = arith.constant 0 : index
    %18 = vector.load %arg6[%c0_12, %c0_13] : memref<512x384xbf16, #tpu.memory_space<vmem>>, vector<512x384xbf16>
    %cst_14 = arith.constant dense<0.000000e+00> : vector<256x384xf32>
    %19 = tpu.matmul %17, %18, %cst_14 {dimension_numbers = #tpu.dot_dimension_numbers<[1], [0], [0], [1], [0, 0, 1, 1], [], []>} : vector<256x512xbf16>, vector<512x384xbf16>, vector<256x384xf32> -> vector<256x384xf32>
    %c0_15 = arith.constant 0 : index
    %c0_16 = arith.constant 0 : index
    %20 = vector.load %arg7[%c0_15, %c0_16] : memref<1x384xf32, #tpu.memory_space<vmem>>, vector<1x384xf32>
    %21 = vector.broadcast %20 : vector<1x384xf32> to vector<256x384xf32>
    %22 = arith.addf %19, %21 : vector<256x384xf32>
    %cst_17 = arith.constant 0.000000e+00 : f32
    %23 = vector.broadcast %cst_17 : f32 to vector<256x384xf32>
    %24 = arith.maximumf %22, %23 : vector<256x384xf32>
    %25 = arith.truncf %24 : vector<256x384xf32> to vector<256x384xbf16>
    %c0_18 = arith.constant 0 : index
    %c0_19 = arith.constant 0 : index
    %26 = vector.load %arg8[%c0_18, %c0_19] : memref<384x128xbf16, #tpu.memory_space<vmem>>, vector<384x128xbf16>
    %cst_20 = arith.constant dense<0.000000e+00> : vector<256x128xf32>
    %27 = tpu.matmul %25, %26, %cst_20 {dimension_numbers = #tpu.dot_dimension_numbers<[1], [0], [0], [1], [0, 0, 1, 1], [], []>} : vector<256x384xbf16>, vector<384x128xbf16>, vector<256x128xf32> -> vector<256x128xf32>
    %c0_21 = arith.constant 0 : index
    %c0_22 = arith.constant 0 : index
    %28 = vector.load %arg9[%c0_21, %c0_22] : memref<1x128xf32, #tpu.memory_space<vmem>>, vector<1x128xf32>
    %29 = vector.broadcast %28 : vector<1x128xf32> to vector<256x128xf32>
    %30 = arith.addf %27, %29 : vector<256x128xf32>
    %cst_23 = arith.constant 0.000000e+00 : f32
    %31 = vector.broadcast %cst_23 : f32 to vector<256x128xf32>
    %32 = arith.maximumf %30, %31 : vector<256x128xf32>
    %33 = arith.truncf %32 : vector<256x128xf32> to vector<256x128xbf16>
    %c0_24 = arith.constant 0 : index
    %c0_25 = arith.constant 0 : index
    %34 = vector.load %arg10[%c0_24, %c0_25] : memref<128x128xbf16, #tpu.memory_space<vmem>>, vector<128x128xbf16>
    %cst_26 = arith.constant dense<0.000000e+00> : vector<256x128xf32>
    %35 = tpu.matmul %33, %34, %cst_26 {dimension_numbers = #tpu.dot_dimension_numbers<[1], [0], [0], [1], [0, 0, 1, 1], [], []>} : vector<256x128xbf16>, vector<128x128xbf16>, vector<256x128xf32> -> vector<256x128xf32>
    %c0_27 = arith.constant 0 : index
    %c0_28 = arith.constant 0 : index
    %36 = vector.load %arg11[%c0_27, %c0_28] : memref<1x128xf32, #tpu.memory_space<vmem>>, vector<1x128xf32>
    %37 = vector.broadcast %36 : vector<1x128xf32> to vector<256x128xf32>
    %38 = arith.addf %35, %37 : vector<256x128xf32>
    %cst_29 = arith.constant 0.000000e+00 : f32
    %39 = vector.broadcast %cst_29 : f32 to vector<256x128xf32>
    %40 = arith.maximumf %38, %39 : vector<256x128xf32>
    %41 = arith.truncf %40 : vector<256x128xf32> to vector<256x128xbf16>
    %c0_30 = arith.constant 0 : index
    %c0_31 = arith.constant 0 : index
    %42 = vector.load %arg12[%c0_30, %c0_31] : memref<8x128xbf16, #tpu.memory_space<vmem>>, vector<8x128xbf16>
    %cst_32 = arith.constant dense<0.000000e+00> : vector<8x256xf32>
    %43 = tpu.matmul %42, %41, %cst_32 {dimension_numbers = #tpu.dot_dimension_numbers<[1], [1], [0], [0], [0, 0, 1, 0], [], []>} : vector<8x128xbf16>, vector<256x128xbf16>, vector<8x256xf32> -> vector<8x256xf32>
    %44 = vector.extract_strided_slice %43 {offsets = [0, 0], sizes = [1, 256], strides = [1, 1]} : vector<8x256xf32> to vector<1x256xf32>
    %c0_33 = arith.constant 0 : index
    %c0_34 = arith.constant 0 : index
    %45 = vector.load %arg13[%c0_33, %c0_34] : memref<1x1xf32, #tpu.memory_space<vmem>>, vector<1x1xf32>
    %46 = vector.broadcast %45 : vector<1x1xf32> to vector<1x256xf32>
    %47 = arith.addf %44, %46 : vector<1x256xf32>
    %cst_35 = arith.constant 0.000000e+00 : f32
    %48 = vector.broadcast %cst_35 : f32 to vector<1x256xf32>
    %49 = arith.subf %48, %47 : vector<1x256xf32>
    %50 = math.exp %49 : vector<1x256xf32>
    %cst_36 = arith.constant 1.000000e+00 : f32
    %51 = vector.broadcast %cst_36 : f32 to vector<1x256xf32>
    %52 = arith.addf %51, %50 : vector<1x256xf32>
    %cst_37 = arith.constant 1.000000e+00 : f32
    %53 = vector.broadcast %cst_37 : f32 to vector<1x256xf32>
    %54 = arith.divf %53, %52 : vector<1x256xf32>
    %c0_38 = arith.constant 0 : index
    %c0_39 = arith.constant 0 : index
    %55 = vector.load %arg14[%c0_38, %c0_39] : memref<1x256xf32, #tpu.memory_space<vmem>>, vector<1x256xf32>
    tpu.vector_store %arg14[%c0_38, %c0_39], %54 {strides = array<i32>} : memref<1x256xf32, #tpu.memory_space<vmem>>, vector<1x256xf32>,
    return
  }
  func.func @transform_0(%arg0: i32) -> (i32, i32) {
    %c0_i32 = arith.constant 0 : i32
    %c0_i32_0 = arith.constant 0 : i32
    return %arg0, %c0_i32 : i32, i32
  }
  func.func @transform_1(%arg0: i32) -> (i32, i32) {
    %c0_i32 = arith.constant 0 : i32
    %c0_i32_0 = arith.constant 0 : i32
    %c0_i32_1 = arith.constant 0 : i32
    return %c0_i32, %c0_i32_0 : i32, i32
  }
  func.func @transform_2(%arg0: i32) -> (i32, i32) {
    %c0_i32 = arith.constant 0 : i32
    %c0_i32_0 = arith.constant 0 : i32
    %c0_i32_1 = arith.constant 0 : i32
    return %c0_i32, %c0_i32_0 : i32, i32
  }
  func.func @transform_3(%arg0: i32) -> (i32, i32) {
    %c0_i32 = arith.constant 0 : i32
    %c0_i32_0 = arith.constant 0 : i32
    %c0_i32_1 = arith.constant 0 : i32
    return %c0_i32, %c0_i32_0 : i32, i32
  }
  func.func @transform_4(%arg0: i32) -> (i32, i32) {
    %c0_i32 = arith.constant 0 : i32
    %c0_i32_0 = arith.constant 0 : i32
    %c0_i32_1 = arith.constant 0 : i32
    return %c0_i32, %c0_i32_0 : i32, i32
  }
  func.func @transform_5(%arg0: i32) -> (i32, i32) {
    %c0_i32 = arith.constant 0 : i32
    %c0_i32_0 = arith.constant 0 : i32
    %c0_i32_1 = arith.constant 0 : i32
    return %c0_i32, %c0_i32_0 : i32, i32
  }
  func.func @transform_6(%arg0: i32) -> (i32, i32) {
    %c0_i32 = arith.constant 0 : i32
    %c0_i32_0 = arith.constant 0 : i32
    %c0_i32_1 = arith.constant 0 : i32
    return %c0_i32, %c0_i32_0 : i32, i32
  }
  func.func @transform_7(%arg0: i32) -> (i32, i32) {
    %c0_i32 = arith.constant 0 : i32
    %c0_i32_0 = arith.constant 0 : i32
    %c0_i32_1 = arith.constant 0 : i32
    return %c0_i32, %c0_i32_0 : i32, i32
  }
  func.func @transform_8(%arg0: i32) -> (i32, i32) {
    %c0_i32 = arith.constant 0 : i32
    %c0_i32_0 = arith.constant 0 : i32
    %c0_i32_1 = arith.constant 0 : i32
    return %c0_i32, %c0_i32_0 : i32, i32
  }
  func.func @transform_9(%arg0: i32) -> (i32, i32) {
    %c0_i32 = arith.constant 0 : i32
    %c0_i32_0 = arith.constant 0 : i32
    %c0_i32_1 = arith.constant 0 : i32
    return %c0_i32, %c0_i32_0 : i32, i32
  }
  func.func @transform_10(%arg0: i32) -> (i32, i32) {
    %c0_i32 = arith.constant 0 : i32
    %c0_i32_0 = arith.constant 0 : i32
    %c0_i32_1 = arith.constant 0 : i32
    return %c0_i32, %c0_i32_0 : i32, i32
  }
  func.func @transform_11(%arg0: i32) -> (i32, i32) {
    %c0_i32 = arith.constant 0 : i32
    %c0_i32_0 = arith.constant 0 : i32
    %c0_i32_1 = arith.constant 0 : i32
    return %c0_i32, %c0_i32_0 : i32, i32
  }
  func.func @transform_12(%arg0: i32) -> (i32, i32) {
    %c0_i32 = arith.constant 0 : i32
    %c0_i32_0 = arith.constant 0 : i32
    %c0_i32_1 = arith.constant 0 : i32
    return %c0_i32, %c0_i32_0 : i32, i32
  }
  func.func @transform_13(%arg0: i32) -> (i32, i32) {
    %c0_i32 = arith.constant 0 : i32
    %c0_i32_0 = arith.constant 0 : i32
    return %c0_i32, %arg0 : i32, i32
  }
}

</mosaic_0001>

<llo_original>
// kernel: mlp_forward.1
$region0: #{mlp_forward.1}
  #allocation0 [shape = 'u32[]', space=smem, size = 0x4, offset = 0x4, fixed_abs, tag = 'smem constant byte address 0x4 - core index']
  #allocation1 [shape = 'u32[144,128]{1,0:T(1,128)}', space=vmem, size = 0x12000, scoped, tag = 'internal scratch']
  #allocation2 [shape = 'f32[1,1]{1,0:T(1,128)S(1)}', space=vmem, size = 0x200, scoped, tag = 'scoped memory for mlp_forward.1']
  %s0 = inlined_call_operand.vmem [shape: f32[512,8], index: 0, kind: input, shape index: {}]
  %s1 = inlined_call_operand.vmem [shape: bf16[8,256], index: 1, kind: input, shape index: {}]
  %s2 = inlined_call_operand.vmem [shape: f32[1,256], index: 2, kind: input, shape index: {}]
  %s3 = inlined_call_operand.hbm [shape: bf16[256,512], index: 3, kind: input, shape index: {}]
  %s4 = inlined_call_operand.vmem [shape: f32[1,512], index: 4, kind: input, shape index: {}]
  %s5 = inlined_call_operand.vmem [shape: bf16[512,384], index: 5, kind: input, shape index: {}]
  %s6 = inlined_call_operand.vmem [shape: f32[1,384], index: 6, kind: input, shape index: {}]
  %s7 = inlined_call_operand.vmem [shape: bf16[384,128], index: 7, kind: input, shape index: {}]
  %s8 = inlined_call_operand.vmem [shape: f32[1,128], index: 8, kind: input, shape index: {}]
  %s9 = inlined_call_operand.vmem [shape: bf16[128,128], index: 9, kind: input, shape index: {}]
  %s10 = inlined_call_operand.vmem [shape: f32[1,128], index: 10, kind: input, shape index: {}]
  %s11 = inlined_call_operand.vmem [shape: bf16[8,128], index: 11, kind: input, shape index: {}]
  %s12 = inlined_call_operand.<no memory space> [shape: f32[1,1], index: 12, kind: input, shape index: {}]
  %s13 = inlined_call_operand.vmem [shape: f32[1,512], index: 13, kind: output, shape index: {}]
  %s14 = sld [smem:[#allocation0]]
  $region89: #{mlp_forward.1} parent=0
    _
  %s16 = ssub.s32 1, %s14
  %s17 = scalar_select 0, %s16, %s14
  %v18 = vstv %s12
  %19 = vst [vmem:[#allocation2] sm:$0x1] %v18
  $region1: #{mlp_forward.1} parent=0
    #allocation3 [shape = 'u8[262144]{0}', space=vmem, size = 0x40000, scoped, tag = 'input window, operand 3, single buffered']
    #allocation4 [shape = 's32[2]{0}', space=sflag, size = 0x8, scoped, tag = 'scoped memory for mlp_forward.1']
    %20 = vsyncpa [#allocation4], 0
    loop: start=0, step=1, limit=4
    $region2: #{mlp_forward.1} parent=1 // loop_pre_header
      _
    $region3: #{mlp_forward.1} parent=1 // loop_header
      %s22 = sphi 0, %s26
      %p23 = scmp.ge.s32.totalorder %s22, 4
      %s32 = sphi 0, %s34
      %s35 = sphi 0, %s32
      %s36 = sphi 0, %s35
      %s52 = sphi 0, %s36
      %s56 = sphi 0, %s56
      %s58 = sphi 0, %s56
      %s59 = sphi 0, %s58
      %s73 = sphi 0, %s59
      %s77 = sphi 0, %s77
      %s79 = sphi 0, %s77
      %s80 = sphi 0, %s79
      %s94 = sphi 0, %s80
      %s98 = sphi 0, %s98
      %s100 = sphi 0, %s98
      %s101 = sphi 0, %s100
      %s115 = sphi 0, %s101
      %s119 = sphi 0, %s119
      %s121 = sphi 0, %s119
      %s122 = sphi 0, %s121
      %s136 = sphi 0, %s122
      %s140 = sphi 0, %s140
      %s142 = sphi 0, %s140
      %s143 = sphi 0, %s142
      %s157 = sphi 0, %s143
      %s161 = sphi 0, %s161
      %s163 = sphi 0, %s161
      %s164 = sphi 0, %s163
      %s178 = sphi 0, %s164
      %s182 = sphi 0, %s182
      %s184 = sphi 0, %s182
      %s185 = sphi 0, %s184
      %s199 = sphi 0, %s185
      %s203 = sphi 0, %s203
      %s205 = sphi 0, %s203
      %s206 = sphi 0, %s205
      %s220 = sphi 0, %s206
      %s224 = sphi 0, %s224
      %s226 = sphi 0, %s224
      %s227 = sphi 0, %s226
      %s241 = sphi 0, %s227
      %s245 = sphi 0, %s245
      %s247 = sphi 0, %s245
      %s248 = sphi 0, %s247
      %s262 = sphi 0, %s248
      %s266 = sphi 0, %s266
      %s268 = sphi 0, %s266
      %s269 = sphi 0, %s268
      %s283 = sphi 0, %s269
      %s287 = sphi 0, %s287
      %s289 = sphi 0, %s287
      %s290 = sphi 0, %s289
      %s304 = sphi 0, %s290
      %s310 = sphi 0, %s312
      %s313 = sphi 0, %s310
      %s314 = sphi 0, %s313
      %s330 = sphi 0, %s314
    $region4: #{mlp_forward.1} parent=1 // loop_header_branch
      %25 = sbr.rel (%p23) target = $region8
    $region5: #{mlp_forward.1} parent=1 // loop_body
      %s27 = ssub.s32 %s22, 1
      %s28 = ssub.s32 %s22, 2
      %s29 = sadd.s32 %s22, 1
      %s30 = ssub.s32 %s22, %s29
      %p31 = scmp.eq.s32.totalorder %s30, 0
      %s33 = sadd.s32 %s32, 1
      %s34 = scalar_select %p31, %s32, %s33
      %p37 = pneg %p31
      %p38 = scmp.eq.s32.totalorder %s22, 1
      %p39 = por %p37, %p38
      %p40 = scmp.ne.s32.totalorder %s32, %s35
      %p41 = scmp.eq.s32.totalorder %s22, 0
      %p42 = por %p40, %p41
      %p43 = scmp.ne.s32.totalorder %s32, %s35
      %p44 = scmp.eq.s32.totalorder %s27, 1
      %p45 = por %p43, %p44
      %p46 = scmp.ne.s32.totalorder %s35, %s36
      %p47 = scmp.eq.s32.totalorder %s27, 0
      %p48 = por %p46, %p47
      %p49 = scmp.ne.s32.totalorder %s35, %s36
      %p50 = scmp.eq.s32.totalorder %s28, 1
      %p51 = por %p49, %p50
      %p53 = scmp.ne.s32.totalorder %s36, %s52
      %p54 = scmp.eq.s32.totalorder %s28, 0
      %p55 = por %p53, %p54
      %s57 = sadd.s32 %s56, 1
      %p60 = scmp.eq.s32.totalorder %s22, 1
      %p61 = scmp.ne.s32.totalorder %s56, %s58
      %p62 = scmp.eq.s32.totalorder %s22, 0
      %p63 = por %p61, %p62
      %p64 = scmp.ne.s32.totalorder %s56, %s58
      %p65 = scmp.eq.s32.totalorder %s27, 1
      %p66 = por %p64, %p65
      %p67 = scmp.ne.s32.totalorder %s58, %s59
      %p68 = scmp.eq.s32.totalorder %s27, 0
      %p69 = por %p67, %p68
      %p70 = scmp.ne.s32.totalorder %s58, %s59
      %p71 = scmp.eq.s32.totalorder %s28, 1
      %p72 = por %p70, %p71
      %p74 = scmp.ne.s32.totalorder %s59, %s73
      %p75 = scmp.eq.s32.totalorder %s28, 0
      %p76 = por %p74, %p75
      %s78 = sadd.s32 %s77, 1
      %p81 = scmp.eq.s32.totalorder %s22, 1
      %p82 = scmp.ne.s32.totalorder %s77, %s79
      %p83 = scmp.eq.s32.totalorder %s22, 0
      %p84 = por %p82, %p83
      %p85 = scmp.ne.s32.totalorder %s77, %s79
      %p86 = scmp.eq.s32.totalorder %s27, 1
      %p87 = por %p85, %p86
      %p88 = scmp.ne.s32.totalorder %s79, %s80
      %p89 = scmp.eq.s32.totalorder %s27, 0
      %p90 = por %p88, %p89
      %p91 = scmp.ne.s32.totalorder %s79, %s80
      %p92 = scmp.eq.s32.totalorder %s28, 1
      %p93 = por %p91, %p92
      %p95 = scmp.ne.s32.totalorder %s80, %s94
      %p96 = scmp.eq.s32.totalorder %s28, 0
      %p97 = por %p95, %p96
      %s99 = sadd.s32 %s98, 1
      %p102 = scmp.eq.s32.totalorder %s22, 1
      %p103 = scmp.ne.s32.totalorder %s98, %s100
      %p104 = scmp.eq.s32.totalorder %s22, 0
      %p105 = por %p103, %p104
      %p106 = scmp.ne.s32.totalorder %s98, %s100
      %p107 = scmp.eq.s32.totalorder %s27, 1
      %p108 = por %p106, %p107
      %p109 = scmp.ne.s32.totalorder %s100, %s101
      %p110 = scmp.eq.s32.totalorder %s27, 0
      %p111 = por %p109, %p110
      %p112 = scmp.ne.s32.totalorder %s100, %s101
      %p113 = scmp.eq.s32.totalorder %s28, 1
      %p114 = por %p112, %p113
      %p116 = scmp.ne.s32.totalorder %s101, %s115
      %p117 = scmp.eq.s32.totalorder %s28, 0
      %p118 = por %p116, %p117
      %s120 = sadd.s32 %s119, 1
      %p123 = scmp.eq.s32.totalorder %s22, 1
      %p124 = scmp.ne.s32.totalorder %s119, %s121
      %p125 = scmp.eq.s32.totalorder %s22, 0
      %p126 = por %p124, %p125
      %p127 = scmp.ne.s32.totalorder %s119, %s121
      %p128 = scmp.eq.s32.totalorder %s27, 1
      %p129 = por %p127, %p128
      %p130 = scmp.ne.s32.totalorder %s121, %s122
      %p131 = scmp.eq.s32.totalorder %s27, 0
      %p132 = por %p130, %p131
      %p133 = scmp.ne.s32.totalorder %s121, %s122
      %p134 = scmp.eq.s32.totalorder %s28, 1
      %p135 = por %p133, %p134
      %p137 = scmp.ne.s32.totalorder %s122, %s136
      %p138 = scmp.eq.s32.totalorder %s28, 0
      %p139 = por %p137, %p138
      %s141 = sadd.s32 %s140, 1
      %p144 = scmp.eq.s32.totalorder %s22, 1
      %p145 = scmp.ne.s32.totalorder %s140, %s142
      %p146 = scmp.eq.s32.totalorder %s22, 0
      %p147 = por %p145, %p146
      %p148 = scmp.ne.s32.totalorder %s140, %s142
      %p149 = scmp.eq.s32.totalorder %s27, 1
      %p150 = por %p148, %p149
      %p151 = scmp.ne.s32.totalorder %s142, %s143
      %p152 = scmp.eq.s32.totalorder %s27, 0
      %p153 = por %p151, %p152
      %p154 = scmp.ne.s32.totalorder %s142, %s143
      %p155 = scmp.eq.s32.totalorder %s28, 1
      %p156 = por %p154, %p155
      %p158 = scmp.ne.s32.totalorder %s143, %s157
      %p159 = scmp.eq.s32.totalorder %s28, 0
      %p160 = por %p158, %p159
      %s162 = sadd.s32 %s161, 1
      %p165 = scmp.eq.s32.totalorder %s22, 1
      %p166 = scmp.ne.s32.totalorder %s161, %s163
      %p167 = scmp.eq.s32.totalorder %s22, 0
      %p168 = por %p166, %p167
      %p169 = scmp.ne.s32.totalorder %s161, %s163
      %p170 = scmp.eq.s32.totalorder %s27, 1
      %p171 = por %p169, %p170
      %p172 = scmp.ne.s32.totalorder %s163, %s164
      %p173 = scmp.eq.s32.totalorder %s27, 0
      %p174 = por %p172, %p173
      %p175 = scmp.ne.s32.totalorder %s163, %s164
      %p176 = scmp.eq.s32.totalorder %s28, 1
      %p177 = por %p175, %p176
      %p179 = scmp.ne.s32.totalorder %s164, %s178
      %p180 = scmp.eq.s32.totalorder %s28, 0
      %p181 = por %p179, %p180
      %s183 = sadd.s32 %s182, 1
      %p186 = scmp.eq.s32.totalorder %s22, 1
      %p187 = scmp.ne.s32.totalorder %s182, %s184
      %p188 = scmp.eq.s32.totalorder %s22, 0
      %p189 = por %p187, %p188
      %p190 = scmp.ne.s32.totalorder %s182, %s184
      %p191 = scmp.eq.s32.totalorder %s27, 1
      %p192 = por %p190, %p191
      %p193 = scmp.ne.s32.totalorder %s184, %s185
      %p194 = scmp.eq.s32.totalorder %s27, 0
      %p195 = por %p193, %p194
      %p196 = scmp.ne.s32.totalorder %s184, %s185
      %p197 = scmp.eq.s32.totalorder %s28, 1
      %p198 = por %p196, %p197
      %p200 = scmp.ne.s32.totalorder %s185, %s199
      %p201 = scmp.eq.s32.totalorder %s28, 0
      %p202 = por %p200, %p201
      %s204 = sadd.s32 %s203, 1
      %p207 = scmp.eq.s32.totalorder %s22, 1
      %p208 = scmp.ne.s32.totalorder %s203, %s205
      %p209 = scmp.eq.s32.totalorder %s22, 0
      %p210 = por %p208, %p209
      %p211 = scmp.ne.s32.totalorder %s203, %s205
      %p212 = scmp.eq.s32.totalorder %s27, 1
      %p213 = por %p211, %p212
      %p214 = scmp.ne.s32.totalorder %s205, %s206
      %p215 = scmp.eq.s32.totalorder %s27, 0
      %p216 = por %p214, %p215
      %p217 = scmp.ne.s32.totalorder %s205, %s206
      %p218 = scmp.eq.s32.totalorder %s28, 1
      %p219 = por %p217, %p218
      %p221 = scmp.ne.s32.totalorder %s206, %s220
      %p222 = scmp.eq.s32.totalorder %s28, 0
      %p223 = por %p221, %p222
      %s225 = sadd.s32 %s224, 1
      %p228 = scmp.eq.s32.totalorder %s22, 1
      %p229 = scmp.ne.s32.totalorder %s224, %s226
      %p230 = scmp.eq.s32.totalorder %s22, 0
      %p231 = por %p229, %p230
      %p232 = scmp.ne.s32.totalorder %s224, %s226
      %p233 = scmp.eq.s32.totalorder %s27, 1
      %p234 = por %p232, %p233
      %p235 = scmp.ne.s32.totalorder %s226, %s227
      %p236 = scmp.eq.s32.totalorder %s27, 0
      %p237 = por %p235, %p236
      %p238 = scmp.ne.s32.totalorder %s226, %s227
      %p239 = scmp.eq.s32.totalorder %s28, 1
      %p240 = por %p238, %p239
      %p242 = scmp.ne.s32.totalorder %s227, %s241
      %p243 = scmp.eq.s32.totalorder %s28, 0
      %p244 = por %p242, %p243
      %s246 = sadd.s32 %s245, 1
      %p249 = scmp.eq.s32.totalorder %s22, 1
      %p250 = scmp.ne.s32.totalorder %s245, %s247
      %p251 = scmp.eq.s32.totalorder %s22, 0
      %p252 = por %p250, %p251
      %p253 = scmp.ne.s32.totalorder %s245, %s247
      %p254 = scmp.eq.s32.totalorder %s27, 1
      %p255 = por %p253, %p254
      %p256 = scmp.ne.s32.totalorder %s247, %s248
      %p257 = scmp.eq.s32.totalorder %s27, 0
      %p258 = por %p256, %p257
      %p259 = scmp.ne.s32.totalorder %s247, %s248
      %p260 = scmp.eq.s32.totalorder %s28, 1
      %p261 = por %p259, %p260
      %p263 = scmp.ne.s32.totalorder %s248, %s262
      %p264 = scmp.eq.s32.totalorder %s28, 0
      %p265 = por %p263, %p264
      %s267 = sadd.s32 %s266, 1
      %p270 = scmp.eq.s32.totalorder %s22, 1
      %p271 = scmp.ne.s32.totalorder %s266, %s268
      %p272 = scmp.eq.s32.totalorder %s22, 0
      %p273 = por %p271, %p272
      %p274 = scmp.ne.s32.totalorder %s266, %s268
      %p275 = scmp.eq.s32.totalorder %s27, 1
      %p276 = por %p274, %p275
      %p277 = scmp.ne.s32.totalorder %s268, %s269
      %p278 = scmp.eq.s32.totalorder %s27, 0
      %p279 = por %p277, %p278
      %p280 = scmp.ne.s32.totalorder %s268, %s269
      %p281 = scmp.eq.s32.totalorder %s28, 1
      %p282 = por %p280, %p281
      %p284 = scmp.ne.s32.totalorder %s269, %s283
      %p285 = scmp.eq.s32.totalorder %s28, 0
      %p286 = por %p284, %p285
      %s288 = sadd.s32 %s287, 1
      %p291 = scmp.eq.s32.totalorder %s22, 1
      %p292 = scmp.ne.s32.totalorder %s287, %s289
      %p293 = scmp.eq.s32.totalorder %s22, 0
      %p294 = por %p292, %p293
      %p295 = scmp.ne.s32.totalorder %s287, %s289
      %p296 = scmp.eq.s32.totalorder %s27, 1
      %p297 = por %p295, %p296
      %p298 = scmp.ne.s32.totalorder %s289, %s290
      %p299 = scmp.eq.s32.totalorder %s27, 0
      %p300 = por %p298, %p299
      %p301 = scmp.ne.s32.totalorder %s289, %s290
      %p302 = scmp.eq.s32.totalorder %s28, 1
      %p303 = por %p301, %p302
      %p305 = scmp.ne.s32.totalorder %s290, %s304
      %p306 = scmp.eq.s32.totalorder %s28, 0
      %p307 = por %p305, %p306
      %s308 = ssub.s32 %s22, %s29
      %p309 = scmp.eq.s32.totalorder %s308, 0
      %s311 = sadd.s32 %s310, 1
      %s312 = scalar_select %p309, %s310, %s311
      %p315 = pneg %p309
      %p316 = scmp.eq.s32.totalorder %s22, 1
      %p317 = por %p315, %p316
      %p318 = scmp.ne.s32.totalorder %s310, %s313
      %p319 = scmp.eq.s32.totalorder %s22, 0
      %p320 = por %p318, %p319
      %p321 = scmp.ne.s32.totalorder %s310, %s313
      %p322 = scmp.eq.s32.totalorder %s27, 1
      %p323 = por %p321, %p322
      %p324 = scmp.ne.s32.totalorder %s313, %s314
      %p325 = scmp.eq.s32.totalorder %s27, 0
      %p326 = por %p324, %p325
      %p327 = scmp.ne.s32.totalorder %s313, %s314
      %p328 = scmp.eq.s32.totalorder %s28, 1
      %p329 = por %p327, %p328
      %p331 = scmp.ne.s32.totalorder %s314, %s330
      %p332 = scmp.eq.s32.totalorder %s28, 0
      %p333 = por %p331, %p332
      %p334 = scmp.le.s32.totalorder 1, %s22
      %p335 = scmp.lt.s32.totalorder %s22, 3
      %p336 = pnand %p334, %p335
      %p337 = pneg %p336
      // Predicated region
      $region9: #{mlp_forward.1} parent=5 // pred_check
        _
      $region10: #{mlp_forward.1} parent=5 // pred_check_branch
        %339 = sbr.rel (%p336) target = $region12
      $region11: #{mlp_forward.1} parent=5 // pred_region
        %s340 = ssub.s32 %s22, 1
        // Predicated region
        $region13: #{mlp_forward.1} parent=11 // pred_check
          %p341 = pneg %p69
        $region14: #{mlp_forward.1} parent=11 // pred_check_branch
          %343 = sbr.rel (%p341) target = $region16
        $region15: #{mlp_forward.1} parent=11 // pred_region
          _
        $region16: #{mlp_forward.1} parent=11 // pred_fallthru
          _
        // Predicated region
        $region17: #{mlp_forward.1} parent=11 // pred_check
          %p344 = pneg %p90
        $region18: #{mlp_forward.1} parent=11 // pred_check_branch
          %346 = sbr.rel (%p344) target = $region20
        $region19: #{mlp_forward.1} parent=11 // pred_region
          _
        $region20: #{mlp_forward.1} parent=11 // pred_fallthru
          _
        // Predicated region
        $region21: #{mlp_forward.1} parent=11 // pred_check
          %p347 = pneg %p111
        $region22: #{mlp_forward.1} parent=11 // pred_check_branch
          %349 = sbr.rel (%p347) target = $region24
        $region23: #{mlp_forward.1} parent=11 // pred_region
          %s351 = ssub.s32 8192, 8192
          %352 = vsyncadd [#allocation4], %s351
          %s353 = sshll.u32 [#allocation3], 4
          %s354 = int_to_ptr.vmem [resolvable:$true] %s353
          %359 = dma.hbm_to_vmem [thread:$0]  %s3, 8192, %s354, [#allocation4], 256, 256, 16
        $region24: #{mlp_forward.1} parent=11 // pred_fallthru
          _
        // Predicated region
        $region25: #{mlp_forward.1} parent=11 // pred_check
          %p360 = pneg %p132
        $region26: #{mlp_forward.1} parent=11 // pred_check_branch
          %362 = sbr.rel (%p360) target = $region28
        $region27: #{mlp_forward.1} parent=11 // pred_region
          _
        $region28: #{mlp_forward.1} parent=11 // pred_fallthru
          _
        // Predicated region
        $region29: #{mlp_forward.1} parent=11 // pred_check
          %p363 = pneg %p153
        $region30: #{mlp_forward.1} parent=11 // pred_check_branch
          %365 = sbr.rel (%p363) target = $region32
        $region31: #{mlp_forward.1} parent=11 // pred_region
          _
        $region32: #{mlp_forward.1} parent=11 // pred_fallthru
          _
        // Predicated region
        $region33: #{mlp_forward.1} parent=11 // pred_check
          %p366 = pneg %p174
        $region34: #{mlp_forward.1} parent=11 // pred_check_branch
          %368 = sbr.rel (%p366) target = $region36
        $region35: #{mlp_forward.1} parent=11 // pred_region
          _
        $region36: #{mlp_forward.1} parent=11 // pred_fallthru
          _
        // Predicated region
        $region37: #{mlp_forward.1} parent=11 // pred_check
          %p369 = pneg %p195
        $region38: #{mlp_forward.1} parent=11 // pred_check_branch
          %371 = sbr.rel (%p369) target = $region40
        $region39: #{mlp_forward.1} parent=11 // pred_region
          _
        $region40: #{mlp_forward.1} parent=11 // pred_fallthru
          _
        // Predicated region
        $region41: #{mlp_forward.1} parent=11 // pred_check
          %p372 = pneg %p216
        $region42: #{mlp_forward.1} parent=11 // pred_check_branch
          %374 = sbr.rel (%p372) target = $region44
        $region43: #{mlp_forward.1} parent=11 // pred_region
          _
        $region44: #{mlp_forward.1} parent=11 // pred_fallthru
          _
        // Predicated region
        $region45: #{mlp_forward.1} parent=11 // pred_check
          %p375 = pneg %p237
        $region46: #{mlp_forward.1} parent=11 // pred_check_branch
          %377 = sbr.rel (%p375) target = $region48
        $region47: #{mlp_forward.1} parent=11 // pred_region
          _
        $region48: #{mlp_forward.1} parent=11 // pred_fallthru
          _
        // Predicated region
        $region49: #{mlp_forward.1} parent=11 // pred_check
          %p378 = pneg %p258
        $region50: #{mlp_forward.1} parent=11 // pred_check_branch
          %380 = sbr.rel (%p378) target = $region52
        $region51: #{mlp_forward.1} parent=11 // pred_region
          _
        $region52: #{mlp_forward.1} parent=11 // pred_fallthru
          _
        // Predicated region
        $region53: #{mlp_forward.1} parent=11 // pred_check
          %p381 = pneg %p279
        $region54: #{mlp_forward.1} parent=11 // pred_check_branch
          %383 = sbr.rel (%p381) target = $region56
        $region55: #{mlp_forward.1} parent=11 // pred_region
          _
        $region56: #{mlp_forward.1} parent=11 // pred_fallthru
          _
        // Predicated region
        $region57: #{mlp_forward.1} parent=11 // pred_check
          %p384 = pneg %p300
        $region58: #{mlp_forward.1} parent=11 // pred_check_branch
          %386 = sbr.rel (%p384) target = $region60
        $region59: #{mlp_forward.1} parent=11 // pred_region
          _
        $region60: #{mlp_forward.1} parent=11 // pred_fallthru
          _
      $region12: #{mlp_forward.1} parent=5 // pred_fallthru
        _
      %p387 = scmp.lt.s32.totalorder %s22, 2
      // Predicated region
      $region61: #{mlp_forward.1} parent=5 // pred_check
        %p388 = pneg %p387
      $region62: #{mlp_forward.1} parent=5 // pred_check_branch
        %390 = sbr.rel (%p388) target = $region64
      $region63: #{mlp_forward.1} parent=5 // pred_region
        // Predicated region
        $region65: #{mlp_forward.1} parent=63 // pred_check
          %p391 = pneg %p42
        $region66: #{mlp_forward.1} parent=63 // pred_check_branch
          %393 = sbr.rel (%p391) target = $region68
        $region67: #{mlp_forward.1} parent=63 // pred_region
          %s394 = smul.u32 32, %s22
          %p395 = scmp.lt.s32.totalorder %s394, 63
          %s396 = scalar_select %p395, %s394, 63
          %s397 = smul.addr %s396, 8
          %s398 = scalar_lea.vmem %s0, %s397
          %s399 = smul.u32 32, %s22
        $region68: #{mlp_forward.1} parent=63 // pred_fallthru
          _
      $region64: #{mlp_forward.1} parent=5 // pred_fallthru
        _
      %p400 = scmp.le.s32.totalorder 1, %s22
      %p401 = scmp.lt.s32.totalorder %s22, 3
      %p402 = pnand %p400, %p401
      %p403 = pneg %p402
      // Predicated region
      $region69: #{mlp_forward.1} parent=5 // pred_check
        _
      $region70: #{mlp_forward.1} parent=5 // pred_check_branch
        %405 = sbr.rel (%p402) target = $region72
      $region71: #{mlp_forward.1} parent=5 // pred_region
        %s406 = ssub.s32 %s22, 1
        // Predicated region
        $region73: #{mlp_forward.1} parent=71 // pred_check
          %p407 = pneg %p111
        $region74: #{mlp_forward.1} parent=71 // pred_check_branch
          %409 = sbr.rel (%p407) target = $region76
        $region75: #{mlp_forward.1} parent=71 // pred_region
          %410 = dma.done [#allocation4], 8192
        $region76: #{mlp_forward.1} parent=71 // pred_fallthru
          _
        %s411 = smul.u32 32, %s27
        %p412 = scmp.lt.s32.totalorder %s411, 63
        %s413 = scalar_select %p412, %s411, 63
        %s414 = smul.addr %s413, 8
        %s415 = scalar_lea.vmem %s0, %s414
        %p416 = pneg %p48
        %p417 = pneg %p45
        %p418 = pneg %p69
        %p419 = pneg %p66
        %p420 = pneg %p90
        %p421 = pneg %p87
        %p422 = pneg %p111
        %p423 = pneg %p108
        %p424 = pneg %p132
        %p425 = pneg %p129
        %p426 = pneg %p153
        %p427 = pneg %p150
        %p428 = pneg %p174
        %p429 = pneg %p171
        %p430 = pneg %p195
        %p431 = pneg %p192
        %p432 = pneg %p216
        %p433 = pneg %p213
        %p434 = pneg %p237
        %p435 = pneg %p234
        %p436 = pneg %p258
        %p437 = pneg %p255
        %p438 = pneg %p279
        %p439 = pneg %p276
        %p440 = pneg %p300
        %p441 = pneg %p297
        %p442 = pneg %p326
        %p443 = pneg %p323
        %s444 = smul.u32 2, %s27
        %p445 = scmp.lt.s32.totalorder %s444, 3
        %s446 = scalar_select %p445, %s444, 3
        %s447 = scalar_lea.vmem %s13, %s446
        %s448 = smul.u32 32, %s27
        %p449 = scmp.lt.s32.totalorder %s448, 63
        %s450 = scalar_select %p449, %s448, 63
        %s451 = smul.addr %s450, 8
        %s452 = scalar_lea.vmem %s0, %s451
        %s453 = smul.u32 32, %s27
        %s454 = smul.u32 2, %s27
        %p455 = scmp.lt.s32.totalorder %s454, 3
        %s456 = scalar_select %p455, %s454, 3
        %s457 = scalar_lea.vmem %s13, %s456
        %s458 = smul.u32 2, %s27
        %v460 = vld [vmem:[%s452] sm:$0xff]
        %v461 = vld [vmem:[%s452 + $0x8] sm:$0xff]
        %v462 = vld [vmem:[%s452 + $0x10] sm:$0xff]
        %v463 = vld [vmem:[%s452 + $0x18] sm:$0xff]
        %v464 = vld [vmem:[%s452 + $0x20] sm:$0xff]
        %v465 = vld [vmem:[%s452 + $0x28] sm:$0xff]
        %v466 = vld [vmem:[%s452 + $0x30] sm:$0xff]
        %v467 = vld [vmem:[%s452 + $0x38] sm:$0xff]
        %v468 = vld [vmem:[%s452 + $0x40] sm:$0xff]
        %v469 = vld [vmem:[%s452 + $0x48] sm:$0xff]
        %v470 = vld [vmem:[%s452 + $0x50] sm:$0xff]
        %v471 = vld [vmem:[%s452 + $0x58] sm:$0xff]
        %v472 = vld [vmem:[%s452 + $0x60] sm:$0xff]
        %v473 = vld [vmem:[%s452 + $0x68] sm:$0xff]
        %v474 = vld [vmem:[%s452 + $0x70] sm:$0xff]
        %v475 = vld [vmem:[%s452 + $0x78] sm:$0xff]
        %v476 = vld [vmem:[%s452 + $0x80] sm:$0xff]
        %v477 = vld [vmem:[%s452 + $0x88] sm:$0xff]
        %v478 = vld [vmem:[%s452 + $0x90] sm:$0xff]
        %v479 = vld [vmem:[%s452 + $0x98] sm:$0xff]
        %v480 = vld [vmem:[%s452 + $0xa0] sm:$0xff]
        %v481 = vld [vmem:[%s452 + $0xa8] sm:$0xff]
        %v482 = vld [vmem:[%s452 + $0xb0] sm:$0xff]
        %v483 = vld [vmem:[%s452 + $0xb8] sm:$0xff]
        %v484 = vld [vmem:[%s452 + $0xc0] sm:$0xff]
        %v485 = vld [vmem:[%s452 + $0xc8] sm:$0xff]
        %v486 = vld [vmem:[%s452 + $0xd0] sm:$0xff]
        %v487 = vld [vmem:[%s452 + $0xd8] sm:$0xff]
        %v488 = vld [vmem:[%s452 + $0xe0] sm:$0xff]
        %v489 = vld [vmem:[%s452 + $0xe8] sm:$0xff]
        %v490 = vld [vmem:[%s452 + $0xf0] sm:$0xff]
        %v491 = vld [vmem:[%s452 + $0xf8] sm:$0xff]
        %v492 = vpack.c.bf16 %v461, %v460
        %v493 = vpack.c.bf16 %v463, %v462
        %v494 = vpack.c.bf16 %v465, %v464
        %v495 = vpack.c.bf16 %v467, %v466
        %v496 = vpack.c.bf16 %v469, %v468
        %v497 = vpack.c.bf16 %v471, %v470
        %v498 = vpack.c.bf16 %v473, %v472
        %v499 = vpack.c.bf16 %v475, %v474
        %v500 = vpack.c.bf16 %v477, %v476
        %v501 = vpack.c.bf16 %v479, %v478
        %v502 = vpack.c.bf16 %v481, %v480
        %v503 = vpack.c.bf16 %v483, %v482
        %v504 = vpack.c.bf16 %v485, %v484
        %v505 = vpack.c.bf16 %v487, %v486
        %v506 = vpack.c.bf16 %v489, %v488
        %v507 = vpack.c.bf16 %v491, %v490
        %v508 = vld [vmem:[%s1] sm:$0xff]
        %v509 = vld [vmem:[%s2] sm:$0x3]
        %v511 = vlaneseq
        %v512 = vshrl.u32 %v511, 7
        %v513 = vsub.s32 0, %v512
        %v514 = vrot.slane %v509, %v513
        %v515 = vlaneseq
        %v516 = vshrl.u32 %v515, 7
        %v517 = vsub.s32 1, %v516
        %v518 = vrot.slane %v509, %v517
        %v522 = vunpack.c.l.b16 %v508
        %v523 = vunpack.c.h.b16 %v508
        %v524 = vpack.c.b16 %v522, %v522
        %v525 = vpack.c.b16 %v523, %v523
        %vm526 = vcmask 64512
        %v528 = vsel %vm526, %v492, 0
        %v531 = vsel %vm526, %v493, 0
        %v534 = vsel %vm526, %v494, 0
        %v537 = vsel %vm526, %v495, 0
        %v540 = vsel %vm526, %v496, 0
        %v543 = vsel %vm526, %v497, 0
        %v546 = vsel %vm526, %v498, 0
        %v549 = vsel %vm526, %v499, 0
        %v552 = vsel %vm526, %v500, 0
        %v555 = vsel %vm526, %v501, 0
        %v558 = vsel %vm526, %v502, 0
        %v561 = vsel %vm526, %v503, 0
        %v564 = vsel %vm526, %v504, 0
        %v567 = vsel %vm526, %v505, 0
        %v570 = vsel %vm526, %v506, 0
        %v573 = vsel %vm526, %v507, 0
        %vm575 = vcmask 1043456
        %v577 = vsel %vm575, %v524, 0
        %v580 = vsel %vm575, %v525, 0
        %582 = vmatprep.subr.bf16.mxu0 0
        %583 = vmatpush1.bf16.msra.mxu0 0
        %584 = vmatprep.subr.bf16.mxu0 0
        %585 = vmatpush1.bf16.msra.mxu0 0
        %586 = vmatprep.subr.bf16.mxu0 0
        %587 = vmatpush1.bf16.msra.mxu0 0
        %588 = vmatprep.subr.bf16.mxu0 0
        %589 = vmatpush1.bf16.msra.mxu0 0
        %590 = vmatprep.subr.bf16.mxu0 0
        %591 = vmatpush1.bf16.msra.mxu0 0
        %592 = vmatprep.subr.bf16.mxu0 0
        %593 = vmatpush1.bf16.msra.mxu0 0
        %594 = vmatprep.subr.bf16.mxu0 0
        %595 = vmatpush1.bf16.msra.mxu0 0
        %596 = vmatprep.subr.bf16.mxu0 %v580
        %597 = vmatpush1.bf16.msra.mxu0 %v577
        %598 = vmatprep.subr.bf16.mxu0 0
        %599 = vmatpush2.bf16.msra.mxu0 0
        %600 = vmatprep.subr.bf16.mxu0 0
        %601 = vmatpush2.bf16.msra.mxu0 0
        %602 = vmatprep.subr.bf16.mxu0 0
        %603 = vmatpush2.bf16.msra.mxu0 0
        %604 = vmatprep.subr.bf16.mxu0 0
        %605 = vmatpush2.bf16.msra.mxu0 0
        %606 = vmatprep.subr.bf16.mxu0 0
        %607 = vmatpush2.bf16.msra.mxu0 0
        %608 = vmatprep.subr.bf16.mxu0 0
        %609 = vmatpush2.bf16.msra.mxu0 0
        %610 = vmatprep.subr.bf16.mxu0 0
        %611 = vmatpush2.bf16.msra.mxu0 0
        %612 = vmatprep.subr.bf16.mxu0 0
        %613 = vmatpush2.bf16.msra.mxu0 0
        %614 = vmatprep.mubr.bf16.mxu0 0
        %615 = vmatmul.mubr.bf16.gmra.mxu0 %v528
        %v616 = vpop.f32.mrf.mxu0
        %v617 = vadd.f32 %v514, %v616
        %v618 = vpop.f32.mrf.mxu0
        %v619 = vadd.f32 %v518, %v618
        %v620 = vpop.f32.mrf.mxu0
        %v621 = vadd.f32 %v514, %v620
        %v622 = vpop.f32.mrf.mxu0
        %v623 = vadd.f32 %v518, %v622
        %624 = vmatprep.mubr.bf16.mxu0 0
        %625 = vmatmul.mubr.bf16.gmra.mxu0 %v531
        %v626 = vpop.f32.mrf.mxu0
        %v627 = vadd.f32 %v514, %v626
        %v628 = vpop.f32.mrf.mxu0
        %v629 = vadd.f32 %v518, %v628
        %v630 = vpop.f32.mrf.mxu0
        %v631 = vadd.f32 %v514, %v630
        %v632 = vpop.f32.mrf.mxu0
        %v633 = vadd.f32 %v518, %v632
        %634 = vmatprep.mubr.bf16.mxu0 0
        %635 = vmatmul.mubr.bf16.gmra.mxu0 %v534
        %v636 = vpop.f32.mrf.mxu0
        %v637 = vadd.f32 %v514, %v636
        %v638 = vpop.f32.mrf.mxu0
        %v639 = vadd.f32 %v518, %v638
        %v640 = vpop.f32.mrf.mxu0
        %v641 = vadd.f32 %v514, %v640
        %v642 = vpop.f32.mrf.mxu0
        %v643 = vadd.f32 %v518, %v642
        %644 = vmatprep.mubr.bf16.mxu0 0
        %645 = vmatmul.mubr.bf16.gmra.mxu0 %v537
        %v646 = vpop.f32.mrf.mxu0
        %v647 = vadd.f32 %v514, %v646
        %v648 = vpop.f32.mrf.mxu0
        %v649 = vadd.f32 %v518, %v648
        %v650 = vpop.f32.mrf.mxu0
        %v651 = vadd.f32 %v514, %v650
        %v652 = vpop.f32.mrf.mxu0
        %v653 = vadd.f32 %v518, %v652
        %654 = vmatprep.mubr.bf16.mxu0 0
        %655 = vmatmul.mubr.bf16.gmra.mxu0 %v540
        %v656 = vpop.f32.mrf.mxu0
        %v657 = vadd.f32 %v514, %v656
        %v658 = vpop.f32.mrf.mxu0
        %v659 = vadd.f32 %v518, %v658
        %v660 = vpop.f32.mrf.mxu0
        %v661 = vadd.f32 %v514, %v660
        %v662 = vpop.f32.mrf.mxu0
        %v663 = vadd.f32 %v518, %v662
        %664 = vmatprep.mubr.bf16.mxu0 0
        %665 = vmatmul.mubr.bf16.gmra.mxu0 %v543
        %v666 = vpop.f32.mrf.mxu0
        %v667 = vadd.f32 %v514, %v666
        %v668 = vpop.f32.mrf.mxu0
        %v669 = vadd.f32 %v518, %v668
        %v670 = vpop.f32.mrf.mxu0
        %v671 = vadd.f32 %v514, %v670
        %v672 = vpop.f32.mrf.mxu0
        %v673 = vadd.f32 %v518, %v672
        %674 = vmatprep.mubr.bf16.mxu0 0
        %675 = vmatmul.mubr.bf16.gmra.mxu0 %v546
        %v676 = vpop.f32.mrf.mxu0
        %v677 = vadd.f32 %v514, %v676
        %v678 = vpop.f32.mrf.mxu0
        %v679 = vadd.f32 %v518, %v678
        %v680 = vpop.f32.mrf.mxu0
        %v681 = vadd.f32 %v514, %v680
        %v682 = vpop.f32.mrf.mxu0
        %v683 = vadd.f32 %v518, %v682
        %684 = vmatprep.mubr.bf16.mxu0 0
        %685 = vmatmul.mubr.bf16.gmra.mxu0 %v549
        %v686 = vpop.f32.mrf.mxu0
        %v687 = vadd.f32 %v514, %v686
        %v688 = vpop.f32.mrf.mxu0
        %v689 = vadd.f32 %v518, %v688
        %v690 = vpop.f32.mrf.mxu0
        %v691 = vadd.f32 %v514, %v690
        %v692 = vpop.f32.mrf.mxu0
        %v693 = vadd.f32 %v518, %v692
        %694 = vmatprep.mubr.bf16.mxu0 0
        %695 = vmatmul.mubr.bf16.gmra.mxu0 %v552
        %v696 = vpop.f32.mrf.mxu0
        %v697 = vadd.f32 %v514, %v696
        %v698 = vpop.f32.mrf.mxu0
        %v699 = vadd.f32 %v518, %v698
        %v700 = vpop.f32.mrf.mxu0
        %v701 = vadd.f32 %v514, %v700
        %v702 = vpop.f32.mrf.mxu0
        %v703 = vadd.f32 %v518, %v702
        %704 = vmatprep.mubr.bf16.mxu0 0
        %705 = vmatmul.mubr.bf16.gmra.mxu0 %v555
        %v706 = vpop.f32.mrf.mxu0
        %v707 = vadd.f32 %v514, %v706
        %v708 = vpop.f32.mrf.mxu0
        %v709 = vadd.f32 %v518, %v708
        %v710 = vpop.f32.mrf.mxu0
        %v711 = vadd.f32 %v514, %v710
        %v712 = vpop.f32.mrf.mxu0
        %v713 = vadd.f32 %v518, %v712
        %714 = vmatprep.mubr.bf16.mxu0 0
        %715 = vmatmul.mubr.bf16.gmra.mxu0 %v558
        %v716 = vpop.f32.mrf.mxu0
        %v717 = vadd.f32 %v514, %v716
        %v718 = vpop.f32.mrf.mxu0
        %v719 = vadd.f32 %v518, %v718
        %v720 = vpop.f32.mrf.mxu0
        %v721 = vadd.f32 %v514, %v720
        %v722 = vpop.f32.mrf.mxu0
        %v723 = vadd.f32 %v518, %v722
        %724 = vmatprep.mubr.bf16.mxu0 0
        %725 = vmatmul.mubr.bf16.gmra.mxu0 %v561
        %v726 = vpop.f32.mrf.mxu0
        %v727 = vadd.f32 %v514, %v726
        %v728 = vpop.f32.mrf.mxu0
        %v729 = vadd.f32 %v518, %v728
        %v730 = vpop.f32.mrf.mxu0
        %v731 = vadd.f32 %v514, %v730
        %v732 = vpop.f32.mrf.mxu0
        %v733 = vadd.f32 %v518, %v732
        %734 = vmatprep.mubr.bf16.mxu0 0
        %735 = vmatmul.mubr.bf16.gmra.mxu0 %v564
        %v736 = vpop.f32.mrf.mxu0
        %v737 = vadd.f32 %v514, %v736
        %v738 = vpop.f32.mrf.mxu0
        %v739 = vadd.f32 %v518, %v738
        %v740 = vpop.f32.mrf.mxu0
        %v741 = vadd.f32 %v514, %v740
        %v742 = vpop.f32.mrf.mxu0
        %v743 = vadd.f32 %v518, %v742
        %744 = vmatprep.mubr.bf16.mxu0 0
        %745 = vmatmul.mubr.bf16.gmra.mxu0 %v567
        %v746 = vpop.f32.mrf.mxu0
        %v747 = vadd.f32 %v514, %v746
        %v748 = vpop.f32.mrf.mxu0
        %v749 = vadd.f32 %v518, %v748
        %v750 = vpop.f32.mrf.mxu0
        %v751 = vadd.f32 %v514, %v750
        %v752 = vpop.f32.mrf.mxu0
        %v753 = vadd.f32 %v518, %v752
        %754 = vmatprep.mubr.bf16.mxu0 0
        %755 = vmatmul.mubr.bf16.gmra.mxu0 %v570
        %v756 = vpop.f32.mrf.mxu0
        %v757 = vadd.f32 %v514, %v756
        %v758 = vpop.f32.mrf.mxu0
        %v759 = vadd.f32 %v518, %v758
        %v760 = vpop.f32.mrf.mxu0
        %v761 = vadd.f32 %v514, %v760
        %v762 = vpop.f32.mrf.mxu0
        %v763 = vadd.f32 %v518, %v762
        %764 = vmatprep.mubr.bf16.mxu0 0
        %765 = vmatmul.mubr.bf16.gmra.mxu0 %v573
        %v766 = vpop.f32.mrf.mxu0
        %v767 = vadd.f32 %v514, %v766
        %v768 = vpop.f32.mrf.mxu0
        %v769 = vadd.f32 %v518, %v768
        %v770 = vpop.f32.mrf.mxu0
        %v771 = vadd.f32 %v514, %v770
        %v772 = vpop.f32.mrf.mxu0
        %v773 = vadd.f32 %v518, %v772
        %774 = vdwg.mxu0
        %v775 = vmax.f32 %v617, 0.0
        %v776 = vmax.f32 %v619, 0.0
        %v777 = vmax.f32 %v621, 0.0
        %v778 = vmax.f32 %v623, 0.0
        %v779 = vmax.f32 %v627, 0.0
        %v780 = vmax.f32 %v629, 0.0
        %v781 = vmax.f32 %v631, 0.0
        %v782 = vmax.f32 %v633, 0.0
        %v783 = vmax.f32 %v637, 0.0
        %v784 = vmax.f32 %v639, 0.0
        %v785 = vmax.f32 %v641, 0.0
        %v786 = vmax.f32 %v643, 0.0
        %v787 = vmax.f32 %v647, 0.0
        %v788 = vmax.f32 %v649, 0.0
        %v789 = vmax.f32 %v651, 0.0
        %v790 = vmax.f32 %v653, 0.0
        %v791 = vmax.f32 %v657, 0.0
        %v792 = vmax.f32 %v659, 0.0
        %v793 = vmax.f32 %v661, 0.0
        %v794 = vmax.f32 %v663, 0.0
        %v795 = vmax.f32 %v667, 0.0
        %v796 = vmax.f32 %v669, 0.0
        %v797 = vmax.f32 %v671, 0.0
        %v798 = vmax.f32 %v673, 0.0
        %v799 = vmax.f32 %v677, 0.0
        %v800 = vmax.f32 %v679, 0.0
        %v801 = vmax.f32 %v681, 0.0
        %v802 = vmax.f32 %v683, 0.0
        %v803 = vmax.f32 %v687, 0.0
        %v804 = vmax.f32 %v689, 0.0
        %v805 = vmax.f32 %v691, 0.0
        %v806 = vmax.f32 %v693, 0.0
        %v807 = vmax.f32 %v697, 0.0
        %v808 = vmax.f32 %v699, 0.0
        %v809 = vmax.f32 %v701, 0.0
        %v810 = vmax.f32 %v703, 0.0
        %v811 = vmax.f32 %v707, 0.0
        %v812 = vmax.f32 %v709, 0.0
        %v813 = vmax.f32 %v711, 0.0
        %v814 = vmax.f32 %v713, 0.0
        %v815 = vmax.f32 %v717, 0.0
        %v816 = vmax.f32 %v719, 0.0
        %v817 = vmax.f32 %v721, 0.0
        %v818 = vmax.f32 %v723, 0.0
        %v819 = vmax.f32 %v727, 0.0
        %v820 = vmax.f32 %v729, 0.0
        %v821 = vmax.f32 %v731, 0.0
        %v822 = vmax.f32 %v733, 0.0
        %v823 = vmax.f32 %v737, 0.0
        %v824 = vmax.f32 %v739, 0.0
        %v825 = vmax.f32 %v741, 0.0
        %v826 = vmax.f32 %v743, 0.0
        %v827 = vmax.f32 %v747, 0.0
        %v828 = vmax.f32 %v749, 0.0
        %v829 = vmax.f32 %v751, 0.0
        %v830 = vmax.f32 %v753, 0.0
        %v831 = vmax.f32 %v757, 0.0
        %v832 = vmax.f32 %v759, 0.0
        %v833 = vmax.f32 %v761, 0.0
        %v834 = vmax.f32 %v763, 0.0
        %v835 = vmax.f32 %v767, 0.0
        %v836 = vmax.f32 %v769, 0.0
        %v837 = vmax.f32 %v771, 0.0
        %v838 = vmax.f32 %v773, 0.0
        %v839 = vpack.c.bf16 %v777, %v775
        %v840 = vpack.c.bf16 %v778, %v776
        %v841 = vpack.c.bf16 %v781, %v779
        %v842 = vpack.c.bf16 %v782, %v780
        %v843 = vpack.c.bf16 %v785, %v783
        %v844 = vpack.c.bf16 %v786, %v784
        %v845 = vpack.c.bf16 %v789, %v787
        %v846 = vpack.c.bf16 %v790, %v788
        %v847 = vpack.c.bf16 %v793, %v791
        %v848 = vpack.c.bf16 %v794, %v792
        %v849 = vpack.c.bf16 %v797, %v795
        %v850 = vpack.c.bf16 %v798, %v796
        %v851 = vpack.c.bf16 %v801, %v799
        %v852 = vpack.c.bf16 %v802, %v800
        %v853 = vpack.c.bf16 %v805, %v803
        %v854 = vpack.c.bf16 %v806, %v804
        %v855 = vpack.c.bf16 %v809, %v807
        %v856 = vpack.c.bf16 %v810, %v808
        %v857 = vpack.c.bf16 %v813, %v811
        %v858 = vpack.c.bf16 %v814, %v812
        %v859 = vpack.c.bf16 %v817, %v815
        %v860 = vpack.c.bf16 %v818, %v816
        %v861 = vpack.c.bf16 %v821, %v819
        %v862 = vpack.c.bf16 %v822, %v820
        %v863 = vpack.c.bf16 %v825, %v823
        %v864 = vpack.c.bf16 %v826, %v824
        %v865 = vpack.c.bf16 %v829, %v827
        %v866 = vpack.c.bf16 %v830, %v828
        %v867 = vpack.c.bf16 %v833, %v831
        %v868 = vpack.c.bf16 %v834, %v832
        %v869 = vpack.c.bf16 %v837, %v835
        %v870 = vpack.c.bf16 %v838, %v836
        %v871 = vld [vmem:[#allocation3] sm:$0xff]
        %v872 = vld [vmem:[#allocation3 + $0x8] sm:$0xff]
        %v873 = vld [vmem:[#allocation3 + $0x10] sm:$0xff]
        %v874 = vld [vmem:[#allocation3 + $0x18] sm:$0xff]
        %v875 = vld [vmem:[#allocation3 + $0x20] sm:$0xff]
        %v876 = vld [vmem:[#allocation3 + $0x28] sm:$0xff]
        %v877 = vld [vmem:[#allocation3 + $0x30] sm:$0xff]
        %v878 = vld [vmem:[#allocation3 + $0x38] sm:$0xff]
        %v879 = vld [vmem:[#allocation3 + $0x40] sm:$0xff]
        %v880 = vld [vmem:[#allocation3 + $0x48] sm:$0xff]
        %v881 = vld [vmem:[#allocation3 + $0x50] sm:$0xff]
        %v882 = vld [vmem:[#allocation3 + $0x58] sm:$0xff]
        %v883 = vld [vmem:[#allocation3 + $0x60] sm:$0xff]
        %v884 = vld [vmem:[#allocation3 + $0x68] sm:$0xff]
        %v885 = vld [vmem:[#allocation3 + $0x70] sm:$0xff]
        %v886 = vld [vmem:[#allocation3 + $0x78] sm:$0xff]
        %v887 = vld [vmem:[#allocation3 + $0x80] sm:$0xff]
        %v888 = vld [vmem:[#allocation3 + $0x88] sm:$0xff]
        %v889 = vld [vmem:[#allocation3 + $0x90] sm:$0xff]
        %v890 = vld [vmem:[#allocation3 + $0x98] sm:$0xff]
        %v891 = vld [vmem:[#allocation3 + $0xa0] sm:$0xff]
        %v892 = vld [vmem:[#allocation3 + $0xa8] sm:$0xff]
        %v893 = vld [vmem:[#allocation3 + $0xb0] sm:$0xff]
        %v894 = vld [vmem:[#allocation3 + $0xb8] sm:$0xff]
        %v895 = vld [vmem:[#allocation3 + $0xc0] sm:$0xff]
        %v896 = vld [vmem:[#allocation3 + $0xc8] sm:$0xff]
        %v897 = vld [vmem:[#allocation3 + $0xd0] sm:$0xff]
        %v898 = vld [vmem:[#allocation3 + $0xd8] sm:$0xff]
        %v899 = vld [vmem:[#allocation3 + $0xe0] sm:$0xff]
        %v900 = vld [vmem:[#allocation3 + $0xe8] sm:$0xff]
        %v901 = vld [vmem:[#allocation3 + $0xf0] sm:$0xff]
        %v902 = vld [vmem:[#allocation3 + $0xf8] sm:$0xff]
        %v903 = vld [vmem:[#allocation3 + $0x100] sm:$0xff]
        %v904 = vld [vmem:[#allocation3 + $0x108] sm:$0xff]
        %v905 = vld [vmem:[#allocation3 + $0x110] sm:$0xff]
        %v906 = vld [vmem:[#allocation3 + $0x118] sm:$0xff]
        %v907 = vld [vmem:[#allocation3 + $0x120] sm:$0xff]
        %v908 = vld [vmem:[#allocation3 + $0x128] sm:$0xff]
        %v909 = vld [vmem:[#allocation3 + $0x130] sm:$0xff]
        %v910 = vld [vmem:[#allocation3 + $0x138] sm:$0xff]
        %v911 = vld [vmem:[#allocation3 + $0x140] sm:$0xff]
        %v912 = vld [vmem:[#allocation3 + $0x148] sm:$0xff]
        %v913 = vld [vmem:[#allocation3 + $0x150] sm:$0xff]
        %v914 = vld [vmem:[#allocation3 + $0x158] sm:$0xff]
        %v915 = vld [vmem:[#allocation3 + $0x160] sm:$0xff]
        %v916 = vld [vmem:[#allocation3 + $0x168] sm:$0xff]
        %v917 = vld [vmem:[#allocation3 + $0x170] sm:$0xff]
        %v918 = vld [vmem:[#allocation3 + $0x178] sm:$0xff]
        %v919 = vld [vmem:[#allocation3 + $0x180] sm:$0xff]
        %v920 = vld [vmem:[#allocation3 + $0x188] sm:$0xff]
        %v921 = vld [vmem:[#allocation3 + $0x190] sm:$0xff]
        %v922 = vld [vmem:[#allocation3 + $0x198] sm:$0xff]
        %v923 = vld [vmem:[#allocation3 + $0x1a0] sm:$0xff]
        %v924 = vld [vmem:[#allocation3 + $0x1a8] sm:$0xff]
        %v925 = vld [vmem:[#allocation3 + $0x1b0] sm:$0xff]
        %v926 = vld [vmem:[#allocation3 + $0x1b8] sm:$0xff]
        %v927 = vld [vmem:[#allocation3 + $0x1c0] sm:$0xff]
        %v928 = vld [vmem:[#allocation3 + $0x1c8] sm:$0xff]
        %v929 = vld [vmem:[#allocation3 + $0x1d0] sm:$0xff]
        %v930 = vld [vmem:[#allocation3 + $0x1d8] sm:$0xff]
        %v931 = vld [vmem:[#allocation3 + $0x1e0] sm:$0xff]
        %v932 = vld [vmem:[#allocation3 + $0x1e8] sm:$0xff]
        %v933 = vld [vmem:[#allocation3 + $0x1f0] sm:$0xff]
        %v934 = vld [vmem:[#allocation3 + $0x1f8] sm:$0xff]
        %v935 = vld [vmem:[%s4] sm:$0xf]
        %v937 = vlaneseq
        %v938 = vshrl.u32 %v937, 7
        %v939 = vsub.s32 0, %v938
        %v940 = vrot.slane %v935, %v939
        %v941 = vlaneseq
        %v942 = vshrl.u32 %v941, 7
        %v943 = vsub.s32 1, %v942
        %v944 = vrot.slane %v935, %v943
        %v945 = vlaneseq
        %v946 = vshrl.u32 %v945, 7
        %v947 = vsub.s32 2, %v946
        %v948 = vrot.slane %v935, %v947
        %v949 = vlaneseq
        %v950 = vshrl.u32 %v949, 7
        %v951 = vsub.s32 3, %v950
        %v952 = vrot.slane %v935, %v951
        %v1021 = vunpack.c.l.b16 %v871
        %v1022 = vunpack.c.h.b16 %v871
        %v1023 = vunpack.c.l.b16 %v872
        %v1024 = vunpack.c.h.b16 %v872
        %v1025 = vunpack.c.l.b16 %v873
        %v1026 = vunpack.c.h.b16 %v873
        %v1027 = vunpack.c.l.b16 %v874
        %v1028 = vunpack.c.h.b16 %v874
        %v1029 = vunpack.c.l.b16 %v875
        %v1030 = vunpack.c.h.b16 %v875
        %v1031 = vunpack.c.l.b16 %v876
        %v1032 = vunpack.c.h.b16 %v876
        %v1033 = vunpack.c.l.b16 %v877
        %v1034 = vunpack.c.h.b16 %v877
        %v1035 = vunpack.c.l.b16 %v878
        %v1036 = vunpack.c.h.b16 %v878
        %v1037 = vunpack.c.l.b16 %v879
        %v1038 = vunpack.c.h.b16 %v879
        %v1039 = vunpack.c.l.b16 %v880
        %v1040 = vunpack.c.h.b16 %v880
        %v1041 = vunpack.c.l.b16 %v881
        %v1042 = vunpack.c.h.b16 %v881
        %v1043 = vunpack.c.l.b16 %v882
        %v1044 = vunpack.c.h.b16 %v882
        %v1045 = vunpack.c.l.b16 %v883
        %v1046 = vunpack.c.h.b16 %v883
        %v1047 = vunpack.c.l.b16 %v884
        %v1048 = vunpack.c.h.b16 %v884
        %v1049 = vunpack.c.l.b16 %v885
        %v1050 = vunpack.c.h.b16 %v885
        %v1051 = vunpack.c.l.b16 %v886
        %v1052 = vunpack.c.h.b16 %v886
        %v1053 = vunpack.c.l.b16 %v887
        %v1054 = vunpack.c.h.b16 %v887
        %v1055 = vunpack.c.l.b16 %v888
        %v1056 = vunpack.c.h.b16 %v888
        %v1057 = vunpack.c.l.b16 %v889
        %v1058 = vunpack.c.h.b16 %v889
        %v1059 = vunpack.c.l.b16 %v890
        %v1060 = vunpack.c.h.b16 %v890
        %v1061 = vunpack.c.l.b16 %v891
        %v1062 = vunpack.c.h.b16 %v891
        %v1063 = vunpack.c.l.b16 %v892
        %v1064 = vunpack.c.h.b16 %v892
        %v1065 = vunpack.c.l.b16 %v893
        %v1066 = vunpack.c.h.b16 %v893
        %v1067 = vunpack.c.l.b16 %v894
        %v1068 = vunpack.c.h.b16 %v894
        %v1069 = vunpack.c.l.b16 %v895
        %v1070 = vunpack.c.h.b16 %v895
        %v1071 = vunpack.c.l.b16 %v896
        %v1072 = vunpack.c.h.b16 %v896
        %v1073 = vunpack.c.l.b16 %v897
        %v1074 = vunpack.c.h.b16 %v897
        %v1075 = vunpack.c.l.b16 %v898
        %v1076 = vunpack.c.h.b16 %v898
        %v1077 = vunpack.c.l.b16 %v899
        %v1078 = vunpack.c.h.b16 %v899
        %v1079 = vunpack.c.l.b16 %v900
        %v1080 = vunpack.c.h.b16 %v900
        %v1081 = vunpack.c.l.b16 %v901
        %v1082 = vunpack.c.h.b16 %v901
        %v1083 = vunpack.c.l.b16 %v902
        %v1084 = vunpack.c.h.b16 %v902
        %v1085 = vunpack.c.l.b16 %v903
        %v1086 = vunpack.c.h.b16 %v903
        %v1087 = vunpack.c.l.b16 %v904
        %v1088 = vunpack.c.h.b16 %v904
        %v1089 = vunpack.c.l.b16 %v905
        %v1090 = vunpack.c.h.b16 %v905
        %v1091 = vunpack.c.l.b16 %v906
        %v1092 = vunpack.c.h.b16 %v906
        %v1093 = vunpack.c.l.b16 %v907
        %v1094 = vunpack.c.h.b16 %v907
        %v1095 = vunpack.c.l.b16 %v908
        %v1096 = vunpack.c.h.b16 %v908
        %v1097 = vunpack.c.l.b16 %v909
        %v1098 = vunpack.c.h.b16 %v909
        %v1099 = vunpack.c.l.b16 %v910
        %v1100 = vunpack.c.h.b16 %v910
        %v1101 = vunpack.c.l.b16 %v911
        %v1102 = vunpack.c.h.b16 %v911
        %v1103 = vunpack.c.l.b16 %v912
        %v1104 = vunpack.c.h.b16 %v912
        %v1105 = vunpack.c.l.b16 %v913
        %v1106 = vunpack.c.h.b16 %v913
        %v1107 = vunpack.c.l.b16 %v914
        %v1108 = vunpack.c.h.b16 %v914
        %v1109 = vunpack.c.l.b16 %v915
        %v1110 = vunpack.c.h.b16 %v915
        %v1111 = vunpack.c.l.b16 %v916
        %v1112 = vunpack.c.h.b16 %v916
        %v1113 = vunpack.c.l.b16 %v917
        %v1114 = vunpack.c.h.b16 %v917
        %v1115 = vunpack.c.l.b16 %v918
        %v1116 = vunpack.c.h.b16 %v918
        %v1117 = vunpack.c.l.b16 %v919
        %v1118 = vunpack.c.h.b16 %v919
        %v1119 = vunpack.c.l.b16 %v920
        %v1120 = vunpack.c.h.b16 %v920
        %v1121 = vunpack.c.l.b16 %v921
        %v1122 = vunpack.c.h.b16 %v921
        %v1123 = vunpack.c.l.b16 %v922
        %v1124 = vunpack.c.h.b16 %v922
        %v1125 = vunpack.c.l.b16 %v923
        %v1126 = vunpack.c.h.b16 %v923
        %v1127 = vunpack.c.l.b16 %v924
        %v1128 = vunpack.c.h.b16 %v924
        %v1129 = vunpack.c.l.b16 %v925
        %v1130 = vunpack.c.h.b16 %v925
        %v1131 = vunpack.c.l.b16 %v926
        %v1132 = vunpack.c.h.b16 %v926
        %v1133 = vunpack.c.l.b16 %v927
        %v1134 = vunpack.c.h.b16 %v927
        %v1135 = vunpack.c.l.b16 %v928
        %v1136 = vunpack.c.h.b16 %v928
        %v1137 = vunpack.c.l.b16 %v929
        %v1138 = vunpack.c.h.b16 %v929
        %v1139 = vunpack.c.l.b16 %v930
        %v1140 = vunpack.c.h.b16 %v930
        %v1141 = vunpack.c.l.b16 %v931
        %v1142 = vunpack.c.h.b16 %v931
        %v1143 = vunpack.c.l.b16 %v932
        %v1144 = vunpack.c.h.b16 %v932
        %v1145 = vunpack.c.l.b16 %v933
        %v1146 = vunpack.c.h.b16 %v933
        %v1147 = vunpack.c.l.b16 %v934
        %v1148 = vunpack.c.h.b16 %v934
        %v1149 = vpack.c.b16 %v1025, %v1021
        %v1150 = vpack.c.b16 %v1026, %v1022
        %v1151 = vpack.c.b16 %v1027, %v1023
        %v1152 = vpack.c.b16 %v1028, %v1024
        %v1153 = vpack.c.b16 %v1033, %v1029
        %v1154 = vpack.c.b16 %v1034, %v1030
        %v1155 = vpack.c.b16 %v1035, %v1031
        %v1156 = vpack.c.b16 %v1036, %v1032
        %v1157 = vpack.c.b16 %v1041, %v1037
        %v1158 = vpack.c.b16 %v1042, %v1038
        %v1159 = vpack.c.b16 %v1043, %v1039
        %v1160 = vpack.c.b16 %v1044, %v1040
        %v1161 = vpack.c.b16 %v1049, %v1045
        %v1162 = vpack.c.b16 %v1050, %v1046
        %v1163 = vpack.c.b16 %v1051, %v1047
        %v1164 = vpack.c.b16 %v1052, %v1048
        %v1165 = vpack.c.b16 %v1057, %v1053
        %v1166 = vpack.c.b16 %v1058, %v1054
        %v1167 = vpack.c.b16 %v1059, %v1055
        %v1168 = vpack.c.b16 %v1060, %v1056
        %v1169 = vpack.c.b16 %v1065, %v1061
        %v1170 = vpack.c.b16 %v1066, %v1062
        %v1171 = vpack.c.b16 %v1067, %v1063
        %v1172 = vpack.c.b16 %v1068, %v1064
        %v1173 = vpack.c.b16 %v1073, %v1069
        %v1174 = vpack.c.b16 %v1074, %v1070
        %v1175 = vpack.c.b16 %v1075, %v1071
        %v1176 = vpack.c.b16 %v1076, %v1072
        %v1177 = vpack.c.b16 %v1081, %v1077
        %v1178 = vpack.c.b16 %v1082, %v1078
        %v1179 = vpack.c.b16 %v1083, %v1079
        %v1180 = vpack.c.b16 %v1084, %v1080
        %v1181 = vpack.c.b16 %v1089, %v1085
        %v1182 = vpack.c.b16 %v1090, %v1086
        %v1183 = vpack.c.b16 %v1091, %v1087
        %v1184 = vpack.c.b16 %v1092, %v1088
        %v1185 = vpack.c.b16 %v1097, %v1093
        %v1186 = vpack.c.b16 %v1098, %v1094
        %v1187 = vpack.c.b16 %v1099, %v1095
        %v1188 = vpack.c.b16 %v1100, %v1096
        %v1189 = vpack.c.b16 %v1105, %v1101
        %v1190 = vpack.c.b16 %v1106, %v1102
        %v1191 = vpack.c.b16 %v1107, %v1103
        %v1192 = vpack.c.b16 %v1108, %v1104
        %v1193 = vpack.c.b16 %v1113, %v1109
        %v1194 = vpack.c.b16 %v1114, %v1110
        %v1195 = vpack.c.b16 %v1115, %v1111
        %v1196 = vpack.c.b16 %v1116, %v1112
        %v1197 = vpack.c.b16 %v1121, %v1117
        %v1198 = vpack.c.b16 %v1122, %v1118
        %v1199 = vpack.c.b16 %v1123, %v1119
        %v1200 = vpack.c.b16 %v1124, %v1120
        %v1201 = vpack.c.b16 %v1129, %v1125
        %v1202 = vpack.c.b16 %v1130, %v1126
        %v1203 = vpack.c.b16 %v1131, %v1127
        %v1204 = vpack.c.b16 %v1132, %v1128
        %v1205 = vpack.c.b16 %v1137, %v1133
        %v1206 = vpack.c.b16 %v1138, %v1134
        %v1207 = vpack.c.b16 %v1139, %v1135
        %v1208 = vpack.c.b16 %v1140, %v1136
        %v1209 = vpack.c.b16 %v1145, %v1141
        %v1210 = vpack.c.b16 %v1146, %v1142
        %v1211 = vpack.c.b16 %v1147, %v1143
        %v1212 = vpack.c.b16 %v1148, %v1144
        %1277 = vmatprep.subr.bf16.mxu0 %v1178
        %1278 = vmatpush1.bf16.msra.mxu0 %v1177
        %1279 = vmatprep.subr.bf16.mxu0 %v1174
        %1280 = vmatpush1.bf16.msra.mxu0 %v1173
        %1281 = vmatprep.subr.bf16.mxu0 %v1170
        %1282 = vmatpush1.bf16.msra.mxu0 %v1169
        %1283 = vmatprep.subr.bf16.mxu0 %v1166
        %1284 = vmatpush1.bf16.msra.mxu0 %v1165
        %1285 = vmatprep.subr.bf16.mxu0 %v1162
        %1286 = vmatpush1.bf16.msra.mxu0 %v1161
        %1287 = vmatprep.subr.bf16.mxu0 %v1158
        %1288 = vmatpush1.bf16.msra.mxu0 %v1157
        %1289 = vmatprep.subr.bf16.mxu0 %v1154
        %1290 = vmatpush1.bf16.msra.mxu0 %v1153
        %1291 = vmatprep.subr.bf16.mxu0 %v1150
        %1292 = vmatpush1.bf16.msra.mxu0 %v1149
        %1293 = vmatprep.subr.bf16.mxu0 %v1210
        %1294 = vmatpush2.bf16.msra.mxu0 %v1209
        %1295 = vmatprep.subr.bf16.mxu0 %v1206
        %1296 = vmatpush2.bf16.msra.mxu0 %v1205
        %1297 = vmatprep.subr.bf16.mxu0 %v1202
        %1298 = vmatpush2.bf16.msra.mxu0 %v1201
        %1299 = vmatprep.subr.bf16.mxu0 %v1198
        %1300 = vmatpush2.bf16.msra.mxu0 %v1197
        %1301 = vmatprep.subr.bf16.mxu0 %v1194
        %1302 = vmatpush2.bf16.msra.mxu0 %v1193
        %1303 = vmatprep.subr.bf16.mxu0 %v1190
        %1304 = vmatpush2.bf16.msra.mxu0 %v1189
        %1305 = vmatprep.subr.bf16.mxu0 %v1186
        %1306 = vmatpush2.bf16.msra.mxu0 %v1185
        %1307 = vmatprep.subr.bf16.mxu0 %v1182
        %1308 = vmatpush2.bf16.msra.mxu0 %v1181
        %1309 = vmatprep.mubr.bf16.mxu0 %v840
        %1310 = vmatmul.mubr.bf16.gmra.mxu0 %v839
        %v1311 = vpop.f32.mrf.mxu0
        %v1312 = vadd.f32 %v940, %v1311
        %v1313 = vpop.f32.mrf.mxu0
        %v1314 = vadd.f32 %v944, %v1313
        %v1315 = vpop.f32.mrf.mxu0
        %v1316 = vadd.f32 %v940, %v1315
        %v1317 = vpop.f32.mrf.mxu0
        %v1318 = vadd.f32 %v944, %v1317
        %1319 = vmatprep.mubr.bf16.mxu0 %v842
        %1320 = vmatmul.mubr.bf16.gmra.mxu0 %v841
        %v1321 = vpop.f32.mrf.mxu0
        %v1322 = vadd.f32 %v940, %v1321
        %v1323 = vpop.f32.mrf.mxu0
        %v1324 = vadd.f32 %v944, %v1323
        %v1325 = vpop.f32.mrf.mxu0
        %v1326 = vadd.f32 %v940, %v1325
        %v1327 = vpop.f32.mrf.mxu0
        %v1328 = vadd.f32 %v944, %v1327
        %1329 = vmatprep.mubr.bf16.mxu0 %v844
        %1330 = vmatmul.mubr.bf16.gmra.mxu0 %v843
        %v1331 = vpop.f32.mrf.mxu0
        %v1332 = vadd.f32 %v940, %v1331
        %v1333 = vpop.f32.mrf.mxu0
        %v1334 = vadd.f32 %v944, %v1333
        %v1335 = vpop.f32.mrf.mxu0
        %v1336 = vadd.f32 %v940, %v1335
        %v1337 = vpop.f32.mrf.mxu0
        %v1338 = vadd.f32 %v944, %v1337
        %1339 = vmatprep.mubr.bf16.mxu0 %v846
        %1340 = vmatmul.mubr.bf16.gmra.mxu0 %v845
        %v1341 = vpop.f32.mrf.mxu0
        %v1342 = vadd.f32 %v940, %v1341
        %v1343 = vpop.f32.mrf.mxu0
        %v1344 = vadd.f32 %v944, %v1343
        %v1345 = vpop.f32.mrf.mxu0
        %v1346 = vadd.f32 %v940, %v1345
        %v1347 = vpop.f32.mrf.mxu0
        %v1348 = vadd.f32 %v944, %v1347
        %1349 = vmatprep.mubr.bf16.mxu0 %v848
        %1350 = vmatmul.mubr.bf16.gmra.mxu0 %v847
        %v1351 = vpop.f32.mrf.mxu0
        %v1352 = vadd.f32 %v940, %v1351
        %v1353 = vpop.f32.mrf.mxu0
        %v1354 = vadd.f32 %v944, %v1353
        %v1355 = vpop.f32.mrf.mxu0
        %v1356 = vadd.f32 %v940, %v1355
        %v1357 = vpop.f32.mrf.mxu0
        %v1358 = vadd.f32 %v944, %v1357
        %1359 = vmatprep.mubr.bf16.mxu0 %v850
        %1360 = vmatmul.mubr.bf16.gmra.mxu0 %v849
        %v1361 = vpop.f32.mrf.mxu0
        %v1362 = vadd.f32 %v940, %v1361
        %v1363 = vpop.f32.mrf.mxu0
        %v1364 = vadd.f32 %v944, %v1363
        %v1365 = vpop.f32.mrf.mxu0
        %v1366 = vadd.f32 %v940, %v1365
        %v1367 = vpop.f32.mrf.mxu0
        %v1368 = vadd.f32 %v944, %v1367
        %1369 = vmatprep.mubr.bf16.mxu0 %v852
        %1370 = vmatmul.mubr.bf16.gmra.mxu0 %v851
        %v1371 = vpop.f32.mrf.mxu0
        %v1372 = vadd.f32 %v940, %v1371
        %v1373 = vpop.f32.mrf.mxu0
        %v1374 = vadd.f32 %v944, %v1373
        %v1375 = vpop.f32.mrf.mxu0
        %v1376 = vadd.f32 %v940, %v1375
        %v1377 = vpop.f32.mrf.mxu0
        %v1378 = vadd.f32 %v944, %v1377
        %1379 = vmatprep.mubr.bf16.mxu0 %v854
        %1380 = vmatmul.mubr.bf16.gmra.mxu0 %v853
        %v1381 = vpop.f32.mrf.mxu0
        %v1382 = vadd.f32 %v940, %v1381
        %v1383 = vpop.f32.mrf.mxu0
        %v1384 = vadd.f32 %v944, %v1383
        %v1385 = vpop.f32.mrf.mxu0
        %v1386 = vadd.f32 %v940, %v1385
        %v1387 = vpop.f32.mrf.mxu0
        %v1388 = vadd.f32 %v944, %v1387
        %1389 = vmatprep.mubr.bf16.mxu0 %v856
        %1390 = vmatmul.mubr.bf16.gmra.mxu0 %v855
        %v1391 = vpop.f32.mrf.mxu0
        %v1392 = vadd.f32 %v940, %v1391
        %v1393 = vpop.f32.mrf.mxu0
        %v1394 = vadd.f32 %v944, %v1393
        %v1395 = vpop.f32.mrf.mxu0
        %v1396 = vadd.f32 %v940, %v1395
        %v1397 = vpop.f32.mrf.mxu0
        %v1398 = vadd.f32 %v944, %v1397
        %1399 = vmatprep.mubr.bf16.mxu0 %v858
        %1400 = vmatmul.mubr.bf16.gmra.mxu0 %v857
        %v1401 = vpop.f32.mrf.mxu0
        %v1402 = vadd.f32 %v940, %v1401
        %v1403 = vpop.f32.mrf.mxu0
        %v1404 = vadd.f32 %v944, %v1403
        %v1405 = vpop.f32.mrf.mxu0
        %v1406 = vadd.f32 %v940, %v1405
        %v1407 = vpop.f32.mrf.mxu0
        %v1408 = vadd.f32 %v944, %v1407
        %1409 = vmatprep.mubr.bf16.mxu0 %v860
        %1410 = vmatmul.mubr.bf16.gmra.mxu0 %v859
        %v1411 = vpop.f32.mrf.mxu0
        %v1412 = vadd.f32 %v940, %v1411
        %v1413 = vpop.f32.mrf.mxu0
        %v1414 = vadd.f32 %v944, %v1413
        %v1415 = vpop.f32.mrf.mxu0
        %v1416 = vadd.f32 %v940, %v1415
        %v1417 = vpop.f32.mrf.mxu0
        %v1418 = vadd.f32 %v944, %v1417
        %1419 = vmatprep.mubr.bf16.mxu0 %v862
        %1420 = vmatmul.mubr.bf16.gmra.mxu0 %v861
        %v1421 = vpop.f32.mrf.mxu0
        %v1422 = vadd.f32 %v940, %v1421
        %v1423 = vpop.f32.mrf.mxu0
        %v1424 = vadd.f32 %v944, %v1423
        %v1425 = vpop.f32.mrf.mxu0
        %v1426 = vadd.f32 %v940, %v1425
        %v1427 = vpop.f32.mrf.mxu0
        %v1428 = vadd.f32 %v944, %v1427
        %1429 = vmatprep.mubr.bf16.mxu0 %v864
        %1430 = vmatmul.mubr.bf16.gmra.mxu0 %v863
        %v1431 = vpop.f32.mrf.mxu0
        %v1432 = vadd.f32 %v940, %v1431
        %v1433 = vpop.f32.mrf.mxu0
        %v1434 = vadd.f32 %v944, %v1433
        %v1435 = vpop.f32.mrf.mxu0
        %v1436 = vadd.f32 %v940, %v1435
        %v1437 = vpop.f32.mrf.mxu0
        %v1438 = vadd.f32 %v944, %v1437
        %1439 = vmatprep.mubr.bf16.mxu0 %v866
        %1440 = vmatmul.mubr.bf16.gmra.mxu0 %v865
        %v1441 = vpop.f32.mrf.mxu0
        %v1442 = vadd.f32 %v940, %v1441
        %v1443 = vpop.f32.mrf.mxu0
        %v1444 = vadd.f32 %v944, %v1443
        %v1445 = vpop.f32.mrf.mxu0
        %v1446 = vadd.f32 %v940, %v1445
        %v1447 = vpop.f32.mrf.mxu0
        %v1448 = vadd.f32 %v944, %v1447
        %1449 = vmatprep.mubr.bf16.mxu0 %v868
        %1450 = vmatmul.mubr.bf16.gmra.mxu0 %v867
        %v1451 = vpop.f32.mrf.mxu0
        %v1452 = vadd.f32 %v940, %v1451
        %v1453 = vpop.f32.mrf.mxu0
        %v1454 = vadd.f32 %v944, %v1453
        %v1455 = vpop.f32.mrf.mxu0
        %v1456 = vadd.f32 %v940, %v1455
        %v1457 = vpop.f32.mrf.mxu0
        %v1458 = vadd.f32 %v944, %v1457
        %1459 = vmatprep.mubr.bf16.mxu0 %v870
        %1460 = vmatmul.mubr.bf16.gmra.mxu0 %v869
        %v1461 = vpop.f32.mrf.mxu0
        %v1462 = vadd.f32 %v940, %v1461
        %v1463 = vpop.f32.mrf.mxu0
        %v1464 = vadd.f32 %v944, %v1463
        %v1465 = vpop.f32.mrf.mxu0
        %v1466 = vadd.f32 %v940, %v1465
        %v1467 = vpop.f32.mrf.mxu0
        %v1468 = vadd.f32 %v944, %v1467
        %1469 = vdwg.mxu0
        %1470 = vmatprep.subr.bf16.mxu0 %v1180
        %1471 = vmatpush1.bf16.msra.mxu0 %v1179
        %1472 = vmatprep.subr.bf16.mxu0 %v1176
        %1473 = vmatpush1.bf16.msra.mxu0 %v1175
        %1474 = vmatprep.subr.bf16.mxu0 %v1172
        %1475 = vmatpush1.bf16.msra.mxu0 %v1171
        %1476 = vmatprep.subr.bf16.mxu0 %v1168
        %1477 = vmatpush1.bf16.msra.mxu0 %v1167
        %1478 = vmatprep.subr.bf16.mxu0 %v1164
        %1479 = vmatpush1.bf16.msra.mxu0 %v1163
        %1480 = vmatprep.subr.bf16.mxu0 %v1160
        %1481 = vmatpush1.bf16.msra.mxu0 %v1159
        %1482 = vmatprep.subr.bf16.mxu0 %v1156
        %1483 = vmatpush1.bf16.msra.mxu0 %v1155
        %1484 = vmatprep.subr.bf16.mxu0 %v1152
        %1485 = vmatpush1.bf16.msra.mxu0 %v1151
        %1486 = vmatprep.subr.bf16.mxu0 %v1212
        %1487 = vmatpush2.bf16.msra.mxu0 %v1211
        %1488 = vmatprep.subr.bf16.mxu0 %v1208
        %1489 = vmatpush2.bf16.msra.mxu0 %v1207
        %1490 = vmatprep.subr.bf16.mxu0 %v1204
        %1491 = vmatpush2.bf16.msra.mxu0 %v1203
        %1492 = vmatprep.subr.bf16.mxu0 %v1200
        %1493 = vmatpush2.bf16.msra.mxu0 %v1199
        %1494 = vmatprep.subr.bf16.mxu0 %v1196
        %1495 = vmatpush2.bf16.msra.mxu0 %v1195
        %1496 = vmatprep.subr.bf16.mxu0 %v1192
        %1497 = vmatpush2.bf16.msra.mxu0 %v1191
        %1498 = vmatprep.subr.bf16.mxu0 %v1188
        %1499 = vmatpush2.bf16.msra.mxu0 %v1187
        %1500 = vmatprep.subr.bf16.mxu0 %v1184
        %1501 = vmatpush2.bf16.msra.mxu0 %v1183
        %1502 = vmatprep.mubr.bf16.mxu0 %v840
        %1503 = vmatmul.mubr.bf16.gmra.mxu0 %v839
        %v1504 = vpop.f32.mrf.mxu0
        %v1505 = vadd.f32 %v948, %v1504
        %v1506 = vpop.f32.mrf.mxu0
        %v1507 = vadd.f32 %v952, %v1506
        %v1508 = vpop.f32.mrf.mxu0
        %v1509 = vadd.f32 %v948, %v1508
        %v1510 = vpop.f32.mrf.mxu0
        %v1511 = vadd.f32 %v952, %v1510
        %1512 = vmatprep.mubr.bf16.mxu0 %v842
        %1513 = vmatmul.mubr.bf16.gmra.mxu0 %v841
        %v1514 = vpop.f32.mrf.mxu0
        %v1515 = vadd.f32 %v948, %v1514
        %v1516 = vpop.f32.mrf.mxu0
        %v1517 = vadd.f32 %v952, %v1516
        %v1518 = vpop.f32.mrf.mxu0
        %v1519 = vadd.f32 %v948, %v1518
        %v1520 = vpop.f32.mrf.mxu0
        %v1521 = vadd.f32 %v952, %v1520
        %1522 = vmatprep.mubr.bf16.mxu0 %v844
        %1523 = vmatmul.mubr.bf16.gmra.mxu0 %v843
        %v1524 = vpop.f32.mrf.mxu0
        %v1525 = vadd.f32 %v948, %v1524
        %v1526 = vpop.f32.mrf.mxu0
        %v1527 = vadd.f32 %v952, %v1526
        %v1528 = vpop.f32.mrf.mxu0
        %v1529 = vadd.f32 %v948, %v1528
        %v1530 = vpop.f32.mrf.mxu0
        %v1531 = vadd.f32 %v952, %v1530
        %1532 = vmatprep.mubr.bf16.mxu0 %v846
        %1533 = vmatmul.mubr.bf16.gmra.mxu0 %v845
        %v1534 = vpop.f32.mrf.mxu0
        %v1535 = vadd.f32 %v948, %v1534
        %v1536 = vpop.f32.mrf.mxu0
        %v1537 = vadd.f32 %v952, %v1536
        %v1538 = vpop.f32.mrf.mxu0
        %v1539 = vadd.f32 %v948, %v1538
        %v1540 = vpop.f32.mrf.mxu0
        %v1541 = vadd.f32 %v952, %v1540
        %1542 = vmatprep.mubr.bf16.mxu0 %v848
        %1543 = vmatmul.mubr.bf16.gmra.mxu0 %v847
        %v1544 = vpop.f32.mrf.mxu0
        %v1545 = vadd.f32 %v948, %v1544
        %v1546 = vpop.f32.mrf.mxu0
        %v1547 = vadd.f32 %v952, %v1546
        %v1548 = vpop.f32.mrf.mxu0
        %v1549 = vadd.f32 %v948, %v1548
        %v1550 = vpop.f32.mrf.mxu0
        %v1551 = vadd.f32 %v952, %v1550
        %1552 = vmatprep.mubr.bf16.mxu0 %v850
        %1553 = vmatmul.mubr.bf16.gmra.mxu0 %v849
        %v1554 = vpop.f32.mrf.mxu0
        %v1555 = vadd.f32 %v948, %v1554
        %v1556 = vpop.f32.mrf.mxu0
        %v1557 = vadd.f32 %v952, %v1556
        %v1558 = vpop.f32.mrf.mxu0
        %v1559 = vadd.f32 %v948, %v1558
        %v1560 = vpop.f32.mrf.mxu0
        %v1561 = vadd.f32 %v952, %v1560
        %1562 = vmatprep.mubr.bf16.mxu0 %v852
        %1563 = vmatmul.mubr.bf16.gmra.mxu0 %v851
        %v1564 = vpop.f32.mrf.mxu0
        %v1565 = vadd.f32 %v948, %v1564
        %v1566 = vpop.f32.mrf.mxu0
        %v1567 = vadd.f32 %v952, %v1566
        %v1568 = vpop.f32.mrf.mxu0
        %v1569 = vadd.f32 %v948, %v1568
        %v1570 = vpop.f32.mrf.mxu0
        %v1571 = vadd.f32 %v952, %v1570
        %1572 = vmatprep.mubr.bf16.mxu0 %v854
        %1573 = vmatmul.mubr.bf16.gmra.mxu0 %v853
        %v1574 = vpop.f32.mrf.mxu0
        %v1575 = vadd.f32 %v948, %v1574
        %v1576 = vpop.f32.mrf.mxu0
        %v1577 = vadd.f32 %v952, %v1576
        %v1578 = vpop.f32.mrf.mxu0
        %v1579 = vadd.f32 %v948, %v1578
        %v1580 = vpop.f32.mrf.mxu0
        %v1581 = vadd.f32 %v952, %v1580
        %1582 = vmatprep.mubr.bf16.mxu0 %v856
        %1583 = vmatmul.mubr.bf16.gmra.mxu0 %v855
        %v1584 = vpop.f32.mrf.mxu0
        %v1585 = vadd.f32 %v948, %v1584
        %v1586 = vpop.f32.mrf.mxu0
        %v1587 = vadd.f32 %v952, %v1586
        %v1588 = vpop.f32.mrf.mxu0
        %v1589 = vadd.f32 %v948, %v1588
        %v1590 = vpop.f32.mrf.mxu0
        %v1591 = vadd.f32 %v952, %v1590
        %1592 = vmatprep.mubr.bf16.mxu0 %v858
        %1593 = vmatmul.mubr.bf16.gmra.mxu0 %v857
        %v1594 = vpop.f32.mrf.mxu0
        %v1595 = vadd.f32 %v948, %v1594
        %v1596 = vpop.f32.mrf.mxu0
        %v1597 = vadd.f32 %v952, %v1596
        %v1598 = vpop.f32.mrf.mxu0
        %v1599 = vadd.f32 %v948, %v1598
        %v1600 = vpop.f32.mrf.mxu0
        %v1601 = vadd.f32 %v952, %v1600
        %1602 = vmatprep.mubr.bf16.mxu0 %v860
        %1603 = vmatmul.mubr.bf16.gmra.mxu0 %v859
        %v1604 = vpop.f32.mrf.mxu0
        %v1605 = vadd.f32 %v948, %v1604
        %v1606 = vpop.f32.mrf.mxu0
        %v1607 = vadd.f32 %v952, %v1606
        %v1608 = vpop.f32.mrf.mxu0
        %v1609 = vadd.f32 %v948, %v1608
        %v1610 = vpop.f32.mrf.mxu0
        %v1611 = vadd.f32 %v952, %v1610
        %1612 = vmatprep.mubr.bf16.mxu0 %v862
        %1613 = vmatmul.mubr.bf16.gmra.mxu0 %v861
        %v1614 = vpop.f32.mrf.mxu0
        %v1615 = vadd.f32 %v948, %v1614
        %v1616 = vpop.f32.mrf.mxu0
        %v1617 = vadd.f32 %v952, %v1616
        %v1618 = vpop.f32.mrf.mxu0
        %v1619 = vadd.f32 %v948, %v1618
        %v1620 = vpop.f32.mrf.mxu0
        %v1621 = vadd.f32 %v952, %v1620
        %1622 = vmatprep.mubr.bf16.mxu0 %v864
        %1623 = vmatmul.mubr.bf16.gmra.mxu0 %v863
        %v1624 = vpop.f32.mrf.mxu0
        %v1625 = vadd.f32 %v948, %v1624
        %v1626 = vpop.f32.mrf.mxu0
        %v1627 = vadd.f32 %v952, %v1626
        %v1628 = vpop.f32.mrf.mxu0
        %v1629 = vadd.f32 %v948, %v1628
        %v1630 = vpop.f32.mrf.mxu0
        %v1631 = vadd.f32 %v952, %v1630
        %1632 = vmatprep.mubr.bf16.mxu0 %v866
        %1633 = vmatmul.mubr.bf16.gmra.mxu0 %v865
        %v1634 = vpop.f32.mrf.mxu0
        %v1635 = vadd.f32 %v948, %v1634
        %v1636 = vpop.f32.mrf.mxu0
        %v1637 = vadd.f32 %v952, %v1636
        %v1638 = vpop.f32.mrf.mxu0
        %v1639 = vadd.f32 %v948, %v1638
        %v1640 = vpop.f32.mrf.mxu0
        %v1641 = vadd.f32 %v952, %v1640
        %1642 = vmatprep.mubr.bf16.mxu0 %v868
        %1643 = vmatmul.mubr.bf16.gmra.mxu0 %v867
        %v1644 = vpop.f32.mrf.mxu0
        %v1645 = vadd.f32 %v948, %v1644
        %v1646 = vpop.f32.mrf.mxu0
        %v1647 = vadd.f32 %v952, %v1646
        %v1648 = vpop.f32.mrf.mxu0
        %v1649 = vadd.f32 %v948, %v1648
        %v1650 = vpop.f32.mrf.mxu0
        %v1651 = vadd.f32 %v952, %v1650
        %1652 = vmatprep.mubr.bf16.mxu0 %v870
        %1653 = vmatmul.mubr.bf16.gmra.mxu0 %v869
        %v1654 = vpop.f32.mrf.mxu0
        %v1655 = vadd.f32 %v948, %v1654
        %v1656 = vpop.f32.mrf.mxu0
        %v1657 = vadd.f32 %v952, %v1656
        %v1658 = vpop.f32.mrf.mxu0
        %v1659 = vadd.f32 %v948, %v1658
        %v1660 = vpop.f32.mrf.mxu0
        %v1661 = vadd.f32 %v952, %v1660
        %1662 = vdwg.mxu0
        %v1663 = vmax.f32 %v1312, 0.0
        %v1664 = vmax.f32 %v1314, 0.0
        %v1665 = vmax.f32 %v1505, 0.0
        %v1666 = vmax.f32 %v1507, 0.0
        %v1667 = vmax.f32 %v1316, 0.0
        %v1668 = vmax.f32 %v1318, 0.0
        %v1669 = vmax.f32 %v1509, 0.0
        %v1670 = vmax.f32 %v1511, 0.0
        %v1671 = vmax.f32 %v1322, 0.0
        %v1672 = vmax.f32 %v1324, 0.0
        %v1673 = vmax.f32 %v1515, 0.0
        %v1674 = vmax.f32 %v1517, 0.0
        %v1675 = vmax.f32 %v1326, 0.0
        %v1676 = vmax.f32 %v1328, 0.0
        %v1677 = vmax.f32 %v1519, 0.0
        %v1678 = vmax.f32 %v1521, 0.0
        %v1679 = vmax.f32 %v1332, 0.0
        %v1680 = vmax.f32 %v1334, 0.0
        %v1681 = vmax.f32 %v1525, 0.0
        %v1682 = vmax.f32 %v1527, 0.0
        %v1683 = vmax.f32 %v1336, 0.0
        %v1684 = vmax.f32 %v1338, 0.0
        %v1685 = vmax.f32 %v1529, 0.0
        %v1686 = vmax.f32 %v1531, 0.0
        %v1687 = vmax.f32 %v1342, 0.0
        %v1688 = vmax.f32 %v1344, 0.0
        %v1689 = vmax.f32 %v1535, 0.0
        %v1690 = vmax.f32 %v1537, 0.0
        %v1691 = vmax.f32 %v1346, 0.0
        %v1692 = vmax.f32 %v1348, 0.0
        %v1693 = vmax.f32 %v1539, 0.0
        %v1694 = vmax.f32 %v1541, 0.0
        %v1695 = vmax.f32 %v1352, 0.0
        %v1696 = vmax.f32 %v1354, 0.0
        %v1697 = vmax.f32 %v1545, 0.0
        %v1698 = vmax.f32 %v1547, 0.0
        %v1699 = vmax.f32 %v1356, 0.0
        %v1700 = vmax.f32 %v1358, 0.0
        %v1701 = vmax.f32 %v1549, 0.0
        %v1702 = vmax.f32 %v1551, 0.0
        %v1703 = vmax.f32 %v1362, 0.0
        %v1704 = vmax.f32 %v1364, 0.0
        %v1705 = vmax.f32 %v1555, 0.0
        %v1706 = vmax.f32 %v1557, 0.0
        %v1707 = vmax.f32 %v1366, 0.0
        %v1708 = vmax.f32 %v1368, 0.0
        %v1709 = vmax.f32 %v1559, 0.0
        %v1710 = vmax.f32 %v1561, 0.0
        %v1711 = vmax.f32 %v1372, 0.0
        %v1712 = vmax.f32 %v1374, 0.0
        %v1713 = vmax.f32 %v1565, 0.0
        %v1714 = vmax.f32 %v1567, 0.0
        %v1715 = vmax.f32 %v1376, 0.0
        %v1716 = vmax.f32 %v1378, 0.0
        %v1717 = vmax.f32 %v1569, 0.0
        %v1718 = vmax.f32 %v1571, 0.0
        %v1719 = vmax.f32 %v1382, 0.0
        %v1720 = vmax.f32 %v1384, 0.0
        %v1721 = vmax.f32 %v1575, 0.0
        %v1722 = vmax.f32 %v1577, 0.0
        %v1723 = vmax.f32 %v1386, 0.0
        %v1724 = vmax.f32 %v1388, 0.0
        %v1725 = vmax.f32 %v1579, 0.0
        %v1726 = vmax.f32 %v1581, 0.0
        %v1727 = vmax.f32 %v1392, 0.0
        %v1728 = vmax.f32 %v1394, 0.0
        %v1729 = vmax.f32 %v1585, 0.0
        %v1730 = vmax.f32 %v1587, 0.0
        %v1731 = vmax.f32 %v1396, 0.0
        %v1732 = vmax.f32 %v1398, 0.0
        %v1733 = vmax.f32 %v1589, 0.0
        %v1734 = vmax.f32 %v1591, 0.0
        %v1735 = vmax.f32 %v1402, 0.0
        %v1736 = vmax.f32 %v1404, 0.0
        %v1737 = vmax.f32 %v1595, 0.0
        %v1738 = vmax.f32 %v1597, 0.0
        %v1739 = vmax.f32 %v1406, 0.0
        %v1740 = vmax.f32 %v1408, 0.0
        %v1741 = vmax.f32 %v1599, 0.0
        %v1742 = vmax.f32 %v1601, 0.0
        %v1743 = vmax.f32 %v1412, 0.0
        %v1744 = vmax.f32 %v1414, 0.0
        %v1745 = vmax.f32 %v1605, 0.0
        %v1746 = vmax.f32 %v1607, 0.0
        %v1747 = vmax.f32 %v1416, 0.0
        %v1748 = vmax.f32 %v1418, 0.0
        %v1749 = vmax.f32 %v1609, 0.0
        %v1750 = vmax.f32 %v1611, 0.0
        %v1751 = vmax.f32 %v1422, 0.0
        %v1752 = vmax.f32 %v1424, 0.0
        %v1753 = vmax.f32 %v1615, 0.0
        %v1754 = vmax.f32 %v1617, 0.0
        %v1755 = vmax.f32 %v1426, 0.0
        %v1756 = vmax.f32 %v1428, 0.0
        %v1757 = vmax.f32 %v1619, 0.0
        %v1758 = vmax.f32 %v1621, 0.0
        %v1759 = vmax.f32 %v1432, 0.0
        %v1760 = vmax.f32 %v1434, 0.0
        %v1761 = vmax.f32 %v1625, 0.0
        %v1762 = vmax.f32 %v1627, 0.0
        %v1763 = vmax.f32 %v1436, 0.0
        %v1764 = vmax.f32 %v1438, 0.0
        %v1765 = vmax.f32 %v1629, 0.0
        %v1766 = vmax.f32 %v1631, 0.0
        %v1767 = vmax.f32 %v1442, 0.0
        %v1768 = vmax.f32 %v1444, 0.0
        %v1769 = vmax.f32 %v1635, 0.0
        %v1770 = vmax.f32 %v1637, 0.0
        %v1771 = vmax.f32 %v1446, 0.0
        %v1772 = vmax.f32 %v1448, 0.0
        %v1773 = vmax.f32 %v1639, 0.0
        %v1774 = vmax.f32 %v1641, 0.0
        %v1775 = vmax.f32 %v1452, 0.0
        %v1776 = vmax.f32 %v1454, 0.0
        %v1777 = vmax.f32 %v1645, 0.0
        %v1778 = vmax.f32 %v1647, 0.0
        %v1779 = vmax.f32 %v1456, 0.0
        %v1780 = vmax.f32 %v1458, 0.0
        %v1781 = vmax.f32 %v1649, 0.0
        %v1782 = vmax.f32 %v1651, 0.0
        %v1783 = vmax.f32 %v1462, 0.0
        %v1784 = vmax.f32 %v1464, 0.0
        %v1785 = vmax.f32 %v1655, 0.0
        %v1786 = vmax.f32 %v1657, 0.0
        %v1787 = vmax.f32 %v1466, 0.0
        %v1788 = vmax.f32 %v1468, 0.0
        %v1789 = vmax.f32 %v1659, 0.0
        %v1790 = vmax.f32 %v1661, 0.0
        %v1791 = vpack.c.bf16 %v1667, %v1663
        %v1792 = vpack.c.bf16 %v1668, %v1664
        %v1793 = vpack.c.bf16 %v1669, %v1665
        %v1794 = vpack.c.bf16 %v1670, %v1666
        %v1795 = vpack.c.bf16 %v1675, %v1671
        %v1796 = vpack.c.bf16 %v1676, %v1672
        %v1797 = vpack.c.bf16 %v1677, %v1673
        %v1798 = vpack.c.bf16 %v1678, %v1674
        %v1799 = vpack.c.bf16 %v1683, %v1679
        %v1800 = vpack.c.bf16 %v1684, %v1680
        %v1801 = vpack.c.bf16 %v1685, %v1681
        %v1802 = vpack.c.bf16 %v1686, %v1682
        %v1803 = vpack.c.bf16 %v1691, %v1687
        %v1804 = vpack.c.bf16 %v1692, %v1688
        %v1805 = vpack.c.bf16 %v1693, %v1689
        %v1806 = vpack.c.bf16 %v1694, %v1690
        %v1807 = vpack.c.bf16 %v1699, %v1695
        %v1808 = vpack.c.bf16 %v1700, %v1696
        %v1809 = vpack.c.bf16 %v1701, %v1697
        %v1810 = vpack.c.bf16 %v1702, %v1698
        %v1811 = vpack.c.bf16 %v1707, %v1703
        %v1812 = vpack.c.bf16 %v1708, %v1704
        %v1813 = vpack.c.bf16 %v1709, %v1705
        %v1814 = vpack.c.bf16 %v1710, %v1706
        %v1815 = vpack.c.bf16 %v1715, %v1711
        %v1816 = vpack.c.bf16 %v1716, %v1712
        %v1817 = vpack.c.bf16 %v1717, %v1713
        %v1818 = vpack.c.bf16 %v1718, %v1714
        %v1819 = vpack.c.bf16 %v1723, %v1719
        %v1820 = vpack.c.bf16 %v1724, %v1720
        %v1821 = vpack.c.bf16 %v1725, %v1721
        %v1822 = vpack.c.bf16 %v1726, %v1722
        %v1823 = vpack.c.bf16 %v1731, %v1727
        %v1824 = vpack.c.bf16 %v1732, %v1728
        %v1825 = vpack.c.bf16 %v1733, %v1729
        %v1826 = vpack.c.bf16 %v1734, %v1730
        %v1827 = vpack.c.bf16 %v1739, %v1735
        %v1828 = vpack.c.bf16 %v1740, %v1736
        %v1829 = vpack.c.bf16 %v1741, %v1737
        %v1830 = vpack.c.bf16 %v1742, %v1738
        %v1831 = vpack.c.bf16 %v1747, %v1743
        %v1832 = vpack.c.bf16 %v1748, %v1744
        %v1833 = vpack.c.bf16 %v1749, %v1745
        %v1834 = vpack.c.bf16 %v1750, %v1746
        %v1835 = vpack.c.bf16 %v1755, %v1751
        %v1836 = vpack.c.bf16 %v1756, %v1752
        %v1837 = vpack.c.bf16 %v1757, %v1753
        %v1838 = vpack.c.bf16 %v1758, %v1754
        %v1839 = vpack.c.bf16 %v1763, %v1759
        %v1840 = vpack.c.bf16 %v1764, %v1760
        %v1841 = vpack.c.bf16 %v1765, %v1761
        %v1842 = vpack.c.bf16 %v1766, %v1762
        %v1843 = vpack.c.bf16 %v1771, %v1767
        %v1844 = vpack.c.bf16 %v1772, %v1768
        %v1845 = vpack.c.bf16 %v1773, %v1769
        %v1846 = vpack.c.bf16 %v1774, %v1770
        %v1847 = vpack.c.bf16 %v1779, %v1775
        %v1848 = vpack.c.bf16 %v1780, %v1776
        %v1849 = vpack.c.bf16 %v1781, %v1777
        %v1850 = vpack.c.bf16 %v1782, %v1778
        %v1851 = vpack.c.bf16 %v1787, %v1783
        %v1852 = vpack.c.bf16 %v1788, %v1784
        %v1853 = vpack.c.bf16 %v1789, %v1785
        %v1854 = vpack.c.bf16 %v1790, %v1786
        %v1855 = vld [vmem:[%s5] sm:$0xff]
        %v1856 = vld [vmem:[%s5 + $0x8] sm:$0xf]
        %v1857 = vld [vmem:[%s5 + $0xc] sm:$0xff]
        %v1858 = vld [vmem:[%s5 + $0x14] sm:$0xf]
        %v1859 = vld [vmem:[%s5 + $0x18] sm:$0xff]
        %v1860 = vld [vmem:[%s5 + $0x20] sm:$0xf]
        %v1861 = vld [vmem:[%s5 + $0x24] sm:$0xff]
        %v1862 = vld [vmem:[%s5 + $0x2c] sm:$0xf]
        %v1863 = vld [vmem:[%s5 + $0x30] sm:$0xff]
        %v1864 = vld [vmem:[%s5 + $0x38] sm:$0xf]
        %v1865 = vld [vmem:[%s5 + $0x3c] sm:$0xff]
        %v1866 = vld [vmem:[%s5 + $0x44] sm:$0xf]
        %v1867 = vld [vmem:[%s5 + $0x48] sm:$0xff]
        %v1868 = vld [vmem:[%s5 + $0x50] sm:$0xf]
        %v1869 = vld [vmem:[%s5 + $0x54] sm:$0xff]
        %v1870 = vld [vmem:[%s5 + $0x5c] sm:$0xf]
        %v1871 = vld [vmem:[%s5 + $0x60] sm:$0xff]
        %v1872 = vld [vmem:[%s5 + $0x68] sm:$0xf]
        %v1873 = vld [vmem:[%s5 + $0x6c] sm:$0xff]
        %v1874 = vld [vmem:[%s5 + $0x74] sm:$0xf]
        %v1875 = vld [vmem:[%s5 + $0x78] sm:$0xff]
        %v1876 = vld [vmem:[%s5 + $0x80] sm:$0xf]
        %v1877 = vld [vmem:[%s5 + $0x84] sm:$0xff]
        %v1878 = vld [vmem:[%s5 + $0x8c] sm:$0xf]
        %v1879 = vld [vmem:[%s5 + $0x90] sm:$0xff]
        %v1880 = vld [vmem:[%s5 + $0x98] sm:$0xf]
        %v1881 = vld [vmem:[%s5 + $0x9c] sm:$0xff]
        %v1882 = vld [vmem:[%s5 + $0xa4] sm:$0xf]
        %v1883 = vld [vmem:[%s5 + $0xa8] sm:$0xff]
        %v1884 = vld [vmem:[%s5 + $0xb0] sm:$0xf]
        %v1885 = vld [vmem:[%s5 + $0xb4] sm:$0xff]
        %v1886 = vld [vmem:[%s5 + $0xbc] sm:$0xf]
        %v1887 = vld [vmem:[%s5 + $0xc0] sm:$0xff]
        %v1888 = vld [vmem:[%s5 + $0xc8] sm:$0xf]
        %v1889 = vld [vmem:[%s5 + $0xcc] sm:$0xff]
        %v1890 = vld [vmem:[%s5 + $0xd4] sm:$0xf]
        %v1891 = vld [vmem:[%s5 + $0xd8] sm:$0xff]
        %v1892 = vld [vmem:[%s5 + $0xe0] sm:$0xf]
        %v1893 = vld [vmem:[%s5 + $0xe4] sm:$0xff]
        %v1894 = vld [vmem:[%s5 + $0xec] sm:$0xf]
        %v1895 = vld [vmem:[%s5 + $0xf0] sm:$0xff]
        %v1896 = vld [vmem:[%s5 + $0xf8] sm:$0xf]
        %v1897 = vld [vmem:[%s5 + $0xfc] sm:$0xff]
        %v1898 = vld [vmem:[%s5 + $0x104] sm:$0xf]
        %v1899 = vld [vmem:[%s5 + $0x108] sm:$0xff]
        %v1900 = vld [vmem:[%s5 + $0x110] sm:$0xf]
        %v1901 = vld [vmem:[%s5 + $0x114] sm:$0xff]
        %v1902 = vld [vmem:[%s5 + $0x11c] sm:$0xf]
        %v1903 = vld [vmem:[%s5 + $0x120] sm:$0xff]
        %v1904 = vld [vmem:[%s5 + $0x128] sm:$0xf]
        %v1905 = vld [vmem:[%s5 + $0x12c] sm:$0xff]
        %v1906 = vld [vmem:[%s5 + $0x134] sm:$0xf]
        %v1907 = vld [vmem:[%s5 + $0x138] sm:$0xff]
        %v1908 = vld [vmem:[%s5 + $0x140] sm:$0xf]
        %v1909 = vld [vmem:[%s5 + $0x144] sm:$0xff]
        %v1910 = vld [vmem:[%s5 + $0x14c] sm:$0xf]
        %v1911 = vld [vmem:[%s5 + $0x150] sm:$0xff]
        %v1912 = vld [vmem:[%s5 + $0x158] sm:$0xf]
        %v1913 = vld [vmem:[%s5 + $0x15c] sm:$0xff]
        %v1914 = vld [vmem:[%s5 + $0x164] sm:$0xf]
        %v1915 = vld [vmem:[%s5 + $0x168] sm:$0xff]
        %v1916 = vld [vmem:[%s5 + $0x170] sm:$0xf]
        %v1917 = vld [vmem:[%s5 + $0x174] sm:$0xff]
        %v1918 = vld [vmem:[%s5 + $0x17c] sm:$0xf]
        %v1919 = vld [vmem:[%s5 + $0x180] sm:$0xff]
        %v1920 = vld [vmem:[%s5 + $0x188] sm:$0xf]
        %v1921 = vld [vmem:[%s5 + $0x18c] sm:$0xff]
        %v1922 = vld [vmem:[%s5 + $0x194] sm:$0xf]
        %v1923 = vld [vmem:[%s5 + $0x198] sm:$0xff]
        %v1924 = vld [vmem:[%s5 + $0x1a0] sm:$0xf]
        %v1925 = vld [vmem:[%s5 + $0x1a4] sm:$0xff]
        %v1926 = vld [vmem:[%s5 + $0x1ac] sm:$0xf]
        %v1927 = vld [vmem:[%s5 + $0x1b0] sm:$0xff]
        %v1928 = vld [vmem:[%s5 + $0x1b8] sm:$0xf]
        %v1929 = vld [vmem:[%s5 + $0x1bc] sm:$0xff]
        %v1930 = vld [vmem:[%s5 + $0x1c4] sm:$0xf]
        %v1931 = vld [vmem:[%s5 + $0x1c8] sm:$0xff]
        %v1932 = vld [vmem:[%s5 + $0x1d0] sm:$0xf]
        %v1933 = vld [vmem:[%s5 + $0x1d4] sm:$0xff]
        %v1934 = vld [vmem:[%s5 + $0x1dc] sm:$0xf]
        %v1935 = vld [vmem:[%s5 + $0x1e0] sm:$0xff]
        %v1936 = vld [vmem:[%s5 + $0x1e8] sm:$0xf]
        %v1937 = vld [vmem:[%s5 + $0x1ec] sm:$0xff]
        %v1938 = vld [vmem:[%s5 + $0x1f4] sm:$0xf]
        %v1939 = vld [vmem:[%s5 + $0x1f8] sm:$0xff]
        %v1940 = vld [vmem:[%s5 + $0x200] sm:$0xf]
        %v1941 = vld [vmem:[%s5 + $0x204] sm:$0xff]
        %v1942 = vld [vmem:[%s5 + $0x20c] sm:$0xf]
        %v1943 = vld [vmem:[%s5 + $0x210] sm:$0xff]
        %v1944 = vld [vmem:[%s5 + $0x218] sm:$0xf]
        %v1945 = vld [vmem:[%s5 + $0x21c] sm:$0xff]
        %v1946 = vld [vmem:[%s5 + $0x224] sm:$0xf]
        %v1947 = vld [vmem:[%s5 + $0x228] sm:$0xff]
        %v1948 = vld [vmem:[%s5 + $0x230] sm:$0xf]
        %v1949 = vld [vmem:[%s5 + $0x234] sm:$0xff]
        %v1950 = vld [vmem:[%s5 + $0x23c] sm:$0xf]
        %v1951 = vld [vmem:[%s5 + $0x240] sm:$0xff]
        %v1952 = vld [vmem:[%s5 + $0x248] sm:$0xf]
        %v1953 = vld [vmem:[%s5 + $0x24c] sm:$0xff]
        %v1954 = vld [vmem:[%s5 + $0x254] sm:$0xf]
        %v1955 = vld [vmem:[%s5 + $0x258] sm:$0xff]
        %v1956 = vld [vmem:[%s5 + $0x260] sm:$0xf]
        %v1957 = vld [vmem:[%s5 + $0x264] sm:$0xff]
        %v1958 = vld [vmem:[%s5 + $0x26c] sm:$0xf]
        %v1959 = vld [vmem:[%s5 + $0x270] sm:$0xff]
        %v1960 = vld [vmem:[%s5 + $0x278] sm:$0xf]
        %v1961 = vld [vmem:[%s5 + $0x27c] sm:$0xff]
        %v1962 = vld [vmem:[%s5 + $0x284] sm:$0xf]
        %v1963 = vld [vmem:[%s5 + $0x288] sm:$0xff]
        %v1964 = vld [vmem:[%s5 + $0x290] sm:$0xf]
        %v1965 = vld [vmem:[%s5 + $0x294] sm:$0xff]
        %v1966 = vld [vmem:[%s5 + $0x29c] sm:$0xf]
        %v1967 = vld [vmem:[%s5 + $0x2a0] sm:$0xff]
        %v1968 = vld [vmem:[%s5 + $0x2a8] sm:$0xf]
        %v1969 = vld [vmem:[%s5 + $0x2ac] sm:$0xff]
        %v1970 = vld [vmem:[%s5 + $0x2b4] sm:$0xf]
        %v1971 = vld [vmem:[%s5 + $0x2b8] sm:$0xff]
        %v1972 = vld [vmem:[%s5 + $0x2c0] sm:$0xf]
        %v1973 = vld [vmem:[%s5 + $0x2c4] sm:$0xff]
        %v1974 = vld [vmem:[%s5 + $0x2cc] sm:$0xf]
        %v1975 = vld [vmem:[%s5 + $0x2d0] sm:$0xff]
        %v1976 = vld [vmem:[%s5 + $0x2d8] sm:$0xf]
        %v1977 = vld [vmem:[%s5 + $0x2dc] sm:$0xff]
        %v1978 = vld [vmem:[%s5 + $0x2e4] sm:$0xf]
        %v1979 = vld [vmem:[%s5 + $0x2e8] sm:$0xff]
        %v1980 = vld [vmem:[%s5 + $0x2f0] sm:$0xf]
        %v1981 = vld [vmem:[%s5 + $0x2f4] sm:$0xff]
        %v1982 = vld [vmem:[%s5 + $0x2fc] sm:$0xf]
        %v1983 = vld [vmem:[%s6] sm:$0x7]
        %v1985 = vlaneseq
        %v1986 = vshrl.u32 %v1985, 7
        %v1987 = vsub.s32 0, %v1986
        %v1988 = vrot.slane %v1983, %v1987
        %v1989 = vlaneseq
        %v1990 = vshrl.u32 %v1989, 7
        %v1991 = vsub.s32 1, %v1990
        %v1992 = vrot.slane %v1983, %v1991
        %v1993 = vlaneseq
        %v1994 = vshrl.u32 %v1993, 7
        %v1995 = vsub.s32 2, %v1994
        %v1996 = vrot.slane %v1983, %v1995
        %v2128 = vunpack.c.l.b16 %v1855
        %v2129 = vunpack.c.h.b16 %v1855
        %v2130 = vunpack.c.l.b16 %v1856
        %v2131 = vunpack.c.l.b16 %v1857
        %v2132 = vunpack.c.h.b16 %v1857
        %v2133 = vunpack.c.l.b16 %v1858
        %v2134 = vunpack.c.l.b16 %v1859
        %v2135 = vunpack.c.h.b16 %v1859
        %v2136 = vunpack.c.l.b16 %v1860
        %v2137 = vunpack.c.l.b16 %v1861
        %v2138 = vunpack.c.h.b16 %v1861
        %v2139 = vunpack.c.l.b16 %v1862
        %v2140 = vunpack.c.l.b16 %v1863
        %v2141 = vunpack.c.h.b16 %v1863
        %v2142 = vunpack.c.l.b16 %v1864
        %v2143 = vunpack.c.l.b16 %v1865
        %v2144 = vunpack.c.h.b16 %v1865
        %v2145 = vunpack.c.l.b16 %v1866
        %v2146 = vunpack.c.l.b16 %v1867
        %v2147 = vunpack.c.h.b16 %v1867
        %v2148 = vunpack.c.l.b16 %v1868
        %v2149 = vunpack.c.l.b16 %v1869
        %v2150 = vunpack.c.h.b16 %v1869
        %v2151 = vunpack.c.l.b16 %v1870
        %v2152 = vunpack.c.l.b16 %v1871
        %v2153 = vunpack.c.h.b16 %v1871
        %v2154 = vunpack.c.l.b16 %v1872
        %v2155 = vunpack.c.l.b16 %v1873
        %v2156 = vunpack.c.h.b16 %v1873
        %v2157 = vunpack.c.l.b16 %v1874
        %v2158 = vunpack.c.l.b16 %v1875
        %v2159 = vunpack.c.h.b16 %v1875
        %v2160 = vunpack.c.l.b16 %v1876
        %v2161 = vunpack.c.l.b16 %v1877
        %v2162 = vunpack.c.h.b16 %v1877
        %v2163 = vunpack.c.l.b16 %v1878
        %v2164 = vunpack.c.l.b16 %v1879
        %v2165 = vunpack.c.h.b16 %v1879
        %v2166 = vunpack.c.l.b16 %v1880
        %v2167 = vunpack.c.l.b16 %v1881
        %v2168 = vunpack.c.h.b16 %v1881
        %v2169 = vunpack.c.l.b16 %v1882
        %v2170 = vunpack.c.l.b16 %v1883
        %v2171 = vunpack.c.h.b16 %v1883
        %v2172 = vunpack.c.l.b16 %v1884
        %v2173 = vunpack.c.l.b16 %v1885
        %v2174 = vunpack.c.h.b16 %v1885
        %v2175 = vunpack.c.l.b16 %v1886
        %v2176 = vunpack.c.l.b16 %v1887
        %v2177 = vunpack.c.h.b16 %v1887
        %v2178 = vunpack.c.l.b16 %v1888
        %v2179 = vunpack.c.l.b16 %v1889
        %v2180 = vunpack.c.h.b16 %v1889
        %v2181 = vunpack.c.l.b16 %v1890
        %v2182 = vunpack.c.l.b16 %v1891
        %v2183 = vunpack.c.h.b16 %v1891
        %v2184 = vunpack.c.l.b16 %v1892
        %v2185 = vunpack.c.l.b16 %v1893
        %v2186 = vunpack.c.h.b16 %v1893
        %v2187 = vunpack.c.l.b16 %v1894
        %v2188 = vunpack.c.l.b16 %v1895
        %v2189 = vunpack.c.h.b16 %v1895
        %v2190 = vunpack.c.l.b16 %v1896
        %v2191 = vunpack.c.l.b16 %v1897
        %v2192 = vunpack.c.h.b16 %v1897
        %v2193 = vunpack.c.l.b16 %v1898
        %v2194 = vunpack.c.l.b16 %v1899
        %v2195 = vunpack.c.h.b16 %v1899
        %v2196 = vunpack.c.l.b16 %v1900
        %v2197 = vunpack.c.l.b16 %v1901
        %v2198 = vunpack.c.h.b16 %v1901
        %v2199 = vunpack.c.l.b16 %v1902
        %v2200 = vunpack.c.l.b16 %v1903
        %v2201 = vunpack.c.h.b16 %v1903
        %v2202 = vunpack.c.l.b16 %v1904
        %v2203 = vunpack.c.l.b16 %v1905
        %v2204 = vunpack.c.h.b16 %v1905
        %v2205 = vunpack.c.l.b16 %v1906
        %v2206 = vunpack.c.l.b16 %v1907
        %v2207 = vunpack.c.h.b16 %v1907
        %v2208 = vunpack.c.l.b16 %v1908
        %v2209 = vunpack.c.l.b16 %v1909
        %v2210 = vunpack.c.h.b16 %v1909
        %v2211 = vunpack.c.l.b16 %v1910
        %v2212 = vunpack.c.l.b16 %v1911
        %v2213 = vunpack.c.h.b16 %v1911
        %v2214 = vunpack.c.l.b16 %v1912
        %v2215 = vunpack.c.l.b16 %v1913
        %v2216 = vunpack.c.h.b16 %v1913
        %v2217 = vunpack.c.l.b16 %v1914
        %v2218 = vunpack.c.l.b16 %v1915
        %v2219 = vunpack.c.h.b16 %v1915
        %v2220 = vunpack.c.l.b16 %v1916
        %v2221 = vunpack.c.l.b16 %v1917
        %v2222 = vunpack.c.h.b16 %v1917
        %v2223 = vunpack.c.l.b16 %v1918
        %v2224 = vunpack.c.l.b16 %v1919
        %v2225 = vunpack.c.h.b16 %v1919
        %v2226 = vunpack.c.l.b16 %v1920
        %v2227 = vunpack.c.l.b16 %v1921
        %v2228 = vunpack.c.h.b16 %v1921
        %v2229 = vunpack.c.l.b16 %v1922
        %v2230 = vunpack.c.l.b16 %v1923
        %v2231 = vunpack.c.h.b16 %v1923
        %v2232 = vunpack.c.l.b16 %v1924
        %v2233 = vunpack.c.l.b16 %v1925
        %v2234 = vunpack.c.h.b16 %v1925
        %v2235 = vunpack.c.l.b16 %v1926
        %v2236 = vunpack.c.l.b16 %v1927
        %v2237 = vunpack.c.h.b16 %v1927
        %v2238 = vunpack.c.l.b16 %v1928
        %v2239 = vunpack.c.l.b16 %v1929
        %v2240 = vunpack.c.h.b16 %v1929
        %v2241 = vunpack.c.l.b16 %v1930
        %v2242 = vunpack.c.l.b16 %v1931
        %v2243 = vunpack.c.h.b16 %v1931
        %v2244 = vunpack.c.l.b16 %v1932
        %v2245 = vunpack.c.l.b16 %v1933
        %v2246 = vunpack.c.h.b16 %v1933
        %v2247 = vunpack.c.l.b16 %v1934
        %v2248 = vunpack.c.l.b16 %v1935
        %v2249 = vunpack.c.h.b16 %v1935
        %v2250 = vunpack.c.l.b16 %v1936
        %v2251 = vunpack.c.l.b16 %v1937
        %v2252 = vunpack.c.h.b16 %v1937
        %v2253 = vunpack.c.l.b16 %v1938
        %v2254 = vunpack.c.l.b16 %v1939
        %v2255 = vunpack.c.h.b16 %v1939
        %v2256 = vunpack.c.l.b16 %v1940
        %v2257 = vunpack.c.l.b16 %v1941
        %v2258 = vunpack.c.h.b16 %v1941
        %v2259 = vunpack.c.l.b16 %v1942
        %v2260 = vunpack.c.l.b16 %v1943
        %v2261 = vunpack.c.h.b16 %v1943
        %v2262 = vunpack.c.l.b16 %v1944
        %v2263 = vunpack.c.l.b16 %v1945
        %v2264 = vunpack.c.h.b16 %v1945
        %v2265 = vunpack.c.l.b16 %v1946
        %v2266 = vunpack.c.l.b16 %v1947
        %v2267 = vunpack.c.h.b16 %v1947
        %v2268 = vunpack.c.l.b16 %v1948
        %v2269 = vunpack.c.l.b16 %v1949
        %v2270 = vunpack.c.h.b16 %v1949
        %v2271 = vunpack.c.l.b16 %v1950
        %v2272 = vunpack.c.l.b16 %v1951
        %v2273 = vunpack.c.h.b16 %v1951
        %v2274 = vunpack.c.l.b16 %v1952
        %v2275 = vunpack.c.l.b16 %v1953
        %v2276 = vunpack.c.h.b16 %v1953
        %v2277 = vunpack.c.l.b16 %v1954
        %v2278 = vunpack.c.l.b16 %v1955
        %v2279 = vunpack.c.h.b16 %v1955
        %v2280 = vunpack.c.l.b16 %v1956
        %v2281 = vunpack.c.l.b16 %v1957
        %v2282 = vunpack.c.h.b16 %v1957
        %v2283 = vunpack.c.l.b16 %v1958
        %v2284 = vunpack.c.l.b16 %v1959
        %v2285 = vunpack.c.h.b16 %v1959
        %v2286 = vunpack.c.l.b16 %v1960
        %v2287 = vunpack.c.l.b16 %v1961
        %v2288 = vunpack.c.h.b16 %v1961
        %v2289 = vunpack.c.l.b16 %v1962
        %v2290 = vunpack.c.l.b16 %v1963
        %v2291 = vunpack.c.h.b16 %v1963
        %v2292 = vunpack.c.l.b16 %v1964
        %v2293 = vunpack.c.l.b16 %v1965
        %v2294 = vunpack.c.h.b16 %v1965
        %v2295 = vunpack.c.l.b16 %v1966
        %v2296 = vunpack.c.l.b16 %v1967
        %v2297 = vunpack.c.h.b16 %v1967
        %v2298 = vunpack.c.l.b16 %v1968
        %v2299 = vunpack.c.l.b16 %v1969
        %v2300 = vunpack.c.h.b16 %v1969
        %v2301 = vunpack.c.l.b16 %v1970
        %v2302 = vunpack.c.l.b16 %v1971
        %v2303 = vunpack.c.h.b16 %v1971
        %v2304 = vunpack.c.l.b16 %v1972
        %v2305 = vunpack.c.l.b16 %v1973
        %v2306 = vunpack.c.h.b16 %v1973
        %v2307 = vunpack.c.l.b16 %v1974
        %v2308 = vunpack.c.l.b16 %v1975
        %v2309 = vunpack.c.h.b16 %v1975
        %v2310 = vunpack.c.l.b16 %v1976
        %v2311 = vunpack.c.l.b16 %v1977
        %v2312 = vunpack.c.h.b16 %v1977
        %v2313 = vunpack.c.l.b16 %v1978
        %v2314 = vunpack.c.l.b16 %v1979
        %v2315 = vunpack.c.h.b16 %v1979
        %v2316 = vunpack.c.l.b16 %v1980
        %v2317 = vunpack.c.l.b16 %v1981
        %v2318 = vunpack.c.h.b16 %v1981
        %v2319 = vunpack.c.l.b16 %v1982
        %v2320 = vpack.c.b16 %v2131, %v2128
        %v2321 = vpack.c.b16 %v2132, %v2129
        %v2322 = vpack.c.b16 %v2133, %v2130
        %v2323 = vpack.c.b16 %v2137, %v2134
        %v2324 = vpack.c.b16 %v2138, %v2135
        %v2325 = vpack.c.b16 %v2139, %v2136
        %v2326 = vpack.c.b16 %v2143, %v2140
        %v2327 = vpack.c.b16 %v2144, %v2141
        %v2328 = vpack.c.b16 %v2145, %v2142
        %v2329 = vpack.c.b16 %v2149, %v2146
        %v2330 = vpack.c.b16 %v2150, %v2147
        %v2331 = vpack.c.b16 %v2151, %v2148
        %v2332 = vpack.c.b16 %v2155, %v2152
        %v2333 = vpack.c.b16 %v2156, %v2153
        %v2334 = vpack.c.b16 %v2157, %v2154
        %v2335 = vpack.c.b16 %v2161, %v2158
        %v2336 = vpack.c.b16 %v2162, %v2159
        %v2337 = vpack.c.b16 %v2163, %v2160
        %v2338 = vpack.c.b16 %v2167, %v2164
        %v2339 = vpack.c.b16 %v2168, %v2165
        %v2340 = vpack.c.b16 %v2169, %v2166
        %v2341 = vpack.c.b16 %v2173, %v2170
        %v2342 = vpack.c.b16 %v2174, %v2171
        %v2343 = vpack.c.b16 %v2175, %v2172
        %v2344 = vpack.c.b16 %v2179, %v2176
        %v2345 = vpack.c.b16 %v2180, %v2177
        %v2346 = vpack.c.b16 %v2181, %v2178
        %v2347 = vpack.c.b16 %v2185, %v2182
        %v2348 = vpack.c.b16 %v2186, %v2183
        %v2349 = vpack.c.b16 %v2187, %v2184
        %v2350 = vpack.c.b16 %v2191, %v2188
        %v2351 = vpack.c.b16 %v2192, %v2189
        %v2352 = vpack.c.b16 %v2193, %v2190
        %v2353 = vpack.c.b16 %v2197, %v2194
        %v2354 = vpack.c.b16 %v2198, %v2195
        %v2355 = vpack.c.b16 %v2199, %v2196
        %v2356 = vpack.c.b16 %v2203, %v2200
        %v2357 = vpack.c.b16 %v2204, %v2201
        %v2358 = vpack.c.b16 %v2205, %v2202
        %v2359 = vpack.c.b16 %v2209, %v2206
        %v2360 = vpack.c.b16 %v2210, %v2207
        %v2361 = vpack.c.b16 %v2211, %v2208
        %v2362 = vpack.c.b16 %v2215, %v2212
        %v2363 = vpack.c.b16 %v2216, %v2213
        %v2364 = vpack.c.b16 %v2217, %v2214
        %v2365 = vpack.c.b16 %v2221, %v2218
        %v2366 = vpack.c.b16 %v2222, %v2219
        %v2367 = vpack.c.b16 %v2223, %v2220
        %v2368 = vpack.c.b16 %v2227, %v2224
        %v2369 = vpack.c.b16 %v2228, %v2225
        %v2370 = vpack.c.b16 %v2229, %v2226
        %v2371 = vpack.c.b16 %v2233, %v2230
        %v2372 = vpack.c.b16 %v2234, %v2231
        %v2373 = vpack.c.b16 %v2235, %v2232
        %v2374 = vpack.c.b16 %v2239, %v2236
        %v2375 = vpack.c.b16 %v2240, %v2237
        %v2376 = vpack.c.b16 %v2241, %v2238
        %v2377 = vpack.c.b16 %v2245, %v2242
        %v2378 = vpack.c.b16 %v2246, %v2243
        %v2379 = vpack.c.b16 %v2247, %v2244
        %v2380 = vpack.c.b16 %v2251, %v2248
        %v2381 = vpack.c.b16 %v2252, %v2249
        %v2382 = vpack.c.b16 %v2253, %v2250
        %v2383 = vpack.c.b16 %v2257, %v2254
        %v2384 = vpack.c.b16 %v2258, %v2255
        %v2385 = vpack.c.b16 %v2259, %v2256
        %v2386 = vpack.c.b16 %v2263, %v2260
        %v2387 = vpack.c.b16 %v2264, %v2261
        %v2388 = vpack.c.b16 %v2265, %v2262
        %v2389 = vpack.c.b16 %v2269, %v2266
        %v2390 = vpack.c.b16 %v2270, %v2267
        %v2391 = vpack.c.b16 %v2271, %v2268
        %v2392 = vpack.c.b16 %v2275, %v2272
        %v2393 = vpack.c.b16 %v2276, %v2273
        %v2394 = vpack.c.b16 %v2277, %v2274
        %v2395 = vpack.c.b16 %v2281, %v2278
        %v2396 = vpack.c.b16 %v2282, %v2279
        %v2397 = vpack.c.b16 %v2283, %v2280
        %v2398 = vpack.c.b16 %v2287, %v2284
        %v2399 = vpack.c.b16 %v2288, %v2285
        %v2400 = vpack.c.b16 %v2289, %v2286
        %v2401 = vpack.c.b16 %v2293, %v2290
        %v2402 = vpack.c.b16 %v2294, %v2291
        %v2403 = vpack.c.b16 %v2295, %v2292
        %v2404 = vpack.c.b16 %v2299, %v2296
        %v2405 = vpack.c.b16 %v2300, %v2297
        %v2406 = vpack.c.b16 %v2301, %v2298
        %v2407 = vpack.c.b16 %v2305, %v2302
        %v2408 = vpack.c.b16 %v2306, %v2303
        %v2409 = vpack.c.b16 %v2307, %v2304
        %v2410 = vpack.c.b16 %v2311, %v2308
        %v2411 = vpack.c.b16 %v2312, %v2309
        %v2412 = vpack.c.b16 %v2313, %v2310
        %v2413 = vpack.c.b16 %v2317, %v2314
        %v2414 = vpack.c.b16 %v2318, %v2315
        %v2415 = vpack.c.b16 %v2319, %v2316
        %2512 = vmatprep.subr.bf16.mxu0 %v2342
        %2513 = vmatpush1.bf16.msra.mxu0 %v2341
        %2514 = vmatprep.subr.bf16.mxu0 %v2339
        %2515 = vmatpush1.bf16.msra.mxu0 %v2338
        %2516 = vmatprep.subr.bf16.mxu0 %v2336
        %2517 = vmatpush1.bf16.msra.mxu0 %v2335
        %2518 = vmatprep.subr.bf16.mxu0 %v2333
        %2519 = vmatpush1.bf16.msra.mxu0 %v2332
        %2520 = vmatprep.subr.bf16.mxu0 %v2330
        %2521 = vmatpush1.bf16.msra.mxu0 %v2329
        %2522 = vmatprep.subr.bf16.mxu0 %v2327
        %2523 = vmatpush1.bf16.msra.mxu0 %v2326
        %2524 = vmatprep.subr.bf16.mxu0 %v2324
        %2525 = vmatpush1.bf16.msra.mxu0 %v2323
        %2526 = vmatprep.subr.bf16.mxu0 %v2321
        %2527 = vmatpush1.bf16.msra.mxu0 %v2320
        %2528 = vmatprep.subr.bf16.mxu0 %v2366
        %2529 = vmatpush2.bf16.msra.mxu0 %v2365
        %2530 = vmatprep.subr.bf16.mxu0 %v2363
        %2531 = vmatpush2.bf16.msra.mxu0 %v2362
        %2532 = vmatprep.subr.bf16.mxu0 %v2360
        %2533 = vmatpush2.bf16.msra.mxu0 %v2359
        %2534 = vmatprep.subr.bf16.mxu0 %v2357
        %2535 = vmatpush2.bf16.msra.mxu0 %v2356
        %2536 = vmatprep.subr.bf16.mxu0 %v2354
        %2537 = vmatpush2.bf16.msra.mxu0 %v2353
        %2538 = vmatprep.subr.bf16.mxu0 %v2351
        %2539 = vmatpush2.bf16.msra.mxu0 %v2350
        %2540 = vmatprep.subr.bf16.mxu0 %v2348
        %2541 = vmatpush2.bf16.msra.mxu0 %v2347
        %2542 = vmatprep.subr.bf16.mxu0 %v2345
        %2543 = vmatpush2.bf16.msra.mxu0 %v2344
        %2544 = vmatprep.mubr.bf16.mxu0 %v1792
        %2545 = vmatmul.mubr.bf16.gmra.mxu0 %v1791
        %v2546 = vpop.f32.mrf.mxu0
        %v2547 = vadd.f32 %v1988, %v2546
        %v2548 = vpop.f32.mrf.mxu0
        %v2549 = vadd.f32 %v1992, %v2548
        %v2550 = vpop.f32.mrf.mxu0
        %v2551 = vadd.f32 %v1988, %v2550
        %v2552 = vpop.f32.mrf.mxu0
        %v2553 = vadd.f32 %v1992, %v2552
        %2554 = vmatprep.mubr.bf16.mxu0 %v1796
        %2555 = vmatmul.mubr.bf16.gmra.mxu0 %v1795
        %v2556 = vpop.f32.mrf.mxu0
        %v2557 = vadd.f32 %v1988, %v2556
        %v2558 = vpop.f32.mrf.mxu0
        %v2559 = vadd.f32 %v1992, %v2558
        %v2560 = vpop.f32.mrf.mxu0
        %v2561 = vadd.f32 %v1988, %v2560
        %v2562 = vpop.f32.mrf.mxu0
        %v2563 = vadd.f32 %v1992, %v2562
        %2564 = vmatprep.mubr.bf16.mxu0 %v1800
        %2565 = vmatmul.mubr.bf16.gmra.mxu0 %v1799
        %v2566 = vpop.f32.mrf.mxu0
        %v2567 = vadd.f32 %v1988, %v2566
        %v2568 = vpop.f32.mrf.mxu0
        %v2569 = vadd.f32 %v1992, %v2568
        %v2570 = vpop.f32.mrf.mxu0
        %v2571 = vadd.f32 %v1988, %v2570
        %v2572 = vpop.f32.mrf.mxu0
        %v2573 = vadd.f32 %v1992, %v2572
        %2574 = vmatprep.mubr.bf16.mxu0 %v1804
        %2575 = vmatmul.mubr.bf16.gmra.mxu0 %v1803
        %v2576 = vpop.f32.mrf.mxu0
        %v2577 = vadd.f32 %v1988, %v2576
        %v2578 = vpop.f32.mrf.mxu0
        %v2579 = vadd.f32 %v1992, %v2578
        %v2580 = vpop.f32.mrf.mxu0
        %v2581 = vadd.f32 %v1988, %v2580
        %v2582 = vpop.f32.mrf.mxu0
        %v2583 = vadd.f32 %v1992, %v2582
        %2584 = vmatprep.mubr.bf16.mxu0 %v1808
        %2585 = vmatmul.mubr.bf16.gmra.mxu0 %v1807
        %v2586 = vpop.f32.mrf.mxu0
        %v2587 = vadd.f32 %v1988, %v2586
        %v2588 = vpop.f32.mrf.mxu0
        %v2589 = vadd.f32 %v1992, %v2588
        %v2590 = vpop.f32.mrf.mxu0
        %v2591 = vadd.f32 %v1988, %v2590
        %v2592 = vpop.f32.mrf.mxu0
        %v2593 = vadd.f32 %v1992, %v2592
        %2594 = vmatprep.mubr.bf16.mxu0 %v1812
        %2595 = vmatmul.mubr.bf16.gmra.mxu0 %v1811
        %v2596 = vpop.f32.mrf.mxu0
        %v2597 = vadd.f32 %v1988, %v2596
        %v2598 = vpop.f32.mrf.mxu0
        %v2599 = vadd.f32 %v1992, %v2598
        %v2600 = vpop.f32.mrf.mxu0
        %v2601 = vadd.f32 %v1988, %v2600
        %v2602 = vpop.f32.mrf.mxu0
        %v2603 = vadd.f32 %v1992, %v2602
        %2604 = vmatprep.mubr.bf16.mxu0 %v1816
        %2605 = vmatmul.mubr.bf16.gmra.mxu0 %v1815
        %v2606 = vpop.f32.mrf.mxu0
        %v2607 = vadd.f32 %v1988, %v2606
        %v2608 = vpop.f32.mrf.mxu0
        %v2609 = vadd.f32 %v1992, %v2608
        %v2610 = vpop.f32.mrf.mxu0
        %v2611 = vadd.f32 %v1988, %v2610
        %v2612 = vpop.f32.mrf.mxu0
        %v2613 = vadd.f32 %v1992, %v2612
        %2614 = vmatprep.mubr.bf16.mxu0 %v1820
        %2615 = vmatmul.mubr.bf16.gmra.mxu0 %v1819
        %v2616 = vpop.f32.mrf.mxu0
        %v2617 = vadd.f32 %v1988, %v2616
        %v2618 = vpop.f32.mrf.mxu0
        %v2619 = vadd.f32 %v1992, %v2618
        %v2620 = vpop.f32.mrf.mxu0
        %v2621 = vadd.f32 %v1988, %v2620
        %v2622 = vpop.f32.mrf.mxu0
        %v2623 = vadd.f32 %v1992, %v2622
        %2624 = vmatprep.mubr.bf16.mxu0 %v1824
        %2625 = vmatmul.mubr.bf16.gmra.mxu0 %v1823
        %v2626 = vpop.f32.mrf.mxu0
        %v2627 = vadd.f32 %v1988, %v2626
        %v2628 = vpop.f32.mrf.mxu0
        %v2629 = vadd.f32 %v1992, %v2628
        %v2630 = vpop.f32.mrf.mxu0
        %v2631 = vadd.f32 %v1988, %v2630
        %v2632 = vpop.f32.mrf.mxu0
        %v2633 = vadd.f32 %v1992, %v2632
        %2634 = vmatprep.mubr.bf16.mxu0 %v1828
        %2635 = vmatmul.mubr.bf16.gmra.mxu0 %v1827
        %v2636 = vpop.f32.mrf.mxu0
        %v2637 = vadd.f32 %v1988, %v2636
        %v2638 = vpop.f32.mrf.mxu0
        %v2639 = vadd.f32 %v1992, %v2638
        %v2640 = vpop.f32.mrf.mxu0
        %v2641 = vadd.f32 %v1988, %v2640
        %v2642 = vpop.f32.mrf.mxu0
        %v2643 = vadd.f32 %v1992, %v2642
        %2644 = vmatprep.mubr.bf16.mxu0 %v1832
        %2645 = vmatmul.mubr.bf16.gmra.mxu0 %v1831
        %v2646 = vpop.f32.mrf.mxu0
        %v2647 = vadd.f32 %v1988, %v2646
        %v2648 = vpop.f32.mrf.mxu0
        %v2649 = vadd.f32 %v1992, %v2648
        %v2650 = vpop.f32.mrf.mxu0
        %v2651 = vadd.f32 %v1988, %v2650
        %v2652 = vpop.f32.mrf.mxu0
        %v2653 = vadd.f32 %v1992, %v2652
        %2654 = vmatprep.mubr.bf16.mxu0 %v1836
        %2655 = vmatmul.mubr.bf16.gmra.mxu0 %v1835
        %v2656 = vpop.f32.mrf.mxu0
        %v2657 = vadd.f32 %v1988, %v2656
        %v2658 = vpop.f32.mrf.mxu0
        %v2659 = vadd.f32 %v1992, %v2658
        %v2660 = vpop.f32.mrf.mxu0
        %v2661 = vadd.f32 %v1988, %v2660
        %v2662 = vpop.f32.mrf.mxu0
        %v2663 = vadd.f32 %v1992, %v2662
        %2664 = vmatprep.mubr.bf16.mxu0 %v1840
        %2665 = vmatmul.mubr.bf16.gmra.mxu0 %v1839
        %v2666 = vpop.f32.mrf.mxu0
        %v2667 = vadd.f32 %v1988, %v2666
        %v2668 = vpop.f32.mrf.mxu0
        %v2669 = vadd.f32 %v1992, %v2668
        %v2670 = vpop.f32.mrf.mxu0
        %v2671 = vadd.f32 %v1988, %v2670
        %v2672 = vpop.f32.mrf.mxu0
        %v2673 = vadd.f32 %v1992, %v2672
        %2674 = vmatprep.mubr.bf16.mxu0 %v1844
        %2675 = vmatmul.mubr.bf16.gmra.mxu0 %v1843
        %v2676 = vpop.f32.mrf.mxu0
        %v2677 = vadd.f32 %v1988, %v2676
        %v2678 = vpop.f32.mrf.mxu0
        %v2679 = vadd.f32 %v1992, %v2678
        %v2680 = vpop.f32.mrf.mxu0
        %v2681 = vadd.f32 %v1988, %v2680
        %v2682 = vpop.f32.mrf.mxu0
        %v2683 = vadd.f32 %v1992, %v2682
        %2684 = vmatprep.mubr.bf16.mxu0 %v1848
        %2685 = vmatmul.mubr.bf16.gmra.mxu0 %v1847
        %v2686 = vpop.f32.mrf.mxu0
        %v2687 = vadd.f32 %v1988, %v2686
        %v2688 = vpop.f32.mrf.mxu0
        %v2689 = vadd.f32 %v1992, %v2688
        %v2690 = vpop.f32.mrf.mxu0
        %v2691 = vadd.f32 %v1988, %v2690
        %v2692 = vpop.f32.mrf.mxu0
        %v2693 = vadd.f32 %v1992, %v2692
        %2694 = vmatprep.mubr.bf16.mxu0 %v1852
        %2695 = vmatmul.mubr.bf16.gmra.mxu0 %v1851
        %v2696 = vpop.f32.mrf.mxu0
        %v2697 = vadd.f32 %v1988, %v2696
        %v2698 = vpop.f32.mrf.mxu0
        %v2699 = vadd.f32 %v1992, %v2698
        %v2700 = vpop.f32.mrf.mxu0
        %v2701 = vadd.f32 %v1988, %v2700
        %v2702 = vpop.f32.mrf.mxu0
        %v2703 = vadd.f32 %v1992, %v2702
        %2704 = vdwg.mxu0
        %2705 = vmatprep.subr.bf16.mxu0 %v2390
        %2706 = vmatpush1.bf16.msra.mxu0 %v2389
        %2707 = vmatprep.subr.bf16.mxu0 %v2387
        %2708 = vmatpush1.bf16.msra.mxu0 %v2386
        %2709 = vmatprep.subr.bf16.mxu0 %v2384
        %2710 = vmatpush1.bf16.msra.mxu0 %v2383
        %2711 = vmatprep.subr.bf16.mxu0 %v2381
        %2712 = vmatpush1.bf16.msra.mxu0 %v2380
        %2713 = vmatprep.subr.bf16.mxu0 %v2378
        %2714 = vmatpush1.bf16.msra.mxu0 %v2377
        %2715 = vmatprep.subr.bf16.mxu0 %v2375
        %2716 = vmatpush1.bf16.msra.mxu0 %v2374
        %2717 = vmatprep.subr.bf16.mxu0 %v2372
        %2718 = vmatpush1.bf16.msra.mxu0 %v2371
        %2719 = vmatprep.subr.bf16.mxu0 %v2369
        %2720 = vmatpush1.bf16.msra.mxu0 %v2368
        %2721 = vmatprep.subr.bf16.mxu0 %v2414
        %2722 = vmatpush2.bf16.msra.mxu0 %v2413
        %2723 = vmatprep.subr.bf16.mxu0 %v2411
        %2724 = vmatpush2.bf16.msra.mxu0 %v2410
        %2725 = vmatprep.subr.bf16.mxu0 %v2408
        %2726 = vmatpush2.bf16.msra.mxu0 %v2407
        %2727 = vmatprep.subr.bf16.mxu0 %v2405
        %2728 = vmatpush2.bf16.msra.mxu0 %v2404
        %2729 = vmatprep.subr.bf16.mxu0 %v2402
        %2730 = vmatpush2.bf16.msra.mxu0 %v2401
        %2731 = vmatprep.subr.bf16.mxu0 %v2399
        %2732 = vmatpush2.bf16.msra.mxu0 %v2398
        %2733 = vmatprep.subr.bf16.mxu0 %v2396
        %2734 = vmatpush2.bf16.msra.mxu0 %v2395
        %2735 = vmatprep.subr.bf16.mxu0 %v2393
        %2736 = vmatpush2.bf16.msra.mxu0 %v2392
        %2737 = vmatprep.mubr.bf16.mxu0 %v1794
        %2738 = vmatmul.mubr.bf16.gmra.mxu0 %v1793
        %v2739 = vpop.f32.mrf.mxu0
        %v2740 = vadd.f32 %v2547, %v2739
        %v2741 = vpop.f32.mrf.mxu0
        %v2742 = vadd.f32 %v2549, %v2741
        %v2743 = vpop.f32.mrf.mxu0
        %v2744 = vadd.f32 %v2551, %v2743
        %v2745 = vpop.f32.mrf.mxu0
        %v2746 = vadd.f32 %v2553, %v2745
        %2747 = vmatprep.mubr.bf16.mxu0 %v1798
        %2748 = vmatmul.mubr.bf16.gmra.mxu0 %v1797
        %v2749 = vpop.f32.mrf.mxu0
        %v2750 = vadd.f32 %v2557, %v2749
        %v2751 = vpop.f32.mrf.mxu0
        %v2752 = vadd.f32 %v2559, %v2751
        %v2753 = vpop.f32.mrf.mxu0
        %v2754 = vadd.f32 %v2561, %v2753
        %v2755 = vpop.f32.mrf.mxu0
        %v2756 = vadd.f32 %v2563, %v2755
        %2757 = vmatprep.mubr.bf16.mxu0 %v1802
        %2758 = vmatmul.mubr.bf16.gmra.mxu0 %v1801
        %v2759 = vpop.f32.mrf.mxu0
        %v2760 = vadd.f32 %v2567, %v2759
        %v2761 = vpop.f32.mrf.mxu0
        %v2762 = vadd.f32 %v2569, %v2761
        %v2763 = vpop.f32.mrf.mxu0
        %v2764 = vadd.f32 %v2571, %v2763
        %v2765 = vpop.f32.mrf.mxu0
        %v2766 = vadd.f32 %v2573, %v2765
        %2767 = vmatprep.mubr.bf16.mxu0 %v1806
        %2768 = vmatmul.mubr.bf16.gmra.mxu0 %v1805
        %v2769 = vpop.f32.mrf.mxu0
        %v2770 = vadd.f32 %v2577, %v2769
        %v2771 = vpop.f32.mrf.mxu0
        %v2772 = vadd.f32 %v2579, %v2771
        %v2773 = vpop.f32.mrf.mxu0
        %v2774 = vadd.f32 %v2581, %v2773
        %v2775 = vpop.f32.mrf.mxu0
        %v2776 = vadd.f32 %v2583, %v2775
        %2777 = vmatprep.mubr.bf16.mxu0 %v1810
        %2778 = vmatmul.mubr.bf16.gmra.mxu0 %v1809
        %v2779 = vpop.f32.mrf.mxu0
        %v2780 = vadd.f32 %v2587, %v2779
        %v2781 = vpop.f32.mrf.mxu0
        %v2782 = vadd.f32 %v2589, %v2781
        %v2783 = vpop.f32.mrf.mxu0
        %v2784 = vadd.f32 %v2591, %v2783
        %v2785 = vpop.f32.mrf.mxu0
        %v2786 = vadd.f32 %v2593, %v2785
        %2787 = vmatprep.mubr.bf16.mxu0 %v1814
        %2788 = vmatmul.mubr.bf16.gmra.mxu0 %v1813
        %v2789 = vpop.f32.mrf.mxu0
        %v2790 = vadd.f32 %v2597, %v2789
        %v2791 = vpop.f32.mrf.mxu0
        %v2792 = vadd.f32 %v2599, %v2791
        %v2793 = vpop.f32.mrf.mxu0
        %v2794 = vadd.f32 %v2601, %v2793
        %v2795 = vpop.f32.mrf.mxu0
        %v2796 = vadd.f32 %v2603, %v2795
        %2797 = vmatprep.mubr.bf16.mxu0 %v1818
        %2798 = vmatmul.mubr.bf16.gmra.mxu0 %v1817
        %v2799 = vpop.f32.mrf.mxu0
        %v2800 = vadd.f32 %v2607, %v2799
        %v2801 = vpop.f32.mrf.mxu0
        %v2802 = vadd.f32 %v2609, %v2801
        %v2803 = vpop.f32.mrf.mxu0
        %v2804 = vadd.f32 %v2611, %v2803
        %v2805 = vpop.f32.mrf.mxu0
        %v2806 = vadd.f32 %v2613, %v2805
        %2807 = vmatprep.mubr.bf16.mxu0 %v1822
        %2808 = vmatmul.mubr.bf16.gmra.mxu0 %v1821
        %v2809 = vpop.f32.mrf.mxu0
        %v2810 = vadd.f32 %v2617, %v2809
        %v2811 = vpop.f32.mrf.mxu0
        %v2812 = vadd.f32 %v2619, %v2811
        %v2813 = vpop.f32.mrf.mxu0
        %v2814 = vadd.f32 %v2621, %v2813
        %v2815 = vpop.f32.mrf.mxu0
        %v2816 = vadd.f32 %v2623, %v2815
        %2817 = vmatprep.mubr.bf16.mxu0 %v1826
        %2818 = vmatmul.mubr.bf16.gmra.mxu0 %v1825
        %v2819 = vpop.f32.mrf.mxu0
        %v2820 = vadd.f32 %v2627, %v2819
        %v2821 = vpop.f32.mrf.mxu0
        %v2822 = vadd.f32 %v2629, %v2821
        %v2823 = vpop.f32.mrf.mxu0
        %v2824 = vadd.f32 %v2631, %v2823
        %v2825 = vpop.f32.mrf.mxu0
        %v2826 = vadd.f32 %v2633, %v2825
        %2827 = vmatprep.mubr.bf16.mxu0 %v1830
        %2828 = vmatmul.mubr.bf16.gmra.mxu0 %v1829
        %v2829 = vpop.f32.mrf.mxu0
        %v2830 = vadd.f32 %v2637, %v2829
        %v2831 = vpop.f32.mrf.mxu0
        %v2832 = vadd.f32 %v2639, %v2831
        %v2833 = vpop.f32.mrf.mxu0
        %v2834 = vadd.f32 %v2641, %v2833
        %v2835 = vpop.f32.mrf.mxu0
        %v2836 = vadd.f32 %v2643, %v2835
        %2837 = vmatprep.mubr.bf16.mxu0 %v1834
        %2838 = vmatmul.mubr.bf16.gmra.mxu0 %v1833
        %v2839 = vpop.f32.mrf.mxu0
        %v2840 = vadd.f32 %v2647, %v2839
        %v2841 = vpop.f32.mrf.mxu0
        %v2842 = vadd.f32 %v2649, %v2841
        %v2843 = vpop.f32.mrf.mxu0
        %v2844 = vadd.f32 %v2651, %v2843
        %v2845 = vpop.f32.mrf.mxu0
        %v2846 = vadd.f32 %v2653, %v2845
        %2847 = vmatprep.mubr.bf16.mxu0 %v1838
        %2848 = vmatmul.mubr.bf16.gmra.mxu0 %v1837
        %v2849 = vpop.f32.mrf.mxu0
        %v2850 = vadd.f32 %v2657, %v2849
        %v2851 = vpop.f32.mrf.mxu0
        %v2852 = vadd.f32 %v2659, %v2851
        %v2853 = vpop.f32.mrf.mxu0
        %v2854 = vadd.f32 %v2661, %v2853
        %v2855 = vpop.f32.mrf.mxu0
        %v2856 = vadd.f32 %v2663, %v2855
        %2857 = vmatprep.mubr.bf16.mxu0 %v1842
        %2858 = vmatmul.mubr.bf16.gmra.mxu0 %v1841
        %v2859 = vpop.f32.mrf.mxu0
        %v2860 = vadd.f32 %v2667, %v2859
        %v2861 = vpop.f32.mrf.mxu0
        %v2862 = vadd.f32 %v2669, %v2861
        %v2863 = vpop.f32.mrf.mxu0
        %v2864 = vadd.f32 %v2671, %v2863
        %v2865 = vpop.f32.mrf.mxu0
        %v2866 = vadd.f32 %v2673, %v2865
        %2867 = vmatprep.mubr.bf16.mxu0 %v1846
        %2868 = vmatmul.mubr.bf16.gmra.mxu0 %v1845
        %v2869 = vpop.f32.mrf.mxu0
        %v2870 = vadd.f32 %v2677, %v2869
        %v2871 = vpop.f32.mrf.mxu0
        %v2872 = vadd.f32 %v2679, %v2871
        %v2873 = vpop.f32.mrf.mxu0
        %v2874 = vadd.f32 %v2681, %v2873
        %v2875 = vpop.f32.mrf.mxu0
        %v2876 = vadd.f32 %v2683, %v2875
        %2877 = vmatprep.mubr.bf16.mxu0 %v1850
        %2878 = vmatmul.mubr.bf16.gmra.mxu0 %v1849
        %v2879 = vpop.f32.mrf.mxu0
        %v2880 = vadd.f32 %v2687, %v2879
        %v2881 = vpop.f32.mrf.mxu0
        %v2882 = vadd.f32 %v2689, %v2881
        %v2883 = vpop.f32.mrf.mxu0
        %v2884 = vadd.f32 %v2691, %v2883
        %v2885 = vpop.f32.mrf.mxu0
        %v2886 = vadd.f32 %v2693, %v2885
        %2887 = vmatprep.mubr.bf16.mxu0 %v1854
        %2888 = vmatmul.mubr.bf16.gmra.mxu0 %v1853
        %v2889 = vpop.f32.mrf.mxu0
        %v2890 = vadd.f32 %v2697, %v2889
        %v2891 = vpop.f32.mrf.mxu0
        %v2892 = vadd.f32 %v2699, %v2891
        %v2893 = vpop.f32.mrf.mxu0
        %v2894 = vadd.f32 %v2701, %v2893
        %v2895 = vpop.f32.mrf.mxu0
        %v2896 = vadd.f32 %v2703, %v2895
        %2897 = vdwg.mxu0
        %2898 = vmatprep.subr.bf16.mxu0 0
        %2899 = vmatpush1.bf16.msra.mxu0 %v2343
        %2900 = vmatprep.subr.bf16.mxu0 0
        %2901 = vmatpush1.bf16.msra.mxu0 %v2340
        %2902 = vmatprep.subr.bf16.mxu0 0
        %2903 = vmatpush1.bf16.msra.mxu0 %v2337
        %2904 = vmatprep.subr.bf16.mxu0 0
        %2905 = vmatpush1.bf16.msra.mxu0 %v2334
        %2906 = vmatprep.subr.bf16.mxu0 0
        %2907 = vmatpush1.bf16.msra.mxu0 %v2331
        %2908 = vmatprep.subr.bf16.mxu0 0
        %2909 = vmatpush1.bf16.msra.mxu0 %v2328
        %2910 = vmatprep.subr.bf16.mxu0 0
        %2911 = vmatpush1.bf16.msra.mxu0 %v2325
        %2912 = vmatprep.subr.bf16.mxu0 0
        %2913 = vmatpush1.bf16.msra.mxu0 %v2322
        %2914 = vmatprep.subr.bf16.mxu0 0
        %2915 = vmatpush2.bf16.msra.mxu0 %v2367
        %2916 = vmatprep.subr.bf16.mxu0 0
        %2917 = vmatpush2.bf16.msra.mxu0 %v2364
        %2918 = vmatprep.subr.bf16.mxu0 0
        %2919 = vmatpush2.bf16.msra.mxu0 %v2361
        %2920 = vmatprep.subr.bf16.mxu0 0
        %2921 = vmatpush2.bf16.msra.mxu0 %v2358
        %2922 = vmatprep.subr.bf16.mxu0 0
        %2923 = vmatpush2.bf16.msra.mxu0 %v2355
        %2924 = vmatprep.subr.bf16.mxu0 0
        %2925 = vmatpush2.bf16.msra.mxu0 %v2352
        %2926 = vmatprep.subr.bf16.mxu0 0
        %2927 = vmatpush2.bf16.msra.mxu0 %v2349
        %2928 = vmatprep.subr.bf16.mxu0 0
        %2929 = vmatpush2.bf16.msra.mxu0 %v2346
        %2930 = vmatprep.mubr.bf16.mxu0 %v1792
        %2931 = vmatmul.mubr.bf16.gmra.mxu0 %v1791
        %v2932 = vpop.f32.mrf.mxu0
        %v2933 = vadd.f32 %v1996, %v2932
        %v2934 = vpop.f32.mrf.mxu0
        %v2935 = vpop.f32.mrf.mxu0
        %v2936 = vadd.f32 %v1996, %v2935
        %v2937 = vpop.f32.mrf.mxu0
        %2938 = vmatprep.mubr.bf16.mxu0 %v1796
        %2939 = vmatmul.mubr.bf16.gmra.mxu0 %v1795
        %v2940 = vpop.f32.mrf.mxu0
        %v2941 = vadd.f32 %v1996, %v2940
        %v2942 = vpop.f32.mrf.mxu0
        %v2943 = vpop.f32.mrf.mxu0
        %v2944 = vadd.f32 %v1996, %v2943
        %v2945 = vpop.f32.mrf.mxu0
        %2946 = vmatprep.mubr.bf16.mxu0 %v1800
        %2947 = vmatmul.mubr.bf16.gmra.mxu0 %v1799
        %v2948 = vpop.f32.mrf.mxu0
        %v2949 = vadd.f32 %v1996, %v2948
        %v2950 = vpop.f32.mrf.mxu0
        %v2951 = vpop.f32.mrf.mxu0
        %v2952 = vadd.f32 %v1996, %v2951
        %v2953 = vpop.f32.mrf.mxu0
        %2954 = vmatprep.mubr.bf16.mxu0 %v1804
        %2955 = vmatmul.mubr.bf16.gmra.mxu0 %v1803
        %v2956 = vpop.f32.mrf.mxu0
        %v2957 = vadd.f32 %v1996, %v2956
        %v2958 = vpop.f32.mrf.mxu0
        %v2959 = vpop.f32.mrf.mxu0
        %v2960 = vadd.f32 %v1996, %v2959
        %v2961 = vpop.f32.mrf.mxu0
        %2962 = vmatprep.mubr.bf16.mxu0 %v1808
        %2963 = vmatmul.mubr.bf16.gmra.mxu0 %v1807
        %v2964 = vpop.f32.mrf.mxu0
        %v2965 = vadd.f32 %v1996, %v2964
        %v2966 = vpop.f32.mrf.mxu0
        %v2967 = vpop.f32.mrf.mxu0
        %v2968 = vadd.f32 %v1996, %v2967
        %v2969 = vpop.f32.mrf.mxu0
        %2970 = vmatprep.mubr.bf16.mxu0 %v1812
        %2971 = vmatmul.mubr.bf16.gmra.mxu0 %v1811
        %v2972 = vpop.f32.mrf.mxu0
        %v2973 = vadd.f32 %v1996, %v2972
        %v2974 = vpop.f32.mrf.mxu0
        %v2975 = vpop.f32.mrf.mxu0
        %v2976 = vadd.f32 %v1996, %v2975
        %v2977 = vpop.f32.mrf.mxu0
        %2978 = vmatprep.mubr.bf16.mxu0 %v1816
        %2979 = vmatmul.mubr.bf16.gmra.mxu0 %v1815
        %v2980 = vpop.f32.mrf.mxu0
        %v2981 = vadd.f32 %v1996, %v2980
        %v2982 = vpop.f32.mrf.mxu0
        %v2983 = vpop.f32.mrf.mxu0
        %v2984 = vadd.f32 %v1996, %v2983
        %v2985 = vpop.f32.mrf.mxu0
        %2986 = vmatprep.mubr.bf16.mxu0 %v1820
        %2987 = vmatmul.mubr.bf16.gmra.mxu0 %v1819
        %v2988 = vpop.f32.mrf.mxu0
        %v2989 = vadd.f32 %v1996, %v2988
        %v2990 = vpop.f32.mrf.mxu0
        %v2991 = vpop.f32.mrf.mxu0
        %v2992 = vadd.f32 %v1996, %v2991
        %v2993 = vpop.f32.mrf.mxu0
        %2994 = vmatprep.mubr.bf16.mxu0 %v1824
        %2995 = vmatmul.mubr.bf16.gmra.mxu0 %v1823
        %v2996 = vpop.f32.mrf.mxu0
        %v2997 = vadd.f32 %v1996, %v2996
        %v2998 = vpop.f32.mrf.mxu0
        %v2999 = vpop.f32.mrf.mxu0
        %v3000 = vadd.f32 %v1996, %v2999
        %v3001 = vpop.f32.mrf.mxu0
        %3002 = vmatprep.mubr.bf16.mxu0 %v1828
        %3003 = vmatmul.mubr.bf16.gmra.mxu0 %v1827
        %v3004 = vpop.f32.mrf.mxu0
        %v3005 = vadd.f32 %v1996, %v3004
        %v3006 = vpop.f32.mrf.mxu0
        %v3007 = vpop.f32.mrf.mxu0
        %v3008 = vadd.f32 %v1996, %v3007
        %v3009 = vpop.f32.mrf.mxu0
        %3010 = vmatprep.mubr.bf16.mxu0 %v1832
        %3011 = vmatmul.mubr.bf16.gmra.mxu0 %v1831
        %v3012 = vpop.f32.mrf.mxu0
        %v3013 = vadd.f32 %v1996, %v3012
        %v3014 = vpop.f32.mrf.mxu0
        %v3015 = vpop.f32.mrf.mxu0
        %v3016 = vadd.f32 %v1996, %v3015
        %v3017 = vpop.f32.mrf.mxu0
        %3018 = vmatprep.mubr.bf16.mxu0 %v1836
        %3019 = vmatmul.mubr.bf16.gmra.mxu0 %v1835
        %v3020 = vpop.f32.mrf.mxu0
        %v3021 = vadd.f32 %v1996, %v3020
        %v3022 = vpop.f32.mrf.mxu0
        %v3023 = vpop.f32.mrf.mxu0
        %v3024 = vadd.f32 %v1996, %v3023
        %v3025 = vpop.f32.mrf.mxu0
        %3026 = vmatprep.mubr.bf16.mxu0 %v1840
        %3027 = vmatmul.mubr.bf16.gmra.mxu0 %v1839
        %v3028 = vpop.f32.mrf.mxu0
        %v3029 = vadd.f32 %v1996, %v3028
        %v3030 = vpop.f32.mrf.mxu0
        %v3031 = vpop.f32.mrf.mxu0
        %v3032 = vadd.f32 %v1996, %v3031
        %v3033 = vpop.f32.mrf.mxu0
        %3034 = vmatprep.mubr.bf16.mxu0 %v1844
        %3035 = vmatmul.mubr.bf16.gmra.mxu0 %v1843
        %v3036 = vpop.f32.mrf.mxu0
        %v3037 = vadd.f32 %v1996, %v3036
        %v3038 = vpop.f32.mrf.mxu0
        %v3039 = vpop.f32.mrf.mxu0
        %v3040 = vadd.f32 %v1996, %v3039
        %v3041 = vpop.f32.mrf.mxu0
        %3042 = vmatprep.mubr.bf16.mxu0 %v1848
        %3043 = vmatmul.mubr.bf16.gmra.mxu0 %v1847
        %v3044 = vpop.f32.mrf.mxu0
        %v3045 = vadd.f32 %v1996, %v3044
        %v3046 = vpop.f32.mrf.mxu0
        %v3047 = vpop.f32.mrf.mxu0
        %v3048 = vadd.f32 %v1996, %v3047
        %v3049 = vpop.f32.mrf.mxu0
        %3050 = vmatprep.mubr.bf16.mxu0 %v1852
        %3051 = vmatmul.mubr.bf16.gmra.mxu0 %v1851
        %v3052 = vpop.f32.mrf.mxu0
        %v3053 = vadd.f32 %v1996, %v3052
        %v3054 = vpop.f32.mrf.mxu0
        %v3055 = vpop.f32.mrf.mxu0
        %v3056 = vadd.f32 %v1996, %v3055
        %v3057 = vpop.f32.mrf.mxu0
        %3058 = vdwg.mxu0
        %3059 = vmatprep.subr.bf16.mxu0 0
        %3060 = vmatpush1.bf16.msra.mxu0 %v2391
        %3061 = vmatprep.subr.bf16.mxu0 0
        %3062 = vmatpush1.bf16.msra.mxu0 %v2388
        %3063 = vmatprep.subr.bf16.mxu0 0
        %3064 = vmatpush1.bf16.msra.mxu0 %v2385
        %3065 = vmatprep.subr.bf16.mxu0 0
        %3066 = vmatpush1.bf16.msra.mxu0 %v2382
        %3067 = vmatprep.subr.bf16.mxu0 0
        %3068 = vmatpush1.bf16.msra.mxu0 %v2379
        %3069 = vmatprep.subr.bf16.mxu0 0
        %3070 = vmatpush1.bf16.msra.mxu0 %v2376
        %3071 = vmatprep.subr.bf16.mxu0 0
        %3072 = vmatpush1.bf16.msra.mxu0 %v2373
        %3073 = vmatprep.subr.bf16.mxu0 0
        %3074 = vmatpush1.bf16.msra.mxu0 %v2370
        %3075 = vmatprep.subr.bf16.mxu0 0
        %3076 = vmatpush2.bf16.msra.mxu0 %v2415
        %3077 = vmatprep.subr.bf16.mxu0 0
        %3078 = vmatpush2.bf16.msra.mxu0 %v2412
        %3079 = vmatprep.subr.bf16.mxu0 0
        %3080 = vmatpush2.bf16.msra.mxu0 %v2409
        %3081 = vmatprep.subr.bf16.mxu0 0
        %3082 = vmatpush2.bf16.msra.mxu0 %v2406
        %3083 = vmatprep.subr.bf16.mxu0 0
        %3084 = vmatpush2.bf16.msra.mxu0 %v2403
        %3085 = vmatprep.subr.bf16.mxu0 0
        %3086 = vmatpush2.bf16.msra.mxu0 %v2400
        %3087 = vmatprep.subr.bf16.mxu0 0
        %3088 = vmatpush2.bf16.msra.mxu0 %v2397
        %3089 = vmatprep.subr.bf16.mxu0 0
        %3090 = vmatpush2.bf16.msra.mxu0 %v2394
        %3091 = vmatprep.mubr.bf16.mxu0 %v1794
        %3092 = vmatmul.mubr.bf16.gmra.mxu0 %v1793
        %v3093 = vpop.f32.mrf.mxu0
        %v3094 = vadd.f32 %v2933, %v3093
        %v3095 = vpop.f32.mrf.mxu0
        %v3096 = vpop.f32.mrf.mxu0
        %v3097 = vadd.f32 %v2936, %v3096
        %v3098 = vpop.f32.mrf.mxu0
        %3099 = vmatprep.mubr.bf16.mxu0 %v1798
        %3100 = vmatmul.mubr.bf16.gmra.mxu0 %v1797
        %v3101 = vpop.f32.mrf.mxu0
        %v3102 = vadd.f32 %v2941, %v3101
        %v3103 = vpop.f32.mrf.mxu0
        %v3104 = vpop.f32.mrf.mxu0
        %v3105 = vadd.f32 %v2944, %v3104
        %v3106 = vpop.f32.mrf.mxu0
        %3107 = vmatprep.mubr.bf16.mxu0 %v1802
        %3108 = vmatmul.mubr.bf16.gmra.mxu0 %v1801
        %v3109 = vpop.f32.mrf.mxu0
        %v3110 = vadd.f32 %v2949, %v3109
        %v3111 = vpop.f32.mrf.mxu0
        %v3112 = vpop.f32.mrf.mxu0
        %v3113 = vadd.f32 %v2952, %v3112
        %v3114 = vpop.f32.mrf.mxu0
        %3115 = vmatprep.mubr.bf16.mxu0 %v1806
        %3116 = vmatmul.mubr.bf16.gmra.mxu0 %v1805
        %v3117 = vpop.f32.mrf.mxu0
        %v3118 = vadd.f32 %v2957, %v3117
        %v3119 = vpop.f32.mrf.mxu0
        %v3120 = vpop.f32.mrf.mxu0
        %v3121 = vadd.f32 %v2960, %v3120
        %v3122 = vpop.f32.mrf.mxu0
        %3123 = vmatprep.mubr.bf16.mxu0 %v1810
        %3124 = vmatmul.mubr.bf16.gmra.mxu0 %v1809
        %v3125 = vpop.f32.mrf.mxu0
        %v3126 = vadd.f32 %v2965, %v3125
        %v3127 = vpop.f32.mrf.mxu0
        %v3128 = vpop.f32.mrf.mxu0
        %v3129 = vadd.f32 %v2968, %v3128
        %v3130 = vpop.f32.mrf.mxu0
        %3131 = vmatprep.mubr.bf16.mxu0 %v1814
        %3132 = vmatmul.mubr.bf16.gmra.mxu0 %v1813
        %v3133 = vpop.f32.mrf.mxu0
        %v3134 = vadd.f32 %v2973, %v3133
        %v3135 = vpop.f32.mrf.mxu0
        %v3136 = vpop.f32.mrf.mxu0
        %v3137 = vadd.f32 %v2976, %v3136
        %v3138 = vpop.f32.mrf.mxu0
        %3139 = vmatprep.mubr.bf16.mxu0 %v1818
        %3140 = vmatmul.mubr.bf16.gmra.mxu0 %v1817
        %v3141 = vpop.f32.mrf.mxu0
        %v3142 = vadd.f32 %v2981, %v3141
        %v3143 = vpop.f32.mrf.mxu0
        %v3144 = vpop.f32.mrf.mxu0
        %v3145 = vadd.f32 %v2984, %v3144
        %v3146 = vpop.f32.mrf.mxu0
        %3147 = vmatprep.mubr.bf16.mxu0 %v1822
        %3148 = vmatmul.mubr.bf16.gmra.mxu0 %v1821
        %v3149 = vpop.f32.mrf.mxu0
        %v3150 = vadd.f32 %v2989, %v3149
        %v3151 = vpop.f32.mrf.mxu0
        %v3152 = vpop.f32.mrf.mxu0
        %v3153 = vadd.f32 %v2992, %v3152
        %v3154 = vpop.f32.mrf.mxu0
        %3155 = vmatprep.mubr.bf16.mxu0 %v1826
        %3156 = vmatmul.mubr.bf16.gmra.mxu0 %v1825
        %v3157 = vpop.f32.mrf.mxu0
        %v3158 = vadd.f32 %v2997, %v3157
        %v3159 = vpop.f32.mrf.mxu0
        %v3160 = vpop.f32.mrf.mxu0
        %v3161 = vadd.f32 %v3000, %v3160
        %v3162 = vpop.f32.mrf.mxu0
        %3163 = vmatprep.mubr.bf16.mxu0 %v1830
        %3164 = vmatmul.mubr.bf16.gmra.mxu0 %v1829
        %v3165 = vpop.f32.mrf.mxu0
        %v3166 = vadd.f32 %v3005, %v3165
        %v3167 = vpop.f32.mrf.mxu0
        %v3168 = vpop.f32.mrf.mxu0
        %v3169 = vadd.f32 %v3008, %v3168
        %v3170 = vpop.f32.mrf.mxu0
        %3171 = vmatprep.mubr.bf16.mxu0 %v1834
        %3172 = vmatmul.mubr.bf16.gmra.mxu0 %v1833
        %v3173 = vpop.f32.mrf.mxu0
        %v3174 = vadd.f32 %v3013, %v3173
        %v3175 = vpop.f32.mrf.mxu0
        %v3176 = vpop.f32.mrf.mxu0
        %v3177 = vadd.f32 %v3016, %v3176
        %v3178 = vpop.f32.mrf.mxu0
        %3179 = vmatprep.mubr.bf16.mxu0 %v1838
        %3180 = vmatmul.mubr.bf16.gmra.mxu0 %v1837
        %v3181 = vpop.f32.mrf.mxu0
        %v3182 = vadd.f32 %v3021, %v3181
        %v3183 = vpop.f32.mrf.mxu0
        %v3184 = vpop.f32.mrf.mxu0
        %v3185 = vadd.f32 %v3024, %v3184
        %v3186 = vpop.f32.mrf.mxu0
        %3187 = vmatprep.mubr.bf16.mxu0 %v1842
        %3188 = vmatmul.mubr.bf16.gmra.mxu0 %v1841
        %v3189 = vpop.f32.mrf.mxu0
        %v3190 = vadd.f32 %v3029, %v3189
        %v3191 = vpop.f32.mrf.mxu0
        %v3192 = vpop.f32.mrf.mxu0
        %v3193 = vadd.f32 %v3032, %v3192
        %v3194 = vpop.f32.mrf.mxu0
        %3195 = vmatprep.mubr.bf16.mxu0 %v1846
        %3196 = vmatmul.mubr.bf16.gmra.mxu0 %v1845
        %v3197 = vpop.f32.mrf.mxu0
        %v3198 = vadd.f32 %v3037, %v3197
        %v3199 = vpop.f32.mrf.mxu0
        %v3200 = vpop.f32.mrf.mxu0
        %v3201 = vadd.f32 %v3040, %v3200
        %v3202 = vpop.f32.mrf.mxu0
        %3203 = vmatprep.mubr.bf16.mxu0 %v1850
        %3204 = vmatmul.mubr.bf16.gmra.mxu0 %v1849
        %v3205 = vpop.f32.mrf.mxu0
        %v3206 = vadd.f32 %v3045, %v3205
        %v3207 = vpop.f32.mrf.mxu0
        %v3208 = vpop.f32.mrf.mxu0
        %v3209 = vadd.f32 %v3048, %v3208
        %v3210 = vpop.f32.mrf.mxu0
        %3211 = vmatprep.mubr.bf16.mxu0 %v1854
        %3212 = vmatmul.mubr.bf16.gmra.mxu0 %v1853
        %v3213 = vpop.f32.mrf.mxu0
        %v3214 = vadd.f32 %v3053, %v3213
        %v3215 = vpop.f32.mrf.mxu0
        %v3216 = vpop.f32.mrf.mxu0
        %v3217 = vadd.f32 %v3056, %v3216
        %v3218 = vpop.f32.mrf.mxu0
        %3219 = vdwg.mxu0
        %v3220 = vmax.f32 %v2740, 0.0
        %v3221 = vmax.f32 %v2742, 0.0
        %v3222 = vmax.f32 %v3094, 0.0
        %v3223 = vmax.f32 %v2744, 0.0
        %v3224 = vmax.f32 %v2746, 0.0
        %v3225 = vmax.f32 %v3097, 0.0
        %v3226 = vmax.f32 %v2750, 0.0
        %v3227 = vmax.f32 %v2752, 0.0
        %v3228 = vmax.f32 %v3102, 0.0
        %v3229 = vmax.f32 %v2754, 0.0
        %v3230 = vmax.f32 %v2756, 0.0
        %v3231 = vmax.f32 %v3105, 0.0
        %v3232 = vmax.f32 %v2760, 0.0
        %v3233 = vmax.f32 %v2762, 0.0
        %v3234 = vmax.f32 %v3110, 0.0
        %v3235 = vmax.f32 %v2764, 0.0
        %v3236 = vmax.f32 %v2766, 0.0
        %v3237 = vmax.f32 %v3113, 0.0
        %v3238 = vmax.f32 %v2770, 0.0
        %v3239 = vmax.f32 %v2772, 0.0
        %v3240 = vmax.f32 %v3118, 0.0
        %v3241 = vmax.f32 %v2774, 0.0
        %v3242 = vmax.f32 %v2776, 0.0
        %v3243 = vmax.f32 %v3121, 0.0
        %v3244 = vmax.f32 %v2780, 0.0
        %v3245 = vmax.f32 %v2782, 0.0
        %v3246 = vmax.f32 %v3126, 0.0
        %v3247 = vmax.f32 %v2784, 0.0
        %v3248 = vmax.f32 %v2786, 0.0
        %v3249 = vmax.f32 %v3129, 0.0
        %v3250 = vmax.f32 %v2790, 0.0
        %v3251 = vmax.f32 %v2792, 0.0
        %v3252 = vmax.f32 %v3134, 0.0
        %v3253 = vmax.f32 %v2794, 0.0
        %v3254 = vmax.f32 %v2796, 0.0
        %v3255 = vmax.f32 %v3137, 0.0
        %v3256 = vmax.f32 %v2800, 0.0
        %v3257 = vmax.f32 %v2802, 0.0
        %v3258 = vmax.f32 %v3142, 0.0
        %v3259 = vmax.f32 %v2804, 0.0
        %v3260 = vmax.f32 %v2806, 0.0
        %v3261 = vmax.f32 %v3145, 0.0
        %v3262 = vmax.f32 %v2810, 0.0
        %v3263 = vmax.f32 %v2812, 0.0
        %v3264 = vmax.f32 %v3150, 0.0
        %v3265 = vmax.f32 %v2814, 0.0
        %v3266 = vmax.f32 %v2816, 0.0
        %v3267 = vmax.f32 %v3153, 0.0
        %v3268 = vmax.f32 %v2820, 0.0
        %v3269 = vmax.f32 %v2822, 0.0
        %v3270 = vmax.f32 %v3158, 0.0
        %v3271 = vmax.f32 %v2824, 0.0
        %v3272 = vmax.f32 %v2826, 0.0
        %v3273 = vmax.f32 %v3161, 0.0
        %v3274 = vmax.f32 %v2830, 0.0
        %v3275 = vmax.f32 %v2832, 0.0
        %v3276 = vmax.f32 %v3166, 0.0
        %v3277 = vmax.f32 %v2834, 0.0
        %v3278 = vmax.f32 %v2836, 0.0
        %v3279 = vmax.f32 %v3169, 0.0
        %v3280 = vmax.f32 %v2840, 0.0
        %v3281 = vmax.f32 %v2842, 0.0
        %v3282 = vmax.f32 %v3174, 0.0
        %v3283 = vmax.f32 %v2844, 0.0
        %v3284 = vmax.f32 %v2846, 0.0
        %v3285 = vmax.f32 %v3177, 0.0
        %v3286 = vmax.f32 %v2850, 0.0
        %v3287 = vmax.f32 %v2852, 0.0
        %v3288 = vmax.f32 %v3182, 0.0
        %v3289 = vmax.f32 %v2854, 0.0
        %v3290 = vmax.f32 %v2856, 0.0
        %v3291 = vmax.f32 %v3185, 0.0
        %v3292 = vmax.f32 %v2860, 0.0
        %v3293 = vmax.f32 %v2862, 0.0
        %v3294 = vmax.f32 %v3190, 0.0
        %v3295 = vmax.f32 %v2864, 0.0
        %v3296 = vmax.f32 %v2866, 0.0
        %v3297 = vmax.f32 %v3193, 0.0
        %v3298 = vmax.f32 %v2870, 0.0
        %v3299 = vmax.f32 %v2872, 0.0
        %v3300 = vmax.f32 %v3198, 0.0
        %v3301 = vmax.f32 %v2874, 0.0
        %v3302 = vmax.f32 %v2876, 0.0
        %v3303 = vmax.f32 %v3201, 0.0
        %v3304 = vmax.f32 %v2880, 0.0
        %v3305 = vmax.f32 %v2882, 0.0
        %v3306 = vmax.f32 %v3206, 0.0
        %v3307 = vmax.f32 %v2884, 0.0
        %v3308 = vmax.f32 %v2886, 0.0
        %v3309 = vmax.f32 %v3209, 0.0
        %v3310 = vmax.f32 %v2890, 0.0
        %v3311 = vmax.f32 %v2892, 0.0
        %v3312 = vmax.f32 %v3214, 0.0
        %v3313 = vmax.f32 %v2894, 0.0
        %v3314 = vmax.f32 %v2896, 0.0
        %v3315 = vmax.f32 %v3217, 0.0
        %v3316 = vpack.c.bf16 %v3223, %v3220
        %v3317 = vpack.c.bf16 %v3224, %v3221
        %v3318 = vpack.c.bf16 %v3225, %v3222
        %v3319 = vpack.c.bf16 %v3229, %v3226
        %v3320 = vpack.c.bf16 %v3230, %v3227
        %v3321 = vpack.c.bf16 %v3231, %v3228
        %v3322 = vpack.c.bf16 %v3235, %v3232
        %v3323 = vpack.c.bf16 %v3236, %v3233
        %v3324 = vpack.c.bf16 %v3237, %v3234
        %v3325 = vpack.c.bf16 %v3241, %v3238
        %v3326 = vpack.c.bf16 %v3242, %v3239
        %v3327 = vpack.c.bf16 %v3243, %v3240
        %v3328 = vpack.c.bf16 %v3247, %v3244
        %v3329 = vpack.c.bf16 %v3248, %v3245
        %v3330 = vpack.c.bf16 %v3249, %v3246
        %v3331 = vpack.c.bf16 %v3253, %v3250
        %v3332 = vpack.c.bf16 %v3254, %v3251
        %v3333 = vpack.c.bf16 %v3255, %v3252
        %v3334 = vpack.c.bf16 %v3259, %v3256
        %v3335 = vpack.c.bf16 %v3260, %v3257
        %v3336 = vpack.c.bf16 %v3261, %v3258
        %v3337 = vpack.c.bf16 %v3265, %v3262
        %v3338 = vpack.c.bf16 %v3266, %v3263
        %v3339 = vpack.c.bf16 %v3267, %v3264
        %v3340 = vpack.c.bf16 %v3271, %v3268
        %v3341 = vpack.c.bf16 %v3272, %v3269
        %v3342 = vpack.c.bf16 %v3273, %v3270
        %v3343 = vpack.c.bf16 %v3277, %v3274
        %v3344 = vpack.c.bf16 %v3278, %v3275
        %v3345 = vpack.c.bf16 %v3279, %v3276
        %v3346 = vpack.c.bf16 %v3283, %v3280
        %v3347 = vpack.c.bf16 %v3284, %v3281
        %v3348 = vpack.c.bf16 %v3285, %v3282
        %v3349 = vpack.c.bf16 %v3289, %v3286
        %v3350 = vpack.c.bf16 %v3290, %v3287
        %v3351 = vpack.c.bf16 %v3291, %v3288
        %v3352 = vpack.c.bf16 %v3295, %v3292
        %v3353 = vpack.c.bf16 %v3296, %v3293
        %v3354 = vpack.c.bf16 %v3297, %v3294
        %v3355 = vpack.c.bf16 %v3301, %v3298
        %v3356 = vpack.c.bf16 %v3302, %v3299
        %v3357 = vpack.c.bf16 %v3303, %v3300
        %v3358 = vpack.c.bf16 %v3307, %v3304
        %v3359 = vpack.c.bf16 %v3308, %v3305
        %v3360 = vpack.c.bf16 %v3309, %v3306
        %v3361 = vpack.c.bf16 %v3313, %v3310
        %v3362 = vpack.c.bf16 %v3314, %v3311
        %v3363 = vpack.c.bf16 %v3315, %v3312
        %v3364 = vld [vmem:[%s7] sm:$0xf]
        %v3365 = vld [vmem:[%s7 + $0x4] sm:$0xf]
        %v3366 = vld [vmem:[%s7 + $0x8] sm:$0xf]
        %v3367 = vld [vmem:[%s7 + $0xc] sm:$0xf]
        %v3368 = vld [vmem:[%s7 + $0x10] sm:$0xf]
        %v3369 = vld [vmem:[%s7 + $0x14] sm:$0xf]
        %v3370 = vld [vmem:[%s7 + $0x18] sm:$0xf]
        %v3371 = vld [vmem:[%s7 + $0x1c] sm:$0xf]
        %v3372 = vld [vmem:[%s7 + $0x20] sm:$0xf]
        %v3373 = vld [vmem:[%s7 + $0x24] sm:$0xf]
        %v3374 = vld [vmem:[%s7 + $0x28] sm:$0xf]
        %v3375 = vld [vmem:[%s7 + $0x2c] sm:$0xf]
        %v3376 = vld [vmem:[%s7 + $0x30] sm:$0xf]
        %v3377 = vld [vmem:[%s7 + $0x34] sm:$0xf]
        %v3378 = vld [vmem:[%s7 + $0x38] sm:$0xf]
        %v3379 = vld [vmem:[%s7 + $0x3c] sm:$0xf]
        %v3380 = vld [vmem:[%s7 + $0x40] sm:$0xf]
        %v3381 = vld [vmem:[%s7 + $0x44] sm:$0xf]
        %v3382 = vld [vmem:[%s7 + $0x48] sm:$0xf]
        %v3383 = vld [vmem:[%s7 + $0x4c] sm:$0xf]
        %v3384 = vld [vmem:[%s7 + $0x50] sm:$0xf]
        %v3385 = vld [vmem:[%s7 + $0x54] sm:$0xf]
        %v3386 = vld [vmem:[%s7 + $0x58] sm:$0xf]
        %v3387 = vld [vmem:[%s7 + $0x5c] sm:$0xf]
        %v3388 = vld [vmem:[%s7 + $0x60] sm:$0xf]
        %v3389 = vld [vmem:[%s7 + $0x64] sm:$0xf]
        %v3390 = vld [vmem:[%s7 + $0x68] sm:$0xf]
        %v3391 = vld [vmem:[%s7 + $0x6c] sm:$0xf]
        %v3392 = vld [vmem:[%s7 + $0x70] sm:$0xf]
        %v3393 = vld [vmem:[%s7 + $0x74] sm:$0xf]
        %v3394 = vld [vmem:[%s7 + $0x78] sm:$0xf]
        %v3395 = vld [vmem:[%s7 + $0x7c] sm:$0xf]
        %v3396 = vld [vmem:[%s7 + $0x80] sm:$0xf]
        %v3397 = vld [vmem:[%s7 + $0x84] sm:$0xf]
        %v3398 = vld [vmem:[%s7 + $0x88] sm:$0xf]
        %v3399 = vld [vmem:[%s7 + $0x8c] sm:$0xf]
        %v3400 = vld [vmem:[%s7 + $0x90] sm:$0xf]
        %v3401 = vld [vmem:[%s7 + $0x94] sm:$0xf]
        %v3402 = vld [vmem:[%s7 + $0x98] sm:$0xf]
        %v3403 = vld [vmem:[%s7 + $0x9c] sm:$0xf]
        %v3404 = vld [vmem:[%s7 + $0xa0] sm:$0xf]
        %v3405 = vld [vmem:[%s7 + $0xa4] sm:$0xf]
        %v3406 = vld [vmem:[%s7 + $0xa8] sm:$0xf]
        %v3407 = vld [vmem:[%s7 + $0xac] sm:$0xf]
        %v3408 = vld [vmem:[%s7 + $0xb0] sm:$0xf]
        %v3409 = vld [vmem:[%s7 + $0xb4] sm:$0xf]
        %v3410 = vld [vmem:[%s7 + $0xb8] sm:$0xf]
        %v3411 = vld [vmem:[%s7 + $0xbc] sm:$0xf]
        %v3412 = vld [vmem:[%s8] sm:$0x1]
        %v3414 = vlaneseq
        %v3415 = vshrl.u32 %v3414, 7
        %v3416 = vsub.s32 0, %v3415
        %v3417 = vrot.slane %v3412, %v3416
        %v3467 = vunpack.c.l.b16 %v3364
        %v3468 = vunpack.c.l.b16 %v3365
        %v3469 = vunpack.c.l.b16 %v3366
        %v3470 = vunpack.c.l.b16 %v3367
        %v3471 = vunpack.c.l.b16 %v3368
        %v3472 = vunpack.c.l.b16 %v3369
        %v3473 = vunpack.c.l.b16 %v3370
        %v3474 = vunpack.c.l.b16 %v3371
        %v3475 = vunpack.c.l.b16 %v3372
        %v3476 = vunpack.c.l.b16 %v3373
        %v3477 = vunpack.c.l.b16 %v3374
        %v3478 = vunpack.c.l.b16 %v3375
        %v3479 = vunpack.c.l.b16 %v3376
        %v3480 = vunpack.c.l.b16 %v3377
        %v3481 = vunpack.c.l.b16 %v3378
        %v3482 = vunpack.c.l.b16 %v3379
        %v3483 = vunpack.c.l.b16 %v3380
        %v3484 = vunpack.c.l.b16 %v3381
        %v3485 = vunpack.c.l.b16 %v3382
        %v3486 = vunpack.c.l.b16 %v3383
        %v3487 = vunpack.c.l.b16 %v3384
        %v3488 = vunpack.c.l.b16 %v3385
        %v3489 = vunpack.c.l.b16 %v3386
        %v3490 = vunpack.c.l.b16 %v3387
        %v3491 = vunpack.c.l.b16 %v3388
        %v3492 = vunpack.c.l.b16 %v3389
        %v3493 = vunpack.c.l.b16 %v3390
        %v3494 = vunpack.c.l.b16 %v3391
        %v3495 = vunpack.c.l.b16 %v3392
        %v3496 = vunpack.c.l.b16 %v3393
        %v3497 = vunpack.c.l.b16 %v3394
        %v3498 = vunpack.c.l.b16 %v3395
        %v3499 = vunpack.c.l.b16 %v3396
        %v3500 = vunpack.c.l.b16 %v3397
        %v3501 = vunpack.c.l.b16 %v3398
        %v3502 = vunpack.c.l.b16 %v3399
        %v3503 = vunpack.c.l.b16 %v3400
        %v3504 = vunpack.c.l.b16 %v3401
        %v3505 = vunpack.c.l.b16 %v3402
        %v3506 = vunpack.c.l.b16 %v3403
        %v3507 = vunpack.c.l.b16 %v3404
        %v3508 = vunpack.c.l.b16 %v3405
        %v3509 = vunpack.c.l.b16 %v3406
        %v3510 = vunpack.c.l.b16 %v3407
        %v3511 = vunpack.c.l.b16 %v3408
        %v3512 = vunpack.c.l.b16 %v3409
        %v3513 = vunpack.c.l.b16 %v3410
        %v3514 = vunpack.c.l.b16 %v3411
        %v3515 = vpack.c.b16 %v3468, %v3467
        %v3516 = vpack.c.b16 %v3470, %v3469
        %v3517 = vpack.c.b16 %v3472, %v3471
        %v3518 = vpack.c.b16 %v3474, %v3473
        %v3519 = vpack.c.b16 %v3476, %v3475
        %v3520 = vpack.c.b16 %v3478, %v3477
        %v3521 = vpack.c.b16 %v3480, %v3479
        %v3522 = vpack.c.b16 %v3482, %v3481
        %v3523 = vpack.c.b16 %v3484, %v3483
        %v3524 = vpack.c.b16 %v3486, %v3485
        %v3525 = vpack.c.b16 %v3488, %v3487
        %v3526 = vpack.c.b16 %v3490, %v3489
        %v3527 = vpack.c.b16 %v3492, %v3491
        %v3528 = vpack.c.b16 %v3494, %v3493
        %v3529 = vpack.c.b16 %v3496, %v3495
        %v3530 = vpack.c.b16 %v3498, %v3497
        %v3531 = vpack.c.b16 %v3500, %v3499
        %v3532 = vpack.c.b16 %v3502, %v3501
        %v3533 = vpack.c.b16 %v3504, %v3503
        %v3534 = vpack.c.b16 %v3506, %v3505
        %v3535 = vpack.c.b16 %v3508, %v3507
        %v3536 = vpack.c.b16 %v3510, %v3509
        %v3537 = vpack.c.b16 %v3512, %v3511
        %v3538 = vpack.c.b16 %v3514, %v3513
        %3563 = vmatprep.subr.bf16.mxu0 0
        %3564 = vmatpush1.bf16.msra.mxu0 %v3522
        %3565 = vmatprep.subr.bf16.mxu0 0
        %3566 = vmatpush1.bf16.msra.mxu0 %v3521
        %3567 = vmatprep.subr.bf16.mxu0 0
        %3568 = vmatpush1.bf16.msra.mxu0 %v3520
        %3569 = vmatprep.subr.bf16.mxu0 0
        %3570 = vmatpush1.bf16.msra.mxu0 %v3519
        %3571 = vmatprep.subr.bf16.mxu0 0
        %3572 = vmatpush1.bf16.msra.mxu0 %v3518
        %3573 = vmatprep.subr.bf16.mxu0 0
        %3574 = vmatpush1.bf16.msra.mxu0 %v3517
        %3575 = vmatprep.subr.bf16.mxu0 0
        %3576 = vmatpush1.bf16.msra.mxu0 %v3516
        %3577 = vmatprep.subr.bf16.mxu0 0
        %3578 = vmatpush1.bf16.msra.mxu0 %v3515
        %3579 = vmatprep.subr.bf16.mxu0 0
        %3580 = vmatpush2.bf16.msra.mxu0 %v3530
        %3581 = vmatprep.subr.bf16.mxu0 0
        %3582 = vmatpush2.bf16.msra.mxu0 %v3529
        %3583 = vmatprep.subr.bf16.mxu0 0
        %3584 = vmatpush2.bf16.msra.mxu0 %v3528
        %3585 = vmatprep.subr.bf16.mxu0 0
        %3586 = vmatpush2.bf16.msra.mxu0 %v3527
        %3587 = vmatprep.subr.bf16.mxu0 0
        %3588 = vmatpush2.bf16.msra.mxu0 %v3526
        %3589 = vmatprep.subr.bf16.mxu0 0
        %3590 = vmatpush2.bf16.msra.mxu0 %v3525
        %3591 = vmatprep.subr.bf16.mxu0 0
        %3592 = vmatpush2.bf16.msra.mxu0 %v3524
        %3593 = vmatprep.subr.bf16.mxu0 0
        %3594 = vmatpush2.bf16.msra.mxu0 %v3523
        %3595 = vmatprep.mubr.bf16.mxu0 %v3317
        %3596 = vmatmul.mubr.bf16.gmra.mxu0 %v3316
        %v3597 = vpop.f32.mrf.mxu0
        %v3598 = vadd.f32 %v3417, %v3597
        %v3599 = vpop.f32.mrf.mxu0
        %v3600 = vpop.f32.mrf.mxu0
        %v3601 = vadd.f32 %v3417, %v3600
        %v3602 = vpop.f32.mrf.mxu0
        %3603 = vmatprep.mubr.bf16.mxu0 %v3320
        %3604 = vmatmul.mubr.bf16.gmra.mxu0 %v3319
        %v3605 = vpop.f32.mrf.mxu0
        %v3606 = vadd.f32 %v3417, %v3605
        %v3607 = vpop.f32.mrf.mxu0
        %v3608 = vpop.f32.mrf.mxu0
        %v3609 = vadd.f32 %v3417, %v3608
        %v3610 = vpop.f32.mrf.mxu0
        %3611 = vmatprep.mubr.bf16.mxu0 %v3323
        %3612 = vmatmul.mubr.bf16.gmra.mxu0 %v3322
        %v3613 = vpop.f32.mrf.mxu0
        %v3614 = vadd.f32 %v3417, %v3613
        %v3615 = vpop.f32.mrf.mxu0
        %v3616 = vpop.f32.mrf.mxu0
        %v3617 = vadd.f32 %v3417, %v3616
        %v3618 = vpop.f32.mrf.mxu0
        %3619 = vmatprep.mubr.bf16.mxu0 %v3326
        %3620 = vmatmul.mubr.bf16.gmra.mxu0 %v3325
        %v3621 = vpop.f32.mrf.mxu0
        %v3622 = vadd.f32 %v3417, %v3621
        %v3623 = vpop.f32.mrf.mxu0
        %v3624 = vpop.f32.mrf.mxu0
        %v3625 = vadd.f32 %v3417, %v3624
        %v3626 = vpop.f32.mrf.mxu0
        %3627 = vmatprep.mubr.bf16.mxu0 %v3329
        %3628 = vmatmul.mubr.bf16.gmra.mxu0 %v3328
        %v3629 = vpop.f32.mrf.mxu0
        %v3630 = vadd.f32 %v3417, %v3629
        %v3631 = vpop.f32.mrf.mxu0
        %v3632 = vpop.f32.mrf.mxu0
        %v3633 = vadd.f32 %v3417, %v3632
        %v3634 = vpop.f32.mrf.mxu0
        %3635 = vmatprep.mubr.bf16.mxu0 %v3332
        %3636 = vmatmul.mubr.bf16.gmra.mxu0 %v3331
        %v3637 = vpop.f32.mrf.mxu0
        %v3638 = vadd.f32 %v3417, %v3637
        %v3639 = vpop.f32.mrf.mxu0
        %v3640 = vpop.f32.mrf.mxu0
        %v3641 = vadd.f32 %v3417, %v3640
        %v3642 = vpop.f32.mrf.mxu0
        %3643 = vmatprep.mubr.bf16.mxu0 %v3335
        %3644 = vmatmul.mubr.bf16.gmra.mxu0 %v3334
        %v3645 = vpop.f32.mrf.mxu0
        %v3646 = vadd.f32 %v3417, %v3645
        %v3647 = vpop.f32.mrf.mxu0
        %v3648 = vpop.f32.mrf.mxu0
        %v3649 = vadd.f32 %v3417, %v3648
        %v3650 = vpop.f32.mrf.mxu0
        %3651 = vmatprep.mubr.bf16.mxu0 %v3338
        %3652 = vmatmul.mubr.bf16.gmra.mxu0 %v3337
        %v3653 = vpop.f32.mrf.mxu0
        %v3654 = vadd.f32 %v3417, %v3653
        %v3655 = vpop.f32.mrf.mxu0
        %v3656 = vpop.f32.mrf.mxu0
        %v3657 = vadd.f32 %v3417, %v3656
        %v3658 = vpop.f32.mrf.mxu0
        %3659 = vmatprep.mubr.bf16.mxu0 %v3341
        %3660 = vmatmul.mubr.bf16.gmra.mxu0 %v3340
        %v3661 = vpop.f32.mrf.mxu0
        %v3662 = vadd.f32 %v3417, %v3661
        %v3663 = vpop.f32.mrf.mxu0
        %v3664 = vpop.f32.mrf.mxu0
        %v3665 = vadd.f32 %v3417, %v3664
        %v3666 = vpop.f32.mrf.mxu0
        %3667 = vmatprep.mubr.bf16.mxu0 %v3344
        %3668 = vmatmul.mubr.bf16.gmra.mxu0 %v3343
        %v3669 = vpop.f32.mrf.mxu0
        %v3670 = vadd.f32 %v3417, %v3669
        %v3671 = vpop.f32.mrf.mxu0
        %v3672 = vpop.f32.mrf.mxu0
        %v3673 = vadd.f32 %v3417, %v3672
        %v3674 = vpop.f32.mrf.mxu0
        %3675 = vmatprep.mubr.bf16.mxu0 %v3347
        %3676 = vmatmul.mubr.bf16.gmra.mxu0 %v3346
        %v3677 = vpop.f32.mrf.mxu0
        %v3678 = vadd.f32 %v3417, %v3677
        %v3679 = vpop.f32.mrf.mxu0
        %v3680 = vpop.f32.mrf.mxu0
        %v3681 = vadd.f32 %v3417, %v3680
        %v3682 = vpop.f32.mrf.mxu0
        %3683 = vmatprep.mubr.bf16.mxu0 %v3350
        %3684 = vmatmul.mubr.bf16.gmra.mxu0 %v3349
        %v3685 = vpop.f32.mrf.mxu0
        %v3686 = vadd.f32 %v3417, %v3685
        %v3687 = vpop.f32.mrf.mxu0
        %v3688 = vpop.f32.mrf.mxu0
        %v3689 = vadd.f32 %v3417, %v3688
        %v3690 = vpop.f32.mrf.mxu0
        %3691 = vmatprep.mubr.bf16.mxu0 %v3353
        %3692 = vmatmul.mubr.bf16.gmra.mxu0 %v3352
        %v3693 = vpop.f32.mrf.mxu0
        %v3694 = vadd.f32 %v3417, %v3693
        %v3695 = vpop.f32.mrf.mxu0
        %v3696 = vpop.f32.mrf.mxu0
        %v3697 = vadd.f32 %v3417, %v3696
        %v3698 = vpop.f32.mrf.mxu0
        %3699 = vmatprep.mubr.bf16.mxu0 %v3356
        %3700 = vmatmul.mubr.bf16.gmra.mxu0 %v3355
        %v3701 = vpop.f32.mrf.mxu0
        %v3702 = vadd.f32 %v3417, %v3701
        %v3703 = vpop.f32.mrf.mxu0
        %v3704 = vpop.f32.mrf.mxu0
        %v3705 = vadd.f32 %v3417, %v3704
        %v3706 = vpop.f32.mrf.mxu0
        %3707 = vmatprep.mubr.bf16.mxu0 %v3359
        %3708 = vmatmul.mubr.bf16.gmra.mxu0 %v3358
        %v3709 = vpop.f32.mrf.mxu0
        %v3710 = vadd.f32 %v3417, %v3709
        %v3711 = vpop.f32.mrf.mxu0
        %v3712 = vpop.f32.mrf.mxu0
        %v3713 = vadd.f32 %v3417, %v3712
        %v3714 = vpop.f32.mrf.mxu0
        %3715 = vmatprep.mubr.bf16.mxu0 %v3362
        %3716 = vmatmul.mubr.bf16.gmra.mxu0 %v3361
        %v3717 = vpop.f32.mrf.mxu0
        %v3718 = vadd.f32 %v3417, %v3717
        %v3719 = vpop.f32.mrf.mxu0
        %v3720 = vpop.f32.mrf.mxu0
        %v3721 = vadd.f32 %v3417, %v3720
        %v3722 = vpop.f32.mrf.mxu0
        %3723 = vdwg.mxu0
        %3724 = vmatprep.subr.bf16.mxu0 0
        %3725 = vmatpush1.bf16.msra.mxu0 %v3538
        %3726 = vmatprep.subr.bf16.mxu0 0
        %3727 = vmatpush1.bf16.msra.mxu0 %v3537
        %3728 = vmatprep.subr.bf16.mxu0 0
        %3729 = vmatpush1.bf16.msra.mxu0 %v3536
        %3730 = vmatprep.subr.bf16.mxu0 0
        %3731 = vmatpush1.bf16.msra.mxu0 %v3535
        %3732 = vmatprep.subr.bf16.mxu0 0
        %3733 = vmatpush1.bf16.msra.mxu0 %v3534
        %3734 = vmatprep.subr.bf16.mxu0 0
        %3735 = vmatpush1.bf16.msra.mxu0 %v3533
        %3736 = vmatprep.subr.bf16.mxu0 0
        %3737 = vmatpush1.bf16.msra.mxu0 %v3532
        %3738 = vmatprep.subr.bf16.mxu0 0
        %3739 = vmatpush1.bf16.msra.mxu0 %v3531
        %3740 = vmatprep.subr.bf16.mxu0 0
        %3741 = vmatpush2.bf16.msra.mxu0 0
        %3742 = vmatprep.subr.bf16.mxu0 0
        %3743 = vmatpush2.bf16.msra.mxu0 0
        %3744 = vmatprep.subr.bf16.mxu0 0
        %3745 = vmatpush2.bf16.msra.mxu0 0
        %3746 = vmatprep.subr.bf16.mxu0 0
        %3747 = vmatpush2.bf16.msra.mxu0 0
        %3748 = vmatprep.subr.bf16.mxu0 0
        %3749 = vmatpush2.bf16.msra.mxu0 0
        %3750 = vmatprep.subr.bf16.mxu0 0
        %3751 = vmatpush2.bf16.msra.mxu0 0
        %3752 = vmatprep.subr.bf16.mxu0 0
        %3753 = vmatpush2.bf16.msra.mxu0 0
        %3754 = vmatprep.subr.bf16.mxu0 0
        %3755 = vmatpush2.bf16.msra.mxu0 0
        %3756 = vmatprep.mubr.bf16.mxu0 0
        %3757 = vmatmul.mubr.bf16.gmra.mxu0 %v3318
        %v3758 = vpop.f32.mrf.mxu0
        %v3759 = vadd.f32 %v3598, %v3758
        %v3760 = vpop.f32.mrf.mxu0
        %v3761 = vpop.f32.mrf.mxu0
        %v3762 = vadd.f32 %v3601, %v3761
        %v3763 = vpop.f32.mrf.mxu0
        %3764 = vmatprep.mubr.bf16.mxu0 0
        %3765 = vmatmul.mubr.bf16.gmra.mxu0 %v3321
        %v3766 = vpop.f32.mrf.mxu0
        %v3767 = vadd.f32 %v3606, %v3766
        %v3768 = vpop.f32.mrf.mxu0
        %v3769 = vpop.f32.mrf.mxu0
        %v3770 = vadd.f32 %v3609, %v3769
        %v3771 = vpop.f32.mrf.mxu0
        %3772 = vmatprep.mubr.bf16.mxu0 0
        %3773 = vmatmul.mubr.bf16.gmra.mxu0 %v3324
        %v3774 = vpop.f32.mrf.mxu0
        %v3775 = vadd.f32 %v3614, %v3774
        %v3776 = vpop.f32.mrf.mxu0
        %v3777 = vpop.f32.mrf.mxu0
        %v3778 = vadd.f32 %v3617, %v3777
        %v3779 = vpop.f32.mrf.mxu0
        %3780 = vmatprep.mubr.bf16.mxu0 0
        %3781 = vmatmul.mubr.bf16.gmra.mxu0 %v3327
        %v3782 = vpop.f32.mrf.mxu0
        %v3783 = vadd.f32 %v3622, %v3782
        %v3784 = vpop.f32.mrf.mxu0
        %v3785 = vpop.f32.mrf.mxu0
        %v3786 = vadd.f32 %v3625, %v3785
        %v3787 = vpop.f32.mrf.mxu0
        %3788 = vmatprep.mubr.bf16.mxu0 0
        %3789 = vmatmul.mubr.bf16.gmra.mxu0 %v3330
        %v3790 = vpop.f32.mrf.mxu0
        %v3791 = vadd.f32 %v3630, %v3790
        %v3792 = vpop.f32.mrf.mxu0
        %v3793 = vpop.f32.mrf.mxu0
        %v3794 = vadd.f32 %v3633, %v3793
        %v3795 = vpop.f32.mrf.mxu0
        %3796 = vmatprep.mubr.bf16.mxu0 0
        %3797 = vmatmul.mubr.bf16.gmra.mxu0 %v3333
        %v3798 = vpop.f32.mrf.mxu0
        %v3799 = vadd.f32 %v3638, %v3798
        %v3800 = vpop.f32.mrf.mxu0
        %v3801 = vpop.f32.mrf.mxu0
        %v3802 = vadd.f32 %v3641, %v3801
        %v3803 = vpop.f32.mrf.mxu0
        %3804 = vmatprep.mubr.bf16.mxu0 0
        %3805 = vmatmul.mubr.bf16.gmra.mxu0 %v3336
        %v3806 = vpop.f32.mrf.mxu0
        %v3807 = vadd.f32 %v3646, %v3806
        %v3808 = vpop.f32.mrf.mxu0
        %v3809 = vpop.f32.mrf.mxu0
        %v3810 = vadd.f32 %v3649, %v3809
        %v3811 = vpop.f32.mrf.mxu0
        %3812 = vmatprep.mubr.bf16.mxu0 0
        %3813 = vmatmul.mubr.bf16.gmra.mxu0 %v3339
        %v3814 = vpop.f32.mrf.mxu0
        %v3815 = vadd.f32 %v3654, %v3814
        %v3816 = vpop.f32.mrf.mxu0
        %v3817 = vpop.f32.mrf.mxu0
        %v3818 = vadd.f32 %v3657, %v3817
        %v3819 = vpop.f32.mrf.mxu0
        %3820 = vmatprep.mubr.bf16.mxu0 0
        %3821 = vmatmul.mubr.bf16.gmra.mxu0 %v3342
        %v3822 = vpop.f32.mrf.mxu0
        %v3823 = vadd.f32 %v3662, %v3822
        %v3824 = vpop.f32.mrf.mxu0
        %v3825 = vpop.f32.mrf.mxu0
        %v3826 = vadd.f32 %v3665, %v3825
        %v3827 = vpop.f32.mrf.mxu0
        %3828 = vmatprep.mubr.bf16.mxu0 0
        %3829 = vmatmul.mubr.bf16.gmra.mxu0 %v3345
        %v3830 = vpop.f32.mrf.mxu0
        %v3831 = vadd.f32 %v3670, %v3830
        %v3832 = vpop.f32.mrf.mxu0
        %v3833 = vpop.f32.mrf.mxu0
        %v3834 = vadd.f32 %v3673, %v3833
        %v3835 = vpop.f32.mrf.mxu0
        %3836 = vmatprep.mubr.bf16.mxu0 0
        %3837 = vmatmul.mubr.bf16.gmra.mxu0 %v3348
        %v3838 = vpop.f32.mrf.mxu0
        %v3839 = vadd.f32 %v3678, %v3838
        %v3840 = vpop.f32.mrf.mxu0
        %v3841 = vpop.f32.mrf.mxu0
        %v3842 = vadd.f32 %v3681, %v3841
        %v3843 = vpop.f32.mrf.mxu0
        %3844 = vmatprep.mubr.bf16.mxu0 0
        %3845 = vmatmul.mubr.bf16.gmra.mxu0 %v3351
        %v3846 = vpop.f32.mrf.mxu0
        %v3847 = vadd.f32 %v3686, %v3846
        %v3848 = vpop.f32.mrf.mxu0
        %v3849 = vpop.f32.mrf.mxu0
        %v3850 = vadd.f32 %v3689, %v3849
        %v3851 = vpop.f32.mrf.mxu0
        %3852 = vmatprep.mubr.bf16.mxu0 0
        %3853 = vmatmul.mubr.bf16.gmra.mxu0 %v3354
        %v3854 = vpop.f32.mrf.mxu0
        %v3855 = vadd.f32 %v3694, %v3854
        %v3856 = vpop.f32.mrf.mxu0
        %v3857 = vpop.f32.mrf.mxu0
        %v3858 = vadd.f32 %v3697, %v3857
        %v3859 = vpop.f32.mrf.mxu0
        %3860 = vmatprep.mubr.bf16.mxu0 0
        %3861 = vmatmul.mubr.bf16.gmra.mxu0 %v3357
        %v3862 = vpop.f32.mrf.mxu0
        %v3863 = vadd.f32 %v3702, %v3862
        %v3864 = vpop.f32.mrf.mxu0
        %v3865 = vpop.f32.mrf.mxu0
        %v3866 = vadd.f32 %v3705, %v3865
        %v3867 = vpop.f32.mrf.mxu0
        %3868 = vmatprep.mubr.bf16.mxu0 0
        %3869 = vmatmul.mubr.bf16.gmra.mxu0 %v3360
        %v3870 = vpop.f32.mrf.mxu0
        %v3871 = vadd.f32 %v3710, %v3870
        %v3872 = vpop.f32.mrf.mxu0
        %v3873 = vpop.f32.mrf.mxu0
        %v3874 = vadd.f32 %v3713, %v3873
        %v3875 = vpop.f32.mrf.mxu0
        %3876 = vmatprep.mubr.bf16.mxu0 0
        %3877 = vmatmul.mubr.bf16.gmra.mxu0 %v3363
        %v3878 = vpop.f32.mrf.mxu0
        %v3879 = vadd.f32 %v3718, %v3878
        %v3880 = vpop.f32.mrf.mxu0
        %v3881 = vpop.f32.mrf.mxu0
        %v3882 = vadd.f32 %v3721, %v3881
        %v3883 = vpop.f32.mrf.mxu0
        %3884 = vdwg.mxu0
        %v3885 = vmax.f32 %v3759, 0.0
        %v3886 = vmax.f32 %v3762, 0.0
        %v3887 = vmax.f32 %v3767, 0.0
        %v3888 = vmax.f32 %v3770, 0.0
        %v3889 = vmax.f32 %v3775, 0.0
        %v3890 = vmax.f32 %v3778, 0.0
        %v3891 = vmax.f32 %v3783, 0.0
        %v3892 = vmax.f32 %v3786, 0.0
        %v3893 = vmax.f32 %v3791, 0.0
        %v3894 = vmax.f32 %v3794, 0.0
        %v3895 = vmax.f32 %v3799, 0.0
        %v3896 = vmax.f32 %v3802, 0.0
        %v3897 = vmax.f32 %v3807, 0.0
        %v3898 = vmax.f32 %v3810, 0.0
        %v3899 = vmax.f32 %v3815, 0.0
        %v3900 = vmax.f32 %v3818, 0.0
        %v3901 = vmax.f32 %v3823, 0.0
        %v3902 = vmax.f32 %v3826, 0.0
        %v3903 = vmax.f32 %v3831, 0.0
        %v3904 = vmax.f32 %v3834, 0.0
        %v3905 = vmax.f32 %v3839, 0.0
        %v3906 = vmax.f32 %v3842, 0.0
        %v3907 = vmax.f32 %v3847, 0.0
        %v3908 = vmax.f32 %v3850, 0.0
        %v3909 = vmax.f32 %v3855, 0.0
        %v3910 = vmax.f32 %v3858, 0.0
        %v3911 = vmax.f32 %v3863, 0.0
        %v3912 = vmax.f32 %v3866, 0.0
        %v3913 = vmax.f32 %v3871, 0.0
        %v3914 = vmax.f32 %v3874, 0.0
        %v3915 = vmax.f32 %v3879, 0.0
        %v3916 = vmax.f32 %v3882, 0.0
        %v3917 = vpack.c.bf16 %v3886, %v3885
        %v3918 = vpack.c.bf16 %v3888, %v3887
        %v3919 = vpack.c.bf16 %v3890, %v3889
        %v3920 = vpack.c.bf16 %v3892, %v3891
        %v3921 = vpack.c.bf16 %v3894, %v3893
        %v3922 = vpack.c.bf16 %v3896, %v3895
        %v3923 = vpack.c.bf16 %v3898, %v3897
        %v3924 = vpack.c.bf16 %v3900, %v3899
        %v3925 = vpack.c.bf16 %v3902, %v3901
        %v3926 = vpack.c.bf16 %v3904, %v3903
        %v3927 = vpack.c.bf16 %v3906, %v3905
        %v3928 = vpack.c.bf16 %v3908, %v3907
        %v3929 = vpack.c.bf16 %v3910, %v3909
        %v3930 = vpack.c.bf16 %v3912, %v3911
        %v3931 = vpack.c.bf16 %v3914, %v3913
        %v3932 = vpack.c.bf16 %v3916, %v3915
        %v3933 = vld [vmem:[%s9] sm:$0xf]
        %v3934 = vld [vmem:[%s9 + $0x4] sm:$0xf]
        %v3935 = vld [vmem:[%s9 + $0x8] sm:$0xf]
        %v3936 = vld [vmem:[%s9 + $0xc] sm:$0xf]
        %v3937 = vld [vmem:[%s9 + $0x10] sm:$0xf]
        %v3938 = vld [vmem:[%s9 + $0x14] sm:$0xf]
        %v3939 = vld [vmem:[%s9 + $0x18] sm:$0xf]
        %v3940 = vld [vmem:[%s9 + $0x1c] sm:$0xf]
        %v3941 = vld [vmem:[%s9 + $0x20] sm:$0xf]
        %v3942 = vld [vmem:[%s9 + $0x24] sm:$0xf]
        %v3943 = vld [vmem:[%s9 + $0x28] sm:$0xf]
        %v3944 = vld [vmem:[%s9 + $0x2c] sm:$0xf]
        %v3945 = vld [vmem:[%s9 + $0x30] sm:$0xf]
        %v3946 = vld [vmem:[%s9 + $0x34] sm:$0xf]
        %v3947 = vld [vmem:[%s9 + $0x38] sm:$0xf]
        %v3948 = vld [vmem:[%s9 + $0x3c] sm:$0xf]
        %v3949 = vld [vmem:[%s10] sm:$0x1]
        %v3951 = vlaneseq
        %v3952 = vshrl.u32 %v3951, 7
        %v3953 = vsub.s32 0, %v3952
        %v3954 = vrot.slane %v3949, %v3953
        %v3972 = vunpack.c.l.b16 %v3933
        %v3973 = vunpack.c.l.b16 %v3934
        %v3974 = vunpack.c.l.b16 %v3935
        %v3975 = vunpack.c.l.b16 %v3936
        %v3976 = vunpack.c.l.b16 %v3937
        %v3977 = vunpack.c.l.b16 %v3938
        %v3978 = vunpack.c.l.b16 %v3939
        %v3979 = vunpack.c.l.b16 %v3940
        %v3980 = vunpack.c.l.b16 %v3941
        %v3981 = vunpack.c.l.b16 %v3942
        %v3982 = vunpack.c.l.b16 %v3943
        %v3983 = vunpack.c.l.b16 %v3944
        %v3984 = vunpack.c.l.b16 %v3945
        %v3985 = vunpack.c.l.b16 %v3946
        %v3986 = vunpack.c.l.b16 %v3947
        %v3987 = vunpack.c.l.b16 %v3948
        %v3988 = vpack.c.b16 %v3973, %v3972
        %v3989 = vpack.c.b16 %v3975, %v3974
        %v3990 = vpack.c.b16 %v3977, %v3976
        %v3991 = vpack.c.b16 %v3979, %v3978
        %v3992 = vpack.c.b16 %v3981, %v3980
        %v3993 = vpack.c.b16 %v3983, %v3982
        %v3994 = vpack.c.b16 %v3985, %v3984
        %v3995 = vpack.c.b16 %v3987, %v3986
        %4004 = vmatprep.subr.bf16.mxu0 0
        %4005 = vmatpush1.bf16.msra.mxu0 %v3995
        %4006 = vmatprep.subr.bf16.mxu0 0
        %4007 = vmatpush1.bf16.msra.mxu0 %v3994
        %4008 = vmatprep.subr.bf16.mxu0 0
        %4009 = vmatpush1.bf16.msra.mxu0 %v3993
        %4010 = vmatprep.subr.bf16.mxu0 0
        %4011 = vmatpush1.bf16.msra.mxu0 %v3992
        %4012 = vmatprep.subr.bf16.mxu0 0
        %4013 = vmatpush1.bf16.msra.mxu0 %v3991
        %4014 = vmatprep.subr.bf16.mxu0 0
        %4015 = vmatpush1.bf16.msra.mxu0 %v3990
        %4016 = vmatprep.subr.bf16.mxu0 0
        %4017 = vmatpush1.bf16.msra.mxu0 %v3989
        %4018 = vmatprep.subr.bf16.mxu0 0
        %4019 = vmatpush1.bf16.msra.mxu0 %v3988
        %4020 = vmatprep.subr.bf16.mxu0 0
        %4021 = vmatpush2.bf16.msra.mxu0 0
        %4022 = vmatprep.subr.bf16.mxu0 0
        %4023 = vmatpush2.bf16.msra.mxu0 0
        %4024 = vmatprep.subr.bf16.mxu0 0
        %4025 = vmatpush2.bf16.msra.mxu0 0
        %4026 = vmatprep.subr.bf16.mxu0 0
        %4027 = vmatpush2.bf16.msra.mxu0 0
        %4028 = vmatprep.subr.bf16.mxu0 0
        %4029 = vmatpush2.bf16.msra.mxu0 0
        %4030 = vmatprep.subr.bf16.mxu0 0
        %4031 = vmatpush2.bf16.msra.mxu0 0
        %4032 = vmatprep.subr.bf16.mxu0 0
        %4033 = vmatpush2.bf16.msra.mxu0 0
        %4034 = vmatprep.subr.bf16.mxu0 0
        %4035 = vmatpush2.bf16.msra.mxu0 0
        %4036 = vmatprep.mubr.bf16.mxu0 0
        %4037 = vmatmul.mubr.bf16.gmra.mxu0 %v3917
        %v4038 = vpop.f32.mrf.mxu0
        %v4039 = vadd.f32 %v3954, %v4038
        %v4040 = vpop.f32.mrf.mxu0
        %v4041 = vpop.f32.mrf.mxu0
        %v4042 = vadd.f32 %v3954, %v4041
        %v4043 = vpop.f32.mrf.mxu0
        %4044 = vmatprep.mubr.bf16.mxu0 0
        %4045 = vmatmul.mubr.bf16.gmra.mxu0 %v3918
        %v4046 = vpop.f32.mrf.mxu0
        %v4047 = vadd.f32 %v3954, %v4046
        %v4048 = vpop.f32.mrf.mxu0
        %v4049 = vpop.f32.mrf.mxu0
        %v4050 = vadd.f32 %v3954, %v4049
        %v4051 = vpop.f32.mrf.mxu0
        %4052 = vmatprep.mubr.bf16.mxu0 0
        %4053 = vmatmul.mubr.bf16.gmra.mxu0 %v3919
        %v4054 = vpop.f32.mrf.mxu0
        %v4055 = vadd.f32 %v3954, %v4054
        %v4056 = vpop.f32.mrf.mxu0
        %v4057 = vpop.f32.mrf.mxu0
        %v4058 = vadd.f32 %v3954, %v4057
        %v4059 = vpop.f32.mrf.mxu0
        %4060 = vmatprep.mubr.bf16.mxu0 0
        %4061 = vmatmul.mubr.bf16.gmra.mxu0 %v3920
        %v4062 = vpop.f32.mrf.mxu0
        %v4063 = vadd.f32 %v3954, %v4062
        %v4064 = vpop.f32.mrf.mxu0
        %v4065 = vpop.f32.mrf.mxu0
        %v4066 = vadd.f32 %v3954, %v4065
        %v4067 = vpop.f32.mrf.mxu0
        %4068 = vmatprep.mubr.bf16.mxu0 0
        %4069 = vmatmul.mubr.bf16.gmra.mxu0 %v3921
        %v4070 = vpop.f32.mrf.mxu0
        %v4071 = vadd.f32 %v3954, %v4070
        %v4072 = vpop.f32.mrf.mxu0
        %v4073 = vpop.f32.mrf.mxu0
        %v4074 = vadd.f32 %v3954, %v4073
        %v4075 = vpop.f32.mrf.mxu0
        %4076 = vmatprep.mubr.bf16.mxu0 0
        %4077 = vmatmul.mubr.bf16.gmra.mxu0 %v3922
        %v4078 = vpop.f32.mrf.mxu0
        %v4079 = vadd.f32 %v3954, %v4078
        %v4080 = vpop.f32.mrf.mxu0
        %v4081 = vpop.f32.mrf.mxu0
        %v4082 = vadd.f32 %v3954, %v4081
        %v4083 = vpop.f32.mrf.mxu0
        %4084 = vmatprep.mubr.bf16.mxu0 0
        %4085 = vmatmul.mubr.bf16.gmra.mxu0 %v3923
        %v4086 = vpop.f32.mrf.mxu0
        %v4087 = vadd.f32 %v3954, %v4086
        %v4088 = vpop.f32.mrf.mxu0
        %v4089 = vpop.f32.mrf.mxu0
        %v4090 = vadd.f32 %v3954, %v4089
        %v4091 = vpop.f32.mrf.mxu0
        %4092 = vmatprep.mubr.bf16.mxu0 0
        %4093 = vmatmul.mubr.bf16.gmra.mxu0 %v3924
        %v4094 = vpop.f32.mrf.mxu0
        %v4095 = vadd.f32 %v3954, %v4094
        %v4096 = vpop.f32.mrf.mxu0
        %v4097 = vpop.f32.mrf.mxu0
        %v4098 = vadd.f32 %v3954, %v4097
        %v4099 = vpop.f32.mrf.mxu0
        %4100 = vmatprep.mubr.bf16.mxu0 0
        %4101 = vmatmul.mubr.bf16.gmra.mxu0 %v3925
        %v4102 = vpop.f32.mrf.mxu0
        %v4103 = vadd.f32 %v3954, %v4102
        %v4104 = vpop.f32.mrf.mxu0
        %v4105 = vpop.f32.mrf.mxu0
        %v4106 = vadd.f32 %v3954, %v4105
        %v4107 = vpop.f32.mrf.mxu0
        %4108 = vmatprep.mubr.bf16.mxu0 0
        %4109 = vmatmul.mubr.bf16.gmra.mxu0 %v3926
        %v4110 = vpop.f32.mrf.mxu0
        %v4111 = vadd.f32 %v3954, %v4110
        %v4112 = vpop.f32.mrf.mxu0
        %v4113 = vpop.f32.mrf.mxu0
        %v4114 = vadd.f32 %v3954, %v4113
        %v4115 = vpop.f32.mrf.mxu0
        %4116 = vmatprep.mubr.bf16.mxu0 0
        %4117 = vmatmul.mubr.bf16.gmra.mxu0 %v3927
        %v4118 = vpop.f32.mrf.mxu0
        %v4119 = vadd.f32 %v3954, %v4118
        %v4120 = vpop.f32.mrf.mxu0
        %v4121 = vpop.f32.mrf.mxu0
        %v4122 = vadd.f32 %v3954, %v4121
        %v4123 = vpop.f32.mrf.mxu0
        %4124 = vmatprep.mubr.bf16.mxu0 0
        %4125 = vmatmul.mubr.bf16.gmra.mxu0 %v3928
        %v4126 = vpop.f32.mrf.mxu0
        %v4127 = vadd.f32 %v3954, %v4126
        %v4128 = vpop.f32.mrf.mxu0
        %v4129 = vpop.f32.mrf.mxu0
        %v4130 = vadd.f32 %v3954, %v4129
        %v4131 = vpop.f32.mrf.mxu0
        %4132 = vmatprep.mubr.bf16.mxu0 0
        %4133 = vmatmul.mubr.bf16.gmra.mxu0 %v3929
        %v4134 = vpop.f32.mrf.mxu0
        %v4135 = vadd.f32 %v3954, %v4134
        %v4136 = vpop.f32.mrf.mxu0
        %v4137 = vpop.f32.mrf.mxu0
        %v4138 = vadd.f32 %v3954, %v4137
        %v4139 = vpop.f32.mrf.mxu0
        %4140 = vmatprep.mubr.bf16.mxu0 0
        %4141 = vmatmul.mubr.bf16.gmra.mxu0 %v3930
        %v4142 = vpop.f32.mrf.mxu0
        %v4143 = vadd.f32 %v3954, %v4142
        %v4144 = vpop.f32.mrf.mxu0
        %v4145 = vpop.f32.mrf.mxu0
        %v4146 = vadd.f32 %v3954, %v4145
        %v4147 = vpop.f32.mrf.mxu0
        %4148 = vmatprep.mubr.bf16.mxu0 0
        %4149 = vmatmul.mubr.bf16.gmra.mxu0 %v3931
        %v4150 = vpop.f32.mrf.mxu0
        %v4151 = vadd.f32 %v3954, %v4150
        %v4152 = vpop.f32.mrf.mxu0
        %v4153 = vpop.f32.mrf.mxu0
        %v4154 = vadd.f32 %v3954, %v4153
        %v4155 = vpop.f32.mrf.mxu0
        %4156 = vmatprep.mubr.bf16.mxu0 0
        %4157 = vmatmul.mubr.bf16.gmra.mxu0 %v3932
        %v4158 = vpop.f32.mrf.mxu0
        %v4159 = vadd.f32 %v3954, %v4158
        %v4160 = vpop.f32.mrf.mxu0
        %v4161 = vpop.f32.mrf.mxu0
        %v4162 = vadd.f32 %v3954, %v4161
        %v4163 = vpop.f32.mrf.mxu0
        %4164 = vdwg.mxu0
        %v4165 = vmax.f32 %v4039, 0.0
        %v4166 = vmax.f32 %v4042, 0.0
        %v4167 = vmax.f32 %v4047, 0.0
        %v4168 = vmax.f32 %v4050, 0.0
        %v4169 = vmax.f32 %v4055, 0.0
        %v4170 = vmax.f32 %v4058, 0.0
        %v4171 = vmax.f32 %v4063, 0.0
        %v4172 = vmax.f32 %v4066, 0.0
        %v4173 = vmax.f32 %v4071, 0.0
        %v4174 = vmax.f32 %v4074, 0.0
        %v4175 = vmax.f32 %v4079, 0.0
        %v4176 = vmax.f32 %v4082, 0.0
        %v4177 = vmax.f32 %v4087, 0.0
        %v4178 = vmax.f32 %v4090, 0.0
        %v4179 = vmax.f32 %v4095, 0.0
        %v4180 = vmax.f32 %v4098, 0.0
        %v4181 = vmax.f32 %v4103, 0.0
        %v4182 = vmax.f32 %v4106, 0.0
        %v4183 = vmax.f32 %v4111, 0.0
        %v4184 = vmax.f32 %v4114, 0.0
        %v4185 = vmax.f32 %v4119, 0.0
        %v4186 = vmax.f32 %v4122, 0.0
        %v4187 = vmax.f32 %v4127, 0.0
        %v4188 = vmax.f32 %v4130, 0.0
        %v4189 = vmax.f32 %v4135, 0.0
        %v4190 = vmax.f32 %v4138, 0.0
        %v4191 = vmax.f32 %v4143, 0.0
        %v4192 = vmax.f32 %v4146, 0.0
        %v4193 = vmax.f32 %v4151, 0.0
        %v4194 = vmax.f32 %v4154, 0.0
        %v4195 = vmax.f32 %v4159, 0.0
        %v4196 = vmax.f32 %v4162, 0.0
        %v4197 = vpack.c.bf16 %v4166, %v4165
        %v4198 = vpack.c.bf16 %v4168, %v4167
        %v4199 = vpack.c.bf16 %v4170, %v4169
        %v4200 = vpack.c.bf16 %v4172, %v4171
        %v4201 = vpack.c.bf16 %v4174, %v4173
        %v4202 = vpack.c.bf16 %v4176, %v4175
        %v4203 = vpack.c.bf16 %v4178, %v4177
        %v4204 = vpack.c.bf16 %v4180, %v4179
        %v4205 = vpack.c.bf16 %v4182, %v4181
        %v4206 = vpack.c.bf16 %v4184, %v4183
        %v4207 = vpack.c.bf16 %v4186, %v4185
        %v4208 = vpack.c.bf16 %v4188, %v4187
        %v4209 = vpack.c.bf16 %v4190, %v4189
        %v4210 = vpack.c.bf16 %v4192, %v4191
        %v4211 = vpack.c.bf16 %v4194, %v4193
        %v4212 = vpack.c.bf16 %v4196, %v4195
        %v4213 = vld [vmem:[%s11] sm:$0xf]
        %4214 = vmatprep.subr.bf16.mxu0 0
        %4215 = vmatpush1.bf16.xpose.msra.mxu0 %v4204
        %4216 = vmatprep.subr.bf16.mxu0 0
        %4217 = vmatpush1.bf16.xpose.msra.mxu0 %v4203
        %4218 = vmatprep.subr.bf16.mxu0 0
        %4219 = vmatpush1.bf16.xpose.msra.mxu0 %v4202
        %4220 = vmatprep.subr.bf16.mxu0 0
        %4221 = vmatpush1.bf16.xpose.msra.mxu0 %v4201
        %4222 = vmatprep.subr.bf16.mxu0 0
        %4223 = vmatpush1.bf16.xpose.msra.mxu0 %v4200
        %4224 = vmatprep.subr.bf16.mxu0 0
        %4225 = vmatpush1.bf16.xpose.msra.mxu0 %v4199
        %4226 = vmatprep.subr.bf16.mxu0 0
        %4227 = vmatpush1.bf16.xpose.msra.mxu0 %v4198
        %4228 = vmatprep.subr.bf16.mxu0 0
        %4229 = vmatpush1.bf16.xpose.msra.mxu0 %v4197
        %4230 = vmatprep.subr.bf16.mxu0 0
        %4231 = vmatpush2.bf16.xpose.msra.mxu0 %v4212
        %4232 = vmatprep.subr.bf16.mxu0 0
        %4233 = vmatpush2.bf16.xpose.msra.mxu0 %v4211
        %4234 = vmatprep.subr.bf16.mxu0 0
        %4235 = vmatpush2.bf16.xpose.msra.mxu0 %v4210
        %4236 = vmatprep.subr.bf16.mxu0 0
        %4237 = vmatpush2.bf16.xpose.msra.mxu0 %v4209
        %4238 = vmatprep.subr.bf16.mxu0 0
        %4239 = vmatpush2.bf16.xpose.msra.mxu0 %v4208
        %4240 = vmatprep.subr.bf16.mxu0 0
        %4241 = vmatpush2.bf16.xpose.msra.mxu0 %v4207
        %4242 = vmatprep.subr.bf16.mxu0 0
        %4243 = vmatpush2.bf16.xpose.msra.mxu0 %v4206
        %4244 = vmatprep.subr.bf16.mxu0 0
        %4245 = vmatpush2.bf16.xpose.msra.mxu0 %v4205
        %4246 = vmatprep.mubr.bf16.mxu0 0
        %4247 = vmatmul.mubr.bf16.gmra.mxu0 %v4213
        %v4248 = vpop.f32.mrf.mxu0
        %v4249 = vadd.f32 0.0, %v4248
        %v4250 = vpop.f32.mrf.mxu0
        %v4251 = vadd.f32 0.0, %v4250
        %v4252 = vpop.f32.mrf.mxu0
        %v4253 = vpop.f32.mrf.mxu0
        %4254 = vdwg.mxu0
        %v4255 = vld [vmem:[#allocation2] sm:$0x1]
        %4257 = vset.pattern.permute.xlu0 0
        %4258 = vperm.xlu0 %4257, %v4255
        %v4259 = vpop.permute.xlu0 %4258
        %v4261 = vlaneseq
        %v4262 = vshrl.u32 %v4261, 7
        %v4263 = vsub.s32 0, %v4262
        %v4264 = vrot.slane %v4259, %v4263
        %v4265 = vadd.f32 %v4249, %v4264
        %v4266 = vadd.f32 %v4251, %v4264
        %v4267 = vsub.f32 0.0, %v4265
        %v4268 = vsub.f32 0.0, %v4266
        %v4269 = vmul.f32 %v4267, 1.442695
        %v4270 = vpow.pop %v4269
        %v4271 = vmul.f32 %v4268, 1.442695
        %v4272 = vpow.pop %v4271
        %v4273 = vadd.f32 %v4270, 1.0
        %v4274 = vadd.f32 %v4272, 1.0
        %v4275 = vrcp.pop %v4273
        %v4276 = vmul.f32 1.0, %v4275
        %v4277 = vrcp.pop %v4274
        %v4278 = vmul.f32 1.0, %v4277
        %v4281 = vcombine.low %v4276, %v4278
        %v4283 = vunpack.c.l.s4 1966171168
        %v4284 = vunpack.c.0.s8 %v4283
        %v4285 = vlaneseq
        %v4286 = vshrl.u32 %v4285, 7
        %v4287 = vsub.s32 %v4284, %v4286
        %v4288 = vrot.slane %v4281, %v4287
        %v4290 = vunpack.c.l.s4 1966171168
        %v4291 = vunpack.c.0.s8 %v4290
        %v4292 = vlaneseq
        %v4293 = vshrl.u32 %v4292, 7
        %v4294 = vsub.s32 %v4291, %v4293
        %v4295 = vrot.slane %v4288, %v4294
        %v4297 = vlaneseq
        %vm4298 = vcmp.ge.s32.totalorder %v4297, 0
        %vm4299 = vcmp.lt.s32.totalorder %v4297, 256
        %vm4300 = vmand %vm4298, %vm4299
        %4301 = vst.msk [vmem:[%s457] sm:$0x3] %vm4300, %v4295
        %s4302 = smul.u32 2, %s27
        %p4303 = scmp.lt.s32.totalorder %s4302, 3
        %s4304 = scalar_select %p4303, %s4302, 3
        %s4305 = scalar_lea.vmem %s13, %s4304
        // Predicated region
        $region77: #{mlp_forward.1} parent=71 // pred_check
          %p4306 = pneg %p323
        $region78: #{mlp_forward.1} parent=71 // pred_check_branch
          %4308 = sbr.rel (%p4306) target = $region80
        $region79: #{mlp_forward.1} parent=71 // pred_region
          %s4309 = smul.u32 2, %s27
        $region80: #{mlp_forward.1} parent=71 // pred_fallthru
          _
      $region72: #{mlp_forward.1} parent=5 // pred_fallthru
        _
      %p4310 = scmp.le.s32.totalorder 2, %s22
      // Predicated region
      $region81: #{mlp_forward.1} parent=5 // pred_check
        %p4311 = pneg %p4310
      $region82: #{mlp_forward.1} parent=5 // pred_check_branch
        %4313 = sbr.rel (%p4311) target = $region84
      $region83: #{mlp_forward.1} parent=5 // pred_region
        %s4314 = ssub.s32 %s22, 2
        // Predicated region
        $region85: #{mlp_forward.1} parent=83 // pred_check
          %p4315 = pneg %p329
        $region86: #{mlp_forward.1} parent=83 // pred_check_branch
          %4317 = sbr.rel (%p4315) target = $region88
        $region87: #{mlp_forward.1} parent=83 // pred_region
          %s4318 = smul.u32 2, %s28
          %p4319 = scmp.lt.s32.totalorder %s4318, 3
          %s4320 = scalar_select %p4319, %s4318, 3
          %s4321 = scalar_lea.vmem %s13, %s4320
        $region88: #{mlp_forward.1} parent=83 // pred_fallthru
          _
      $region84: #{mlp_forward.1} parent=5 // pred_fallthru
        _
    $region6: #{mlp_forward.1} parent=1 // loop_footer
      %s26 = sadd.s32 1, %s22
    $region7: #{mlp_forward.1} parent=1 // loop_footer_branch
      %21 = sbr.rel target = $region3
    $region8: #{mlp_forward.1} parent=1 // loop_exit
      _
    %4322 = vsyncpa [#allocation4], 1
    %s4323 = scalar_lea.sflag [#allocation4], 1
    %4324 = vsyncpa %s4323, 1

</llo_original>
